<compile_context>
chip_gen: v6e
topology: v6e:2x2x1
jax: 0.10.0
libtpu: 0.0.40
codegen_flags: <defaults>
</compile_context>

<pallas_src>
import jax
import jax.numpy as jnp
from jax import lax
from jax.experimental import pallas as pl
from jax.experimental.pallas import tpu as pltpu


_TAPS3 = tuple((di, dj) for di in range(3) for dj in range(3))


def _cnn_dqn_kernel(x_ref, w1_ref, b1_ref, w2_ref, b2_ref, w3_ref, b3_ref,
                    out_ref):
    bb = x_ref.shape[-1]                 # batch block (lanes)
    x = x_ref[...]                       # (5, 5, bb) f32

    # ---- conv1 zero padding (padding=1), done in-kernel -> (7, 7, bb)
    zr = jnp.zeros((1, 5, bb), jnp.float32)
    zc = jnp.zeros((7, 1, bb), jnp.float32)
    xp = jnp.concatenate([zr, x, zr], axis=0)        # (7, 5, bb)
    xp = jnp.concatenate([zc, xp, zc], axis=1)       # (7, 7, bb)

    # ---- conv1: Conv2d(1, 3, 3, stride=1, padding=1) + ReLU -> 3 x (5, 5, bb)
    # Tap-major: each (5,5,bb) window is sliced once, consumed by all 3 output
    # channels, then dead (keeps the live slab set small -> fewer spills).
    acc1 = [None, None, None]
    for t, (di, dj) in enumerate(_TAPS3):
        win = xp[di:di + 5, dj:dj + 5, :]
        for oc in range(3):
            term = win * w1_ref[oc * 9 + t]
            if t == 0:
                acc1[oc] = term + b1_ref[oc]          # bias folded into tap 0
            else:
                acc1[oc] = acc1[oc] + term
    h1 = [jnp.maximum(a, 0.0) for a in acc1]          # 3 x (5, 5, bb)

    # ---- conv2: Conv2d(3, 5, 3) (valid) + ReLU -> 5 x (3, 3, bb)
    # Tap-major over (ic, tap); accumulate into the 5 output-channel slabs.
    acc2 = [None] * 5
    for ic in range(3):
        for t, (di, dj) in enumerate(_TAPS3):
            win = h1[ic][di:di + 3, dj:dj + 3, :]
            first = (ic == 0 and t == 0)
            for oc in range(5):
                term = win * w2_ref[oc * 27 + ic * 9 + t]
                if first:
                    acc2[oc] = term + b2_ref[oc]      # bias folded into tap 0
                else:
                    acc2[oc] = acc2[oc] + term

    # ---- ReLU + nn.Flatten() (NCHW order: f = oc*9 + di*3 + dj) fused with
    # fc: Linear(45, 5) as 45x5 scalar-broadcast VPU MACs -> 5 x (1, bb).
    logits = [None] * 5
    for oc in range(5):
        h2 = jnp.maximum(acc2[oc], 0.0)               # (3, 3, bb)
        for di in range(3):
            for dj in range(3):
                feat = h2[di, dj:dj + 1, :]           # (1, bb) lane-dense
                f = oc * 9 + di * 3 + dj
                for a in range(5):
                    term = feat * w3_ref[f * 5 + a]
                    if f == 0:
                        logits[a] = term + b3_ref[a]  # bias folded into f = 0
                    else:
                        logits[a] = logits[a] + term

    # ---- softmax over the 5 actions: pure elementwise ops across 5 rows.
    m = logits[0]
    for a in range(1, 5):
        m = jnp.maximum(m, logits[a])
    e = [jnp.exp(l - m) for l in logits]              # exp -> EUP slot
    s = e[0] + e[1] + e[2] + e[3] + e[4]
    # exact reciprocal keeps 1e-5 agreement with the reference
    # (approx=True would move it fully to the EUP slot if tolerance allows).
    inv = pl.reciprocal(s, approx=False)
    out_ref[...] = jnp.concatenate([ei * inv for ei in e], axis=0)  # (5, bb)


def _round_up(n, m):
    return -(-n // m) * m


def cnn_dqn_forward(x, params, *, block_b=None):
    """x: (B, 1, 5, 5) float32 NCHW — same convention as the PyTorch module."""
    w1, b1, w2, b2, w3, b3 = params
    B = x.shape[0]
    if block_b is None:
        # One lane-aligned block when the batch is small/medium (amortises the
        # ~0.35us per-grid-step overhead); cap at 1024 lanes per step so all
        # intermediates stay comfortably inside VMEM on every chip generation.
        block_b = min(_round_up(max(B, 1), 128), 1024)
    n_blocks = -(-B // block_b)
    bp = n_blocks * block_b

    # Batch onto the lane axis: (B,1,5,5) -> (5,5,B); zero-pad batch to bp.
    xs = jnp.transpose(x.astype(jnp.float32)[:, 0], (1, 2, 0))
    xs = jnp.pad(xs, ((0, 0), (0, 0), (0, bp - B)))

    smem = pl.BlockSpec(memory_space=pltpu.MemorySpace.SMEM)
    probs = pl.pallas_call(
        _cnn_dqn_kernel,
        out_shape=jax.ShapeDtypeStruct((5, bp), jnp.float32),
        grid=(n_blocks,),
        in_specs=[pl.BlockSpec((5, 5, block_b), lambda i: (0, 0, i)),
                  smem, smem, smem, smem, smem, smem],
        out_specs=pl.BlockSpec((5, block_b), lambda i: (0, i)),
        compiler_params=pltpu.CompilerParams(
            dimension_semantics=("parallel",)),
    )(xs,
      w1.reshape(-1).astype(jnp.float32), b1.astype(jnp.float32),
      w2.reshape(-1).astype(jnp.float32), b2.astype(jnp.float32),
      w3.reshape(-1).astype(jnp.float32), b3.astype(jnp.float32))

    # Lane-dense (5, bp) in-kernel store; present (B, 5) to callers.
    return probs[:, :B].T


def reference_forward(x, params):
    """Pure-JAX reference mirroring the PyTorch forward exactly."""
    w1, b1, w2, b2, w3, b3 = params
    y = lax.conv_general_dilated(x, w1, (1, 1), ((1, 1), (1, 1)),
                                 dimension_numbers=('NCHW', 'OIHW', 'NCHW'))
    y = jax.nn.relu(y + b1[None, :, None, None])
    y = lax.conv_general_dilated(y, w2, (1, 1), ((0, 0), (0, 0)),
                                 dimension_numbers=('NCHW', 'OIHW', 'NCHW'))
    y = jax.nn.relu(y + b2[None, :, None, None])
    y = y.reshape(y.shape[0], -1)          # nn.Flatten()
    logits = y @ w3 + b3                   # Linear(45, 5) (w3 is W.T)
    return jax.nn.softmax(logits, axis=1)  # F.softmax(dim=1)


def init_params(key):
    """Deterministic synthetic parameters matching the module's shapes."""
    k1, k2, k3, k4, k5, k6 = jax.random.split(key, 6)
    w1 = jax.random.normal(k1, (3, 1, 3, 3), jnp.float32) * 0.30   # conv1
    b1 = jax.random.normal(k2, (3,), jnp.float32) * 0.10
    w2 = jax.random.normal(k3, (5, 3, 3, 3), jnp.float32) * 0.20   # conv2
    b2 = jax.random.normal(k4, (5,), jnp.float32) * 0.10
    # Stored as (in=45, out=5) == PyTorch Linear weight transposed.
    w3 = jax.random.normal(k5, (45, 5), jnp.float32) * 0.15        # "conv3"
    b3 = jax.random.normal(k6, (5,), jnp.float32) * 0.10
    return (w1, b1, w2, b2, w3, b3)


if __name__ == "__main__":
    key = jax.random.PRNGKey(0)
    pkey, xkey, xkey2 = jax.random.split(key, 3)
    params = init_params(pkey)

    # length = 2*2+1 = 5 => spatial 5x5, single input channel.
    # TODO(synk): the PyTorch forward calls print(x.shape); debug print omitted.

    # Small batch (pads to one 128-lane block, grid=(1,)).
    x = jax.random.normal(xkey, (2, 1, 5, 5), jnp.float32)
    out = jax.block_until_ready(cnn_dqn_forward(x, params))
    ref = reference_forward(x, params)
    assert out.shape == (2, 5)
    assert jnp.allclose(jnp.sum(out, axis=1), 1.0, atol=1e-5)
    assert jnp.allclose(out, ref, atol=1e-5, rtol=1e-5)

    # Larger batch: pads 300 -> 384 lanes, single grid step (block_b=384).
    x2 = jax.random.normal(xkey2, (300, 1, 5, 5), jnp.float32)
    out2 = jax.block_until_ready(cnn_dqn_forward(x2, params))
    ref2 = reference_forward(x2, params)
    assert out2.shape == (300, 5)
    assert jnp.allclose(out2, ref2, atol=1e-5, rtol=1e-5)

    # Multi-block path (grid=(3,), block_b=128) to exercise the parallel grid.
    out3 = jax.block_until_ready(cnn_dqn_forward(x2, params, block_b=128))
    assert jnp.allclose(out3, ref2, atol=1e-5, rtol=1e-5)

    print("KERNEL_OK")
</pallas_src>

<mosaic_0001>
module attributes {stable_mosaic.version = 11 : i64} {
  func.func @_cnn_dqn_kernel(%arg0: i32, %arg1: memref<5x5x128xf32, #tpu.memory_space<vmem>>, %arg2: memref<27xf32, #tpu.memory_space<smem>>, %arg3: memref<3xf32, #tpu.memory_space<smem>>, %arg4: memref<135xf32, #tpu.memory_space<smem>>, %arg5: memref<5xf32, #tpu.memory_space<smem>>, %arg6: memref<225xf32, #tpu.memory_space<smem>>, %arg7: memref<5xf32, #tpu.memory_space<smem>>, %arg8: memref<5x128xf32, #tpu.memory_space<vmem>>) attributes {dimension_semantics = [#tpu.dimension_semantics<parallel>], iteration_bounds = array<i64: 1>, scalar_prefetch = 0 : i64, scratch_operands = 0 : i64, tpu.core_type = #tpu.core_type<tc>, window_params = [{transform_indices = @transform_0, window_bounds = array<i64: 5, 5, 128>}, {transform_indices = @transform_1, window_bounds = array<i64: 27>}, {transform_indices = @transform_2, window_bounds = array<i64: 3>}, {transform_indices = @transform_3, window_bounds = array<i64: 135>}, {transform_indices = @transform_4, window_bounds = array<i64: 5>}, {transform_indices = @transform_5, window_bounds = array<i64: 225>}, {transform_indices = @transform_6, window_bounds = array<i64: 5>}, {transform_indices = @transform_7, window_bounds = array<i64: 5, 128>}]} {
    %c0 = arith.constant 0 : index
    %c0_0 = arith.constant 0 : index
    %c0_1 = arith.constant 0 : index
    %0 = vector.load %arg1[%c0, %c0_0, %c0_1] : memref<5x5x128xf32, #tpu.memory_space<vmem>>, vector<5x5x128xf32>
    %cst = arith.constant 0.000000e+00 : f32
    %1 = vector.broadcast %cst : f32 to vector<1x5x128xf32>
    %cst_2 = arith.constant 0.000000e+00 : f32
    %2 = vector.broadcast %cst_2 : f32 to vector<7x1x128xf32>
    %3 = tpu.concatenate %1, %0, %1 in 0 : vector<1x5x128xf32>, vector<5x5x128xf32>, vector<1x5x128xf32> -> vector<7x5x128xf32>
    %4 = tpu.concatenate %2, %3, %2 in 1 : vector<7x1x128xf32>, vector<7x5x128xf32>, vector<7x1x128xf32> -> vector<7x7x128xf32>
    %5 = vector.extract_strided_slice %4 {offsets = [0, 0, 0], sizes = [5, 5, 128], strides = [1, 1, 1]} : vector<7x7x128xf32> to vector<5x5x128xf32>
    %c0_3 = arith.constant 0 : index
    %6 = memref.load %arg2[%c0_3] : memref<27xf32, #tpu.memory_space<smem>>
    %7 = vector.broadcast %6 : f32 to vector<5x5x128xf32>
    %8 = arith.mulf %5, %7 : vector<5x5x128xf32>
    %c0_4 = arith.constant 0 : index
    %9 = memref.load %arg3[%c0_4] : memref<3xf32, #tpu.memory_space<smem>>
    %10 = vector.broadcast %9 : f32 to vector<5x5x128xf32>
    %11 = arith.addf %8, %10 : vector<5x5x128xf32>
    %c9 = arith.constant 9 : index
    %12 = memref.load %arg2[%c9] : memref<27xf32, #tpu.memory_space<smem>>
    %13 = vector.broadcast %12 : f32 to vector<5x5x128xf32>
    %14 = arith.mulf %5, %13 : vector<5x5x128xf32>
    %c1 = arith.constant 1 : index
    %15 = memref.load %arg3[%c1] : memref<3xf32, #tpu.memory_space<smem>>
    %16 = vector.broadcast %15 : f32 to vector<5x5x128xf32>
    %17 = arith.addf %14, %16 : vector<5x5x128xf32>
    %c18 = arith.constant 18 : index
    %18 = memref.load %arg2[%c18] : memref<27xf32, #tpu.memory_space<smem>>
    %19 = vector.broadcast %18 : f32 to vector<5x5x128xf32>
    %20 = arith.mulf %5, %19 : vector<5x5x128xf32>
    %c2 = arith.constant 2 : index
    %21 = memref.load %arg3[%c2] : memref<3xf32, #tpu.memory_space<smem>>
    %22 = vector.broadcast %21 : f32 to vector<5x5x128xf32>
    %23 = arith.addf %20, %22 : vector<5x5x128xf32>
    %24 = vector.extract_strided_slice %4 {offsets = [0, 1, 0], sizes = [5, 5, 128], strides = [1, 1, 1]} : vector<7x7x128xf32> to vector<5x5x128xf32>
    %c1_5 = arith.constant 1 : index
    %25 = memref.load %arg2[%c1_5] : memref<27xf32, #tpu.memory_space<smem>>
    %26 = vector.broadcast %25 : f32 to vector<5x5x128xf32>
    %27 = arith.mulf %24, %26 : vector<5x5x128xf32>
    %28 = arith.addf %11, %27 : vector<5x5x128xf32>
    %c10 = arith.constant 10 : index
    %29 = memref.load %arg2[%c10] : memref<27xf32, #tpu.memory_space<smem>>
    %30 = vector.broadcast %29 : f32 to vector<5x5x128xf32>
    %31 = arith.mulf %24, %30 : vector<5x5x128xf32>
    %32 = arith.addf %17, %31 : vector<5x5x128xf32>
    %c19 = arith.constant 19 : index
    %33 = memref.load %arg2[%c19] : memref<27xf32, #tpu.memory_space<smem>>
    %34 = vector.broadcast %33 : f32 to vector<5x5x128xf32>
    %35 = arith.mulf %24, %34 : vector<5x5x128xf32>
    %36 = arith.addf %23, %35 : vector<5x5x128xf32>
    %37 = vector.extract_strided_slice %4 {offsets = [0, 2, 0], sizes = [5, 5, 128], strides = [1, 1, 1]} : vector<7x7x128xf32> to vector<5x5x128xf32>
    %c2_6 = arith.constant 2 : index
    %38 = memref.load %arg2[%c2_6] : memref<27xf32, #tpu.memory_space<smem>>
    %39 = vector.broadcast %38 : f32 to vector<5x5x128xf32>
    %40 = arith.mulf %37, %39 : vector<5x5x128xf32>
    %41 = arith.addf %28, %40 : vector<5x5x128xf32>
    %c11 = arith.constant 11 : index
    %42 = memref.load %arg2[%c11] : memref<27xf32, #tpu.memory_space<smem>>
    %43 = vector.broadcast %42 : f32 to vector<5x5x128xf32>
    %44 = arith.mulf %37, %43 : vector<5x5x128xf32>
    %45 = arith.addf %32, %44 : vector<5x5x128xf32>
    %c20 = arith.constant 20 : index
    %46 = memref.load %arg2[%c20] : memref<27xf32, #tpu.memory_space<smem>>
    %47 = vector.broadcast %46 : f32 to vector<5x5x128xf32>
    %48 = arith.mulf %37, %47 : vector<5x5x128xf32>
    %49 = arith.addf %36, %48 : vector<5x5x128xf32>
    %50 = vector.extract_strided_slice %4 {offsets = [1, 0, 0], sizes = [5, 5, 128], strides = [1, 1, 1]} : vector<7x7x128xf32> to vector<5x5x128xf32>
    %c3 = arith.constant 3 : index
    %51 = memref.load %arg2[%c3] : memref<27xf32, #tpu.memory_space<smem>>
    %52 = vector.broadcast %51 : f32 to vector<5x5x128xf32>
    %53 = arith.mulf %50, %52 : vector<5x5x128xf32>
    %54 = arith.addf %41, %53 : vector<5x5x128xf32>
    %c12 = arith.constant 12 : index
    %55 = memref.load %arg2[%c12] : memref<27xf32, #tpu.memory_space<smem>>
    %56 = vector.broadcast %55 : f32 to vector<5x5x128xf32>
    %57 = arith.mulf %50, %56 : vector<5x5x128xf32>
    %58 = arith.addf %45, %57 : vector<5x5x128xf32>
    %c21 = arith.constant 21 : index
    %59 = memref.load %arg2[%c21] : memref<27xf32, #tpu.memory_space<smem>>
    %60 = vector.broadcast %59 : f32 to vector<5x5x128xf32>
    %61 = arith.mulf %50, %60 : vector<5x5x128xf32>
    %62 = arith.addf %49, %61 : vector<5x5x128xf32>
    %63 = vector.extract_strided_slice %4 {offsets = [1, 1, 0], sizes = [5, 5, 128], strides = [1, 1, 1]} : vector<7x7x128xf32> to vector<5x5x128xf32>
    %c4 = arith.constant 4 : index
    %64 = memref.load %arg2[%c4] : memref<27xf32, #tpu.memory_space<smem>>
    %65 = vector.broadcast %64 : f32 to vector<5x5x128xf32>
    %66 = arith.mulf %63, %65 : vector<5x5x128xf32>
    %67 = arith.addf %54, %66 : vector<5x5x128xf32>
    %c13 = arith.constant 13 : index
    %68 = memref.load %arg2[%c13] : memref<27xf32, #tpu.memory_space<smem>>
    %69 = vector.broadcast %68 : f32 to vector<5x5x128xf32>
    %70 = arith.mulf %63, %69 : vector<5x5x128xf32>
    %71 = arith.addf %58, %70 : vector<5x5x128xf32>
    %c22 = arith.constant 22 : index
    %72 = memref.load %arg2[%c22] : memref<27xf32, #tpu.memory_space<smem>>
    %73 = vector.broadcast %72 : f32 to vector<5x5x128xf32>
    %74 = arith.mulf %63, %73 : vector<5x5x128xf32>
    %75 = arith.addf %62, %74 : vector<5x5x128xf32>
    %76 = vector.extract_strided_slice %4 {offsets = [1, 2, 0], sizes = [5, 5, 128], strides = [1, 1, 1]} : vector<7x7x128xf32> to vector<5x5x128xf32>
    %c5 = arith.constant 5 : index
    %77 = memref.load %arg2[%c5] : memref<27xf32, #tpu.memory_space<smem>>
    %78 = vector.broadcast %77 : f32 to vector<5x5x128xf32>
    %79 = arith.mulf %76, %78 : vector<5x5x128xf32>
    %80 = arith.addf %67, %79 : vector<5x5x128xf32>
    %c14 = arith.constant 14 : index
    %81 = memref.load %arg2[%c14] : memref<27xf32, #tpu.memory_space<smem>>
    %82 = vector.broadcast %81 : f32 to vector<5x5x128xf32>
    %83 = arith.mulf %76, %82 : vector<5x5x128xf32>
    %84 = arith.addf %71, %83 : vector<5x5x128xf32>
    %c23 = arith.constant 23 : index
    %85 = memref.load %arg2[%c23] : memref<27xf32, #tpu.memory_space<smem>>
    %86 = vector.broadcast %85 : f32 to vector<5x5x128xf32>
    %87 = arith.mulf %76, %86 : vector<5x5x128xf32>
    %88 = arith.addf %75, %87 : vector<5x5x128xf32>
    %89 = vector.extract_strided_slice %4 {offsets = [2, 0, 0], sizes = [5, 5, 128], strides = [1, 1, 1]} : vector<7x7x128xf32> to vector<5x5x128xf32>
    %c6 = arith.constant 6 : index
    %90 = memref.load %arg2[%c6] : memref<27xf32, #tpu.memory_space<smem>>
    %91 = vector.broadcast %90 : f32 to vector<5x5x128xf32>
    %92 = arith.mulf %89, %91 : vector<5x5x128xf32>
    %93 = arith.addf %80, %92 : vector<5x5x128xf32>
    %c15 = arith.constant 15 : index
    %94 = memref.load %arg2[%c15] : memref<27xf32, #tpu.memory_space<smem>>
    %95 = vector.broadcast %94 : f32 to vector<5x5x128xf32>
    %96 = arith.mulf %89, %95 : vector<5x5x128xf32>
    %97 = arith.addf %84, %96 : vector<5x5x128xf32>
    %c24 = arith.constant 24 : index
    %98 = memref.load %arg2[%c24] : memref<27xf32, #tpu.memory_space<smem>>
    %99 = vector.broadcast %98 : f32 to vector<5x5x128xf32>
    %100 = arith.mulf %89, %99 : vector<5x5x128xf32>
    %101 = arith.addf %88, %100 : vector<5x5x128xf32>
    %102 = vector.extract_strided_slice %4 {offsets = [2, 1, 0], sizes = [5, 5, 128], strides = [1, 1, 1]} : vector<7x7x128xf32> to vector<5x5x128xf32>
    %c7 = arith.constant 7 : index
    %103 = memref.load %arg2[%c7] : memref<27xf32, #tpu.memory_space<smem>>
    %104 = vector.broadcast %103 : f32 to vector<5x5x128xf32>
    %105 = arith.mulf %102, %104 : vector<5x5x128xf32>
    %106 = arith.addf %93, %105 : vector<5x5x128xf32>
    %c16 = arith.constant 16 : index
    %107 = memref.load %arg2[%c16] : memref<27xf32, #tpu.memory_space<smem>>
    %108 = vector.broadcast %107 : f32 to vector<5x5x128xf32>
    %109 = arith.mulf %102, %108 : vector<5x5x128xf32>
    %110 = arith.addf %97, %109 : vector<5x5x128xf32>
    %c25 = arith.constant 25 : index
    %111 = memref.load %arg2[%c25] : memref<27xf32, #tpu.memory_space<smem>>
    %112 = vector.broadcast %111 : f32 to vector<5x5x128xf32>
    %113 = arith.mulf %102, %112 : vector<5x5x128xf32>
    %114 = arith.addf %101, %113 : vector<5x5x128xf32>
    %115 = vector.extract_strided_slice %4 {offsets = [2, 2, 0], sizes = [5, 5, 128], strides = [1, 1, 1]} : vector<7x7x128xf32> to vector<5x5x128xf32>
    %c8 = arith.constant 8 : index
    %116 = memref.load %arg2[%c8] : memref<27xf32, #tpu.memory_space<smem>>
    %117 = vector.broadcast %116 : f32 to vector<5x5x128xf32>
    %118 = arith.mulf %115, %117 : vector<5x5x128xf32>
    %119 = arith.addf %106, %118 : vector<5x5x128xf32>
    %c17 = arith.constant 17 : index
    %120 = memref.load %arg2[%c17] : memref<27xf32, #tpu.memory_space<smem>>
    %121 = vector.broadcast %120 : f32 to vector<5x5x128xf32>
    %122 = arith.mulf %115, %121 : vector<5x5x128xf32>
    %123 = arith.addf %110, %122 : vector<5x5x128xf32>
    %c26 = arith.constant 26 : index
    %124 = memref.load %arg2[%c26] : memref<27xf32, #tpu.memory_space<smem>>
    %125 = vector.broadcast %124 : f32 to vector<5x5x128xf32>
    %126 = arith.mulf %115, %125 : vector<5x5x128xf32>
    %127 = arith.addf %114, %126 : vector<5x5x128xf32>
    %cst_7 = arith.constant 0.000000e+00 : f32
    %128 = vector.broadcast %cst_7 : f32 to vector<5x5x128xf32>
    %129 = arith.maximumf %119, %128 : vector<5x5x128xf32>
    %cst_8 = arith.constant 0.000000e+00 : f32
    %130 = vector.broadcast %cst_8 : f32 to vector<5x5x128xf32>
    %131 = arith.maximumf %123, %130 : vector<5x5x128xf32>
    %cst_9 = arith.constant 0.000000e+00 : f32
    %132 = vector.broadcast %cst_9 : f32 to vector<5x5x128xf32>
    %133 = arith.maximumf %127, %132 : vector<5x5x128xf32>
    %134 = vector.extract_strided_slice %129 {offsets = [0, 0, 0], sizes = [3, 3, 128], strides = [1, 1, 1]} : vector<5x5x128xf32> to vector<3x3x128xf32>
    %c0_10 = arith.constant 0 : index
    %135 = memref.load %arg4[%c0_10] : memref<135xf32, #tpu.memory_space<smem>>
    %136 = vector.broadcast %135 : f32 to vector<3x3x128xf32>
    %137 = arith.mulf %134, %136 : vector<3x3x128xf32>
    %c0_11 = arith.constant 0 : index
    %138 = memref.load %arg5[%c0_11] : memref<5xf32, #tpu.memory_space<smem>>
    %139 = vector.broadcast %138 : f32 to vector<3x3x128xf32>
    %140 = arith.addf %137, %139 : vector<3x3x128xf32>
    %c27 = arith.constant 27 : index
    %141 = memref.load %arg4[%c27] : memref<135xf32, #tpu.memory_space<smem>>
    %142 = vector.broadcast %141 : f32 to vector<3x3x128xf32>
    %143 = arith.mulf %134, %142 : vector<3x3x128xf32>
    %c1_12 = arith.constant 1 : index
    %144 = memref.load %arg5[%c1_12] : memref<5xf32, #tpu.memory_space<smem>>
    %145 = vector.broadcast %144 : f32 to vector<3x3x128xf32>
    %146 = arith.addf %143, %145 : vector<3x3x128xf32>
    %c54 = arith.constant 54 : index
    %147 = memref.load %arg4[%c54] : memref<135xf32, #tpu.memory_space<smem>>
    %148 = vector.broadcast %147 : f32 to vector<3x3x128xf32>
    %149 = arith.mulf %134, %148 : vector<3x3x128xf32>
    %c2_13 = arith.constant 2 : index
    %150 = memref.load %arg5[%c2_13] : memref<5xf32, #tpu.memory_space<smem>>
    %151 = vector.broadcast %150 : f32 to vector<3x3x128xf32>
    %152 = arith.addf %149, %151 : vector<3x3x128xf32>
    %c81 = arith.constant 81 : index
    %153 = memref.load %arg4[%c81] : memref<135xf32, #tpu.memory_space<smem>>
    %154 = vector.broadcast %153 : f32 to vector<3x3x128xf32>
    %155 = arith.mulf %134, %154 : vector<3x3x128xf32>
    %c3_14 = arith.constant 3 : index
    %156 = memref.load %arg5[%c3_14] : memref<5xf32, #tpu.memory_space<smem>>
    %157 = vector.broadcast %156 : f32 to vector<3x3x128xf32>
    %158 = arith.addf %155, %157 : vector<3x3x128xf32>
    %c108 = arith.constant 108 : index
    %159 = memref.load %arg4[%c108] : memref<135xf32, #tpu.memory_space<smem>>
    %160 = vector.broadcast %159 : f32 to vector<3x3x128xf32>
    %161 = arith.mulf %134, %160 : vector<3x3x128xf32>
    %c4_15 = arith.constant 4 : index
    %162 = memref.load %arg5[%c4_15] : memref<5xf32, #tpu.memory_space<smem>>
    %163 = vector.broadcast %162 : f32 to vector<3x3x128xf32>
    %164 = arith.addf %161, %163 : vector<3x3x128xf32>
    %165 = vector.extract_strided_slice %129 {offsets = [0, 1, 0], sizes = [3, 3, 128], strides = [1, 1, 1]} : vector<5x5x128xf32> to vector<3x3x128xf32>
    %c1_16 = arith.constant 1 : index
    %166 = memref.load %arg4[%c1_16] : memref<135xf32, #tpu.memory_space<smem>>
    %167 = vector.broadcast %166 : f32 to vector<3x3x128xf32>
    %168 = arith.mulf %165, %167 : vector<3x3x128xf32>
    %169 = arith.addf %140, %168 : vector<3x3x128xf32>
    %c28 = arith.constant 28 : index
    %170 = memref.load %arg4[%c28] : memref<135xf32, #tpu.memory_space<smem>>
    %171 = vector.broadcast %170 : f32 to vector<3x3x128xf32>
    %172 = arith.mulf %165, %171 : vector<3x3x128xf32>
    %173 = arith.addf %146, %172 : vector<3x3x128xf32>
    %c55 = arith.constant 55 : index
    %174 = memref.load %arg4[%c55] : memref<135xf32, #tpu.memory_space<smem>>
    %175 = vector.broadcast %174 : f32 to vector<3x3x128xf32>
    %176 = arith.mulf %165, %175 : vector<3x3x128xf32>
    %177 = arith.addf %152, %176 : vector<3x3x128xf32>
    %c82 = arith.constant 82 : index
    %178 = memref.load %arg4[%c82] : memref<135xf32, #tpu.memory_space<smem>>
    %179 = vector.broadcast %178 : f32 to vector<3x3x128xf32>
    %180 = arith.mulf %165, %179 : vector<3x3x128xf32>
    %181 = arith.addf %158, %180 : vector<3x3x128xf32>
    %c109 = arith.constant 109 : index
    %182 = memref.load %arg4[%c109] : memref<135xf32, #tpu.memory_space<smem>>
    %183 = vector.broadcast %182 : f32 to vector<3x3x128xf32>
    %184 = arith.mulf %165, %183 : vector<3x3x128xf32>
    %185 = arith.addf %164, %184 : vector<3x3x128xf32>
    %186 = vector.extract_strided_slice %129 {offsets = [0, 2, 0], sizes = [3, 3, 128], strides = [1, 1, 1]} : vector<5x5x128xf32> to vector<3x3x128xf32>
    %c2_17 = arith.constant 2 : index
    %187 = memref.load %arg4[%c2_17] : memref<135xf32, #tpu.memory_space<smem>>
    %188 = vector.broadcast %187 : f32 to vector<3x3x128xf32>
    %189 = arith.mulf %186, %188 : vector<3x3x128xf32>
    %190 = arith.addf %169, %189 : vector<3x3x128xf32>
    %c29 = arith.constant 29 : index
    %191 = memref.load %arg4[%c29] : memref<135xf32, #tpu.memory_space<smem>>
    %192 = vector.broadcast %191 : f32 to vector<3x3x128xf32>
    %193 = arith.mulf %186, %192 : vector<3x3x128xf32>
    %194 = arith.addf %173, %193 : vector<3x3x128xf32>
    %c56 = arith.constant 56 : index
    %195 = memref.load %arg4[%c56] : memref<135xf32, #tpu.memory_space<smem>>
    %196 = vector.broadcast %195 : f32 to vector<3x3x128xf32>
    %197 = arith.mulf %186, %196 : vector<3x3x128xf32>
    %198 = arith.addf %177, %197 : vector<3x3x128xf32>
    %c83 = arith.constant 83 : index
    %199 = memref.load %arg4[%c83] : memref<135xf32, #tpu.memory_space<smem>>
    %200 = vector.broadcast %199 : f32 to vector<3x3x128xf32>
    %201 = arith.mulf %186, %200 : vector<3x3x128xf32>
    %202 = arith.addf %181, %201 : vector<3x3x128xf32>
    %c110 = arith.constant 110 : index
    %203 = memref.load %arg4[%c110] : memref<135xf32, #tpu.memory_space<smem>>
    %204 = vector.broadcast %203 : f32 to vector<3x3x128xf32>
    %205 = arith.mulf %186, %204 : vector<3x3x128xf32>
    %206 = arith.addf %185, %205 : vector<3x3x128xf32>
    %207 = vector.extract_strided_slice %129 {offsets = [1, 0, 0], sizes = [3, 3, 128], strides = [1, 1, 1]} : vector<5x5x128xf32> to vector<3x3x128xf32>
    %c3_18 = arith.constant 3 : index
    %208 = memref.load %arg4[%c3_18] : memref<135xf32, #tpu.memory_space<smem>>
    %209 = vector.broadcast %208 : f32 to vector<3x3x128xf32>
    %210 = arith.mulf %207, %209 : vector<3x3x128xf32>
    %211 = arith.addf %190, %210 : vector<3x3x128xf32>
    %c30 = arith.constant 30 : index
    %212 = memref.load %arg4[%c30] : memref<135xf32, #tpu.memory_space<smem>>
    %213 = vector.broadcast %212 : f32 to vector<3x3x128xf32>
    %214 = arith.mulf %207, %213 : vector<3x3x128xf32>
    %215 = arith.addf %194, %214 : vector<3x3x128xf32>
    %c57 = arith.constant 57 : index
    %216 = memref.load %arg4[%c57] : memref<135xf32, #tpu.memory_space<smem>>
    %217 = vector.broadcast %216 : f32 to vector<3x3x128xf32>
    %218 = arith.mulf %207, %217 : vector<3x3x128xf32>
    %219 = arith.addf %198, %218 : vector<3x3x128xf32>
    %c84 = arith.constant 84 : index
    %220 = memref.load %arg4[%c84] : memref<135xf32, #tpu.memory_space<smem>>
    %221 = vector.broadcast %220 : f32 to vector<3x3x128xf32>
    %222 = arith.mulf %207, %221 : vector<3x3x128xf32>
    %223 = arith.addf %202, %222 : vector<3x3x128xf32>
    %c111 = arith.constant 111 : index
    %224 = memref.load %arg4[%c111] : memref<135xf32, #tpu.memory_space<smem>>
    %225 = vector.broadcast %224 : f32 to vector<3x3x128xf32>
    %226 = arith.mulf %207, %225 : vector<3x3x128xf32>
    %227 = arith.addf %206, %226 : vector<3x3x128xf32>
    %228 = vector.extract_strided_slice %129 {offsets = [1, 1, 0], sizes = [3, 3, 128], strides = [1, 1, 1]} : vector<5x5x128xf32> to vector<3x3x128xf32>
    %c4_19 = arith.constant 4 : index
    %229 = memref.load %arg4[%c4_19] : memref<135xf32, #tpu.memory_space<smem>>
    %230 = vector.broadcast %229 : f32 to vector<3x3x128xf32>
    %231 = arith.mulf %228, %230 : vector<3x3x128xf32>
    %232 = arith.addf %211, %231 : vector<3x3x128xf32>
    %c31 = arith.constant 31 : index
    %233 = memref.load %arg4[%c31] : memref<135xf32, #tpu.memory_space<smem>>
    %234 = vector.broadcast %233 : f32 to vector<3x3x128xf32>
    %235 = arith.mulf %228, %234 : vector<3x3x128xf32>
    %236 = arith.addf %215, %235 : vector<3x3x128xf32>
    %c58 = arith.constant 58 : index
    %237 = memref.load %arg4[%c58] : memref<135xf32, #tpu.memory_space<smem>>
    %238 = vector.broadcast %237 : f32 to vector<3x3x128xf32>
    %239 = arith.mulf %228, %238 : vector<3x3x128xf32>
    %240 = arith.addf %219, %239 : vector<3x3x128xf32>
    %c85 = arith.constant 85 : index
    %241 = memref.load %arg4[%c85] : memref<135xf32, #tpu.memory_space<smem>>
    %242 = vector.broadcast %241 : f32 to vector<3x3x128xf32>
    %243 = arith.mulf %228, %242 : vector<3x3x128xf32>
    %244 = arith.addf %223, %243 : vector<3x3x128xf32>
    %c112 = arith.constant 112 : index
    %245 = memref.load %arg4[%c112] : memref<135xf32, #tpu.memory_space<smem>>
    %246 = vector.broadcast %245 : f32 to vector<3x3x128xf32>
    %247 = arith.mulf %228, %246 : vector<3x3x128xf32>
    %248 = arith.addf %227, %247 : vector<3x3x128xf32>
    %249 = vector.extract_strided_slice %129 {offsets = [1, 2, 0], sizes = [3, 3, 128], strides = [1, 1, 1]} : vector<5x5x128xf32> to vector<3x3x128xf32>
    %c5_20 = arith.constant 5 : index
    %250 = memref.load %arg4[%c5_20] : memref<135xf32, #tpu.memory_space<smem>>
    %251 = vector.broadcast %250 : f32 to vector<3x3x128xf32>
    %252 = arith.mulf %249, %251 : vector<3x3x128xf32>
    %253 = arith.addf %232, %252 : vector<3x3x128xf32>
    %c32 = arith.constant 32 : index
    %254 = memref.load %arg4[%c32] : memref<135xf32, #tpu.memory_space<smem>>
    %255 = vector.broadcast %254 : f32 to vector<3x3x128xf32>
    %256 = arith.mulf %249, %255 : vector<3x3x128xf32>
    %257 = arith.addf %236, %256 : vector<3x3x128xf32>
    %c59 = arith.constant 59 : index
    %258 = memref.load %arg4[%c59] : memref<135xf32, #tpu.memory_space<smem>>
    %259 = vector.broadcast %258 : f32 to vector<3x3x128xf32>
    %260 = arith.mulf %249, %259 : vector<3x3x128xf32>
    %261 = arith.addf %240, %260 : vector<3x3x128xf32>
    %c86 = arith.constant 86 : index
    %262 = memref.load %arg4[%c86] : memref<135xf32, #tpu.memory_space<smem>>
    %263 = vector.broadcast %262 : f32 to vector<3x3x128xf32>
    %264 = arith.mulf %249, %263 : vector<3x3x128xf32>
    %265 = arith.addf %244, %264 : vector<3x3x128xf32>
    %c113 = arith.constant 113 : index
    %266 = memref.load %arg4[%c113] : memref<135xf32, #tpu.memory_space<smem>>
    %267 = vector.broadcast %266 : f32 to vector<3x3x128xf32>
    %268 = arith.mulf %249, %267 : vector<3x3x128xf32>
    %269 = arith.addf %248, %268 : vector<3x3x128xf32>
    %270 = vector.extract_strided_slice %129 {offsets = [2, 0, 0], sizes = [3, 3, 128], strides = [1, 1, 1]} : vector<5x5x128xf32> to vector<3x3x128xf32>
    %c6_21 = arith.constant 6 : index
    %271 = memref.load %arg4[%c6_21] : memref<135xf32, #tpu.memory_space<smem>>
    %272 = vector.broadcast %271 : f32 to vector<3x3x128xf32>
    %273 = arith.mulf %270, %272 : vector<3x3x128xf32>
    %274 = arith.addf %253, %273 : vector<3x3x128xf32>
    %c33 = arith.constant 33 : index
    %275 = memref.load %arg4[%c33] : memref<135xf32, #tpu.memory_space<smem>>
    %276 = vector.broadcast %275 : f32 to vector<3x3x128xf32>
    %277 = arith.mulf %270, %276 : vector<3x3x128xf32>
    %278 = arith.addf %257, %277 : vector<3x3x128xf32>
    %c60 = arith.constant 60 : index
    %279 = memref.load %arg4[%c60] : memref<135xf32, #tpu.memory_space<smem>>
    %280 = vector.broadcast %279 : f32 to vector<3x3x128xf32>
    %281 = arith.mulf %270, %280 : vector<3x3x128xf32>
    %282 = arith.addf %261, %281 : vector<3x3x128xf32>
    %c87 = arith.constant 87 : index
    %283 = memref.load %arg4[%c87] : memref<135xf32, #tpu.memory_space<smem>>
    %284 = vector.broadcast %283 : f32 to vector<3x3x128xf32>
    %285 = arith.mulf %270, %284 : vector<3x3x128xf32>
    %286 = arith.addf %265, %285 : vector<3x3x128xf32>
    %c114 = arith.constant 114 : index
    %287 = memref.load %arg4[%c114] : memref<135xf32, #tpu.memory_space<smem>>
    %288 = vector.broadcast %287 : f32 to vector<3x3x128xf32>
    %289 = arith.mulf %270, %288 : vector<3x3x128xf32>
    %290 = arith.addf %269, %289 : vector<3x3x128xf32>
    %291 = vector.extract_strided_slice %129 {offsets = [2, 1, 0], sizes = [3, 3, 128], strides = [1, 1, 1]} : vector<5x5x128xf32> to vector<3x3x128xf32>
    %c7_22 = arith.constant 7 : index
    %292 = memref.load %arg4[%c7_22] : memref<135xf32, #tpu.memory_space<smem>>
    %293 = vector.broadcast %292 : f32 to vector<3x3x128xf32>
    %294 = arith.mulf %291, %293 : vector<3x3x128xf32>
    %295 = arith.addf %274, %294 : vector<3x3x128xf32>
    %c34 = arith.constant 34 : index
    %296 = memref.load %arg4[%c34] : memref<135xf32, #tpu.memory_space<smem>>
    %297 = vector.broadcast %296 : f32 to vector<3x3x128xf32>
    %298 = arith.mulf %291, %297 : vector<3x3x128xf32>
    %299 = arith.addf %278, %298 : vector<3x3x128xf32>
    %c61 = arith.constant 61 : index
    %300 = memref.load %arg4[%c61] : memref<135xf32, #tpu.memory_space<smem>>
    %301 = vector.broadcast %300 : f32 to vector<3x3x128xf32>
    %302 = arith.mulf %291, %301 : vector<3x3x128xf32>
    %303 = arith.addf %282, %302 : vector<3x3x128xf32>
    %c88 = arith.constant 88 : index
    %304 = memref.load %arg4[%c88] : memref<135xf32, #tpu.memory_space<smem>>
    %305 = vector.broadcast %304 : f32 to vector<3x3x128xf32>
    %306 = arith.mulf %291, %305 : vector<3x3x128xf32>
    %307 = arith.addf %286, %306 : vector<3x3x128xf32>
    %c115 = arith.constant 115 : index
    %308 = memref.load %arg4[%c115] : memref<135xf32, #tpu.memory_space<smem>>
    %309 = vector.broadcast %308 : f32 to vector<3x3x128xf32>
    %310 = arith.mulf %291, %309 : vector<3x3x128xf32>
    %311 = arith.addf %290, %310 : vector<3x3x128xf32>
    %312 = vector.extract_strided_slice %129 {offsets = [2, 2, 0], sizes = [3, 3, 128], strides = [1, 1, 1]} : vector<5x5x128xf32> to vector<3x3x128xf32>
    %c8_23 = arith.constant 8 : index
    %313 = memref.load %arg4[%c8_23] : memref<135xf32, #tpu.memory_space<smem>>
    %314 = vector.broadcast %313 : f32 to vector<3x3x128xf32>
    %315 = arith.mulf %312, %314 : vector<3x3x128xf32>
    %316 = arith.addf %295, %315 : vector<3x3x128xf32>
    %c35 = arith.constant 35 : index
    %317 = memref.load %arg4[%c35] : memref<135xf32, #tpu.memory_space<smem>>
    %318 = vector.broadcast %317 : f32 to vector<3x3x128xf32>
    %319 = arith.mulf %312, %318 : vector<3x3x128xf32>
    %320 = arith.addf %299, %319 : vector<3x3x128xf32>
    %c62 = arith.constant 62 : index
    %321 = memref.load %arg4[%c62] : memref<135xf32, #tpu.memory_space<smem>>
    %322 = vector.broadcast %321 : f32 to vector<3x3x128xf32>
    %323 = arith.mulf %312, %322 : vector<3x3x128xf32>
    %324 = arith.addf %303, %323 : vector<3x3x128xf32>
    %c89 = arith.constant 89 : index
    %325 = memref.load %arg4[%c89] : memref<135xf32, #tpu.memory_space<smem>>
    %326 = vector.broadcast %325 : f32 to vector<3x3x128xf32>
    %327 = arith.mulf %312, %326 : vector<3x3x128xf32>
    %328 = arith.addf %307, %327 : vector<3x3x128xf32>
    %c116 = arith.constant 116 : index
    %329 = memref.load %arg4[%c116] : memref<135xf32, #tpu.memory_space<smem>>
    %330 = vector.broadcast %329 : f32 to vector<3x3x128xf32>
    %331 = arith.mulf %312, %330 : vector<3x3x128xf32>
    %332 = arith.addf %311, %331 : vector<3x3x128xf32>
    %333 = vector.extract_strided_slice %131 {offsets = [0, 0, 0], sizes = [3, 3, 128], strides = [1, 1, 1]} : vector<5x5x128xf32> to vector<3x3x128xf32>
    %c9_24 = arith.constant 9 : index
    %334 = memref.load %arg4[%c9_24] : memref<135xf32, #tpu.memory_space<smem>>
    %335 = vector.broadcast %334 : f32 to vector<3x3x128xf32>
    %336 = arith.mulf %333, %335 : vector<3x3x128xf32>
    %337 = arith.addf %316, %336 : vector<3x3x128xf32>
    %c36 = arith.constant 36 : index
    %338 = memref.load %arg4[%c36] : memref<135xf32, #tpu.memory_space<smem>>
    %339 = vector.broadcast %338 : f32 to vector<3x3x128xf32>
    %340 = arith.mulf %333, %339 : vector<3x3x128xf32>
    %341 = arith.addf %320, %340 : vector<3x3x128xf32>
    %c63 = arith.constant 63 : index
    %342 = memref.load %arg4[%c63] : memref<135xf32, #tpu.memory_space<smem>>
    %343 = vector.broadcast %342 : f32 to vector<3x3x128xf32>
    %344 = arith.mulf %333, %343 : vector<3x3x128xf32>
    %345 = arith.addf %324, %344 : vector<3x3x128xf32>
    %c90 = arith.constant 90 : index
    %346 = memref.load %arg4[%c90] : memref<135xf32, #tpu.memory_space<smem>>
    %347 = vector.broadcast %346 : f32 to vector<3x3x128xf32>
    %348 = arith.mulf %333, %347 : vector<3x3x128xf32>
    %349 = arith.addf %328, %348 : vector<3x3x128xf32>
    %c117 = arith.constant 117 : index
    %350 = memref.load %arg4[%c117] : memref<135xf32, #tpu.memory_space<smem>>
    %351 = vector.broadcast %350 : f32 to vector<3x3x128xf32>
    %352 = arith.mulf %333, %351 : vector<3x3x128xf32>
    %353 = arith.addf %332, %352 : vector<3x3x128xf32>
    %354 = vector.extract_strided_slice %131 {offsets = [0, 1, 0], sizes = [3, 3, 128], strides = [1, 1, 1]} : vector<5x5x128xf32> to vector<3x3x128xf32>
    %c10_25 = arith.constant 10 : index
    %355 = memref.load %arg4[%c10_25] : memref<135xf32, #tpu.memory_space<smem>>
    %356 = vector.broadcast %355 : f32 to vector<3x3x128xf32>
    %357 = arith.mulf %354, %356 : vector<3x3x128xf32>
    %358 = arith.addf %337, %357 : vector<3x3x128xf32>
    %c37 = arith.constant 37 : index
    %359 = memref.load %arg4[%c37] : memref<135xf32, #tpu.memory_space<smem>>
    %360 = vector.broadcast %359 : f32 to vector<3x3x128xf32>
    %361 = arith.mulf %354, %360 : vector<3x3x128xf32>
    %362 = arith.addf %341, %361 : vector<3x3x128xf32>
    %c64 = arith.constant 64 : index
    %363 = memref.load %arg4[%c64] : memref<135xf32, #tpu.memory_space<smem>>
    %364 = vector.broadcast %363 : f32 to vector<3x3x128xf32>
    %365 = arith.mulf %354, %364 : vector<3x3x128xf32>
    %366 = arith.addf %345, %365 : vector<3x3x128xf32>
    %c91 = arith.constant 91 : index
    %367 = memref.load %arg4[%c91] : memref<135xf32, #tpu.memory_space<smem>>
    %368 = vector.broadcast %367 : f32 to vector<3x3x128xf32>
    %369 = arith.mulf %354, %368 : vector<3x3x128xf32>
    %370 = arith.addf %349, %369 : vector<3x3x128xf32>
    %c118 = arith.constant 118 : index
    %371 = memref.load %arg4[%c118] : memref<135xf32, #tpu.memory_space<smem>>
    %372 = vector.broadcast %371 : f32 to vector<3x3x128xf32>
    %373 = arith.mulf %354, %372 : vector<3x3x128xf32>
    %374 = arith.addf %353, %373 : vector<3x3x128xf32>
    %375 = vector.extract_strided_slice %131 {offsets = [0, 2, 0], sizes = [3, 3, 128], strides = [1, 1, 1]} : vector<5x5x128xf32> to vector<3x3x128xf32>
    %c11_26 = arith.constant 11 : index
    %376 = memref.load %arg4[%c11_26] : memref<135xf32, #tpu.memory_space<smem>>
    %377 = vector.broadcast %376 : f32 to vector<3x3x128xf32>
    %378 = arith.mulf %375, %377 : vector<3x3x128xf32>
    %379 = arith.addf %358, %378 : vector<3x3x128xf32>
    %c38 = arith.constant 38 : index
    %380 = memref.load %arg4[%c38] : memref<135xf32, #tpu.memory_space<smem>>
    %381 = vector.broadcast %380 : f32 to vector<3x3x128xf32>
    %382 = arith.mulf %375, %381 : vector<3x3x128xf32>
    %383 = arith.addf %362, %382 : vector<3x3x128xf32>
    %c65 = arith.constant 65 : index
    %384 = memref.load %arg4[%c65] : memref<135xf32, #tpu.memory_space<smem>>
    %385 = vector.broadcast %384 : f32 to vector<3x3x128xf32>
    %386 = arith.mulf %375, %385 : vector<3x3x128xf32>
    %387 = arith.addf %366, %386 : vector<3x3x128xf32>
    %c92 = arith.constant 92 : index
    %388 = memref.load %arg4[%c92] : memref<135xf32, #tpu.memory_space<smem>>
    %389 = vector.broadcast %388 : f32 to vector<3x3x128xf32>
    %390 = arith.mulf %375, %389 : vector<3x3x128xf32>
    %391 = arith.addf %370, %390 : vector<3x3x128xf32>
    %c119 = arith.constant 119 : index
    %392 = memref.load %arg4[%c119] : memref<135xf32, #tpu.memory_space<smem>>
    %393 = vector.broadcast %392 : f32 to vector<3x3x128xf32>
    %394 = arith.mulf %375, %393 : vector<3x3x128xf32>
    %395 = arith.addf %374, %394 : vector<3x3x128xf32>
    %396 = vector.extract_strided_slice %131 {offsets = [1, 0, 0], sizes = [3, 3, 128], strides = [1, 1, 1]} : vector<5x5x128xf32> to vector<3x3x128xf32>
    %c12_27 = arith.constant 12 : index
    %397 = memref.load %arg4[%c12_27] : memref<135xf32, #tpu.memory_space<smem>>
    %398 = vector.broadcast %397 : f32 to vector<3x3x128xf32>
    %399 = arith.mulf %396, %398 : vector<3x3x128xf32>
    %400 = arith.addf %379, %399 : vector<3x3x128xf32>
    %c39 = arith.constant 39 : index
    %401 = memref.load %arg4[%c39] : memref<135xf32, #tpu.memory_space<smem>>
    %402 = vector.broadcast %401 : f32 to vector<3x3x128xf32>
    %403 = arith.mulf %396, %402 : vector<3x3x128xf32>
    %404 = arith.addf %383, %403 : vector<3x3x128xf32>
    %c66 = arith.constant 66 : index
    %405 = memref.load %arg4[%c66] : memref<135xf32, #tpu.memory_space<smem>>
    %406 = vector.broadcast %405 : f32 to vector<3x3x128xf32>
    %407 = arith.mulf %396, %406 : vector<3x3x128xf32>
    %408 = arith.addf %387, %407 : vector<3x3x128xf32>
    %c93 = arith.constant 93 : index
    %409 = memref.load %arg4[%c93] : memref<135xf32, #tpu.memory_space<smem>>
    %410 = vector.broadcast %409 : f32 to vector<3x3x128xf32>
    %411 = arith.mulf %396, %410 : vector<3x3x128xf32>
    %412 = arith.addf %391, %411 : vector<3x3x128xf32>
    %c120 = arith.constant 120 : index
    %413 = memref.load %arg4[%c120] : memref<135xf32, #tpu.memory_space<smem>>
    %414 = vector.broadcast %413 : f32 to vector<3x3x128xf32>
    %415 = arith.mulf %396, %414 : vector<3x3x128xf32>
    %416 = arith.addf %395, %415 : vector<3x3x128xf32>
    %417 = vector.extract_strided_slice %131 {offsets = [1, 1, 0], sizes = [3, 3, 128], strides = [1, 1, 1]} : vector<5x5x128xf32> to vector<3x3x128xf32>
    %c13_28 = arith.constant 13 : index
    %418 = memref.load %arg4[%c13_28] : memref<135xf32, #tpu.memory_space<smem>>
    %419 = vector.broadcast %418 : f32 to vector<3x3x128xf32>
    %420 = arith.mulf %417, %419 : vector<3x3x128xf32>
    %421 = arith.addf %400, %420 : vector<3x3x128xf32>
    %c40 = arith.constant 40 : index
    %422 = memref.load %arg4[%c40] : memref<135xf32, #tpu.memory_space<smem>>
    %423 = vector.broadcast %422 : f32 to vector<3x3x128xf32>
    %424 = arith.mulf %417, %423 : vector<3x3x128xf32>
    %425 = arith.addf %404, %424 : vector<3x3x128xf32>
    %c67 = arith.constant 67 : index
    %426 = memref.load %arg4[%c67] : memref<135xf32, #tpu.memory_space<smem>>
    %427 = vector.broadcast %426 : f32 to vector<3x3x128xf32>
    %428 = arith.mulf %417, %427 : vector<3x3x128xf32>
    %429 = arith.addf %408, %428 : vector<3x3x128xf32>
    %c94 = arith.constant 94 : index
    %430 = memref.load %arg4[%c94] : memref<135xf32, #tpu.memory_space<smem>>
    %431 = vector.broadcast %430 : f32 to vector<3x3x128xf32>
    %432 = arith.mulf %417, %431 : vector<3x3x128xf32>
    %433 = arith.addf %412, %432 : vector<3x3x128xf32>
    %c121 = arith.constant 121 : index
    %434 = memref.load %arg4[%c121] : memref<135xf32, #tpu.memory_space<smem>>
    %435 = vector.broadcast %434 : f32 to vector<3x3x128xf32>
    %436 = arith.mulf %417, %435 : vector<3x3x128xf32>
    %437 = arith.addf %416, %436 : vector<3x3x128xf32>
    %438 = vector.extract_strided_slice %131 {offsets = [1, 2, 0], sizes = [3, 3, 128], strides = [1, 1, 1]} : vector<5x5x128xf32> to vector<3x3x128xf32>
    %c14_29 = arith.constant 14 : index
    %439 = memref.load %arg4[%c14_29] : memref<135xf32, #tpu.memory_space<smem>>
    %440 = vector.broadcast %439 : f32 to vector<3x3x128xf32>
    %441 = arith.mulf %438, %440 : vector<3x3x128xf32>
    %442 = arith.addf %421, %441 : vector<3x3x128xf32>
    %c41 = arith.constant 41 : index
    %443 = memref.load %arg4[%c41] : memref<135xf32, #tpu.memory_space<smem>>
    %444 = vector.broadcast %443 : f32 to vector<3x3x128xf32>
    %445 = arith.mulf %438, %444 : vector<3x3x128xf32>
    %446 = arith.addf %425, %445 : vector<3x3x128xf32>
    %c68 = arith.constant 68 : index
    %447 = memref.load %arg4[%c68] : memref<135xf32, #tpu.memory_space<smem>>
    %448 = vector.broadcast %447 : f32 to vector<3x3x128xf32>
    %449 = arith.mulf %438, %448 : vector<3x3x128xf32>
    %450 = arith.addf %429, %449 : vector<3x3x128xf32>
    %c95 = arith.constant 95 : index
    %451 = memref.load %arg4[%c95] : memref<135xf32, #tpu.memory_space<smem>>
    %452 = vector.broadcast %451 : f32 to vector<3x3x128xf32>
    %453 = arith.mulf %438, %452 : vector<3x3x128xf32>
    %454 = arith.addf %433, %453 : vector<3x3x128xf32>
    %c122 = arith.constant 122 : index
    %455 = memref.load %arg4[%c122] : memref<135xf32, #tpu.memory_space<smem>>
    %456 = vector.broadcast %455 : f32 to vector<3x3x128xf32>
    %457 = arith.mulf %438, %456 : vector<3x3x128xf32>
    %458 = arith.addf %437, %457 : vector<3x3x128xf32>
    %459 = vector.extract_strided_slice %131 {offsets = [2, 0, 0], sizes = [3, 3, 128], strides = [1, 1, 1]} : vector<5x5x128xf32> to vector<3x3x128xf32>
    %c15_30 = arith.constant 15 : index
    %460 = memref.load %arg4[%c15_30] : memref<135xf32, #tpu.memory_space<smem>>
    %461 = vector.broadcast %460 : f32 to vector<3x3x128xf32>
    %462 = arith.mulf %459, %461 : vector<3x3x128xf32>
    %463 = arith.addf %442, %462 : vector<3x3x128xf32>
    %c42 = arith.constant 42 : index
    %464 = memref.load %arg4[%c42] : memref<135xf32, #tpu.memory_space<smem>>
    %465 = vector.broadcast %464 : f32 to vector<3x3x128xf32>
    %466 = arith.mulf %459, %465 : vector<3x3x128xf32>
    %467 = arith.addf %446, %466 : vector<3x3x128xf32>
    %c69 = arith.constant 69 : index
    %468 = memref.load %arg4[%c69] : memref<135xf32, #tpu.memory_space<smem>>
    %469 = vector.broadcast %468 : f32 to vector<3x3x128xf32>
    %470 = arith.mulf %459, %469 : vector<3x3x128xf32>
    %471 = arith.addf %450, %470 : vector<3x3x128xf32>
    %c96 = arith.constant 96 : index
    %472 = memref.load %arg4[%c96] : memref<135xf32, #tpu.memory_space<smem>>
    %473 = vector.broadcast %472 : f32 to vector<3x3x128xf32>
    %474 = arith.mulf %459, %473 : vector<3x3x128xf32>
    %475 = arith.addf %454, %474 : vector<3x3x128xf32>
    %c123 = arith.constant 123 : index
    %476 = memref.load %arg4[%c123] : memref<135xf32, #tpu.memory_space<smem>>
    %477 = vector.broadcast %476 : f32 to vector<3x3x128xf32>
    %478 = arith.mulf %459, %477 : vector<3x3x128xf32>
    %479 = arith.addf %458, %478 : vector<3x3x128xf32>
    %480 = vector.extract_strided_slice %131 {offsets = [2, 1, 0], sizes = [3, 3, 128], strides = [1, 1, 1]} : vector<5x5x128xf32> to vector<3x3x128xf32>
    %c16_31 = arith.constant 16 : index
    %481 = memref.load %arg4[%c16_31] : memref<135xf32, #tpu.memory_space<smem>>
    %482 = vector.broadcast %481 : f32 to vector<3x3x128xf32>
    %483 = arith.mulf %480, %482 : vector<3x3x128xf32>
    %484 = arith.addf %463, %483 : vector<3x3x128xf32>
    %c43 = arith.constant 43 : index
    %485 = memref.load %arg4[%c43] : memref<135xf32, #tpu.memory_space<smem>>
    %486 = vector.broadcast %485 : f32 to vector<3x3x128xf32>
    %487 = arith.mulf %480, %486 : vector<3x3x128xf32>
    %488 = arith.addf %467, %487 : vector<3x3x128xf32>
    %c70 = arith.constant 70 : index
    %489 = memref.load %arg4[%c70] : memref<135xf32, #tpu.memory_space<smem>>
    %490 = vector.broadcast %489 : f32 to vector<3x3x128xf32>
    %491 = arith.mulf %480, %490 : vector<3x3x128xf32>
    %492 = arith.addf %471, %491 : vector<3x3x128xf32>
    %c97 = arith.constant 97 : index
    %493 = memref.load %arg4[%c97] : memref<135xf32, #tpu.memory_space<smem>>
    %494 = vector.broadcast %493 : f32 to vector<3x3x128xf32>
    %495 = arith.mulf %480, %494 : vector<3x3x128xf32>
    %496 = arith.addf %475, %495 : vector<3x3x128xf32>
    %c124 = arith.constant 124 : index
    %497 = memref.load %arg4[%c124] : memref<135xf32, #tpu.memory_space<smem>>
    %498 = vector.broadcast %497 : f32 to vector<3x3x128xf32>
    %499 = arith.mulf %480, %498 : vector<3x3x128xf32>
    %500 = arith.addf %479, %499 : vector<3x3x128xf32>
    %501 = vector.extract_strided_slice %131 {offsets = [2, 2, 0], sizes = [3, 3, 128], strides = [1, 1, 1]} : vector<5x5x128xf32> to vector<3x3x128xf32>
    %c17_32 = arith.constant 17 : index
    %502 = memref.load %arg4[%c17_32] : memref<135xf32, #tpu.memory_space<smem>>
    %503 = vector.broadcast %502 : f32 to vector<3x3x128xf32>
    %504 = arith.mulf %501, %503 : vector<3x3x128xf32>
    %505 = arith.addf %484, %504 : vector<3x3x128xf32>
    %c44 = arith.constant 44 : index
    %506 = memref.load %arg4[%c44] : memref<135xf32, #tpu.memory_space<smem>>
    %507 = vector.broadcast %506 : f32 to vector<3x3x128xf32>
    %508 = arith.mulf %501, %507 : vector<3x3x128xf32>
    %509 = arith.addf %488, %508 : vector<3x3x128xf32>
    %c71 = arith.constant 71 : index
    %510 = memref.load %arg4[%c71] : memref<135xf32, #tpu.memory_space<smem>>
    %511 = vector.broadcast %510 : f32 to vector<3x3x128xf32>
    %512 = arith.mulf %501, %511 : vector<3x3x128xf32>
    %513 = arith.addf %492, %512 : vector<3x3x128xf32>
    %c98 = arith.constant 98 : index
    %514 = memref.load %arg4[%c98] : memref<135xf32, #tpu.memory_space<smem>>
    %515 = vector.broadcast %514 : f32 to vector<3x3x128xf32>
    %516 = arith.mulf %501, %515 : vector<3x3x128xf32>
    %517 = arith.addf %496, %516 : vector<3x3x128xf32>
    %c125 = arith.constant 125 : index
    %518 = memref.load %arg4[%c125] : memref<135xf32, #tpu.memory_space<smem>>
    %519 = vector.broadcast %518 : f32 to vector<3x3x128xf32>
    %520 = arith.mulf %501, %519 : vector<3x3x128xf32>
    %521 = arith.addf %500, %520 : vector<3x3x128xf32>
    %522 = vector.extract_strided_slice %133 {offsets = [0, 0, 0], sizes = [3, 3, 128], strides = [1, 1, 1]} : vector<5x5x128xf32> to vector<3x3x128xf32>
    %c18_33 = arith.constant 18 : index
    %523 = memref.load %arg4[%c18_33] : memref<135xf32, #tpu.memory_space<smem>>
    %524 = vector.broadcast %523 : f32 to vector<3x3x128xf32>
    %525 = arith.mulf %522, %524 : vector<3x3x128xf32>
    %526 = arith.addf %505, %525 : vector<3x3x128xf32>
    %c45 = arith.constant 45 : index
    %527 = memref.load %arg4[%c45] : memref<135xf32, #tpu.memory_space<smem>>
    %528 = vector.broadcast %527 : f32 to vector<3x3x128xf32>
    %529 = arith.mulf %522, %528 : vector<3x3x128xf32>
    %530 = arith.addf %509, %529 : vector<3x3x128xf32>
    %c72 = arith.constant 72 : index
    %531 = memref.load %arg4[%c72] : memref<135xf32, #tpu.memory_space<smem>>
    %532 = vector.broadcast %531 : f32 to vector<3x3x128xf32>
    %533 = arith.mulf %522, %532 : vector<3x3x128xf32>
    %534 = arith.addf %513, %533 : vector<3x3x128xf32>
    %c99 = arith.constant 99 : index
    %535 = memref.load %arg4[%c99] : memref<135xf32, #tpu.memory_space<smem>>
    %536 = vector.broadcast %535 : f32 to vector<3x3x128xf32>
    %537 = arith.mulf %522, %536 : vector<3x3x128xf32>
    %538 = arith.addf %517, %537 : vector<3x3x128xf32>
    %c126 = arith.constant 126 : index
    %539 = memref.load %arg4[%c126] : memref<135xf32, #tpu.memory_space<smem>>
    %540 = vector.broadcast %539 : f32 to vector<3x3x128xf32>
    %541 = arith.mulf %522, %540 : vector<3x3x128xf32>
    %542 = arith.addf %521, %541 : vector<3x3x128xf32>
    %543 = vector.extract_strided_slice %133 {offsets = [0, 1, 0], sizes = [3, 3, 128], strides = [1, 1, 1]} : vector<5x5x128xf32> to vector<3x3x128xf32>
    %c19_34 = arith.constant 19 : index
    %544 = memref.load %arg4[%c19_34] : memref<135xf32, #tpu.memory_space<smem>>
    %545 = vector.broadcast %544 : f32 to vector<3x3x128xf32>
    %546 = arith.mulf %543, %545 : vector<3x3x128xf32>
    %547 = arith.addf %526, %546 : vector<3x3x128xf32>
    %c46 = arith.constant 46 : index
    %548 = memref.load %arg4[%c46] : memref<135xf32, #tpu.memory_space<smem>>
    %549 = vector.broadcast %548 : f32 to vector<3x3x128xf32>
    %550 = arith.mulf %543, %549 : vector<3x3x128xf32>
    %551 = arith.addf %530, %550 : vector<3x3x128xf32>
    %c73 = arith.constant 73 : index
    %552 = memref.load %arg4[%c73] : memref<135xf32, #tpu.memory_space<smem>>
    %553 = vector.broadcast %552 : f32 to vector<3x3x128xf32>
    %554 = arith.mulf %543, %553 : vector<3x3x128xf32>
    %555 = arith.addf %534, %554 : vector<3x3x128xf32>
    %c100 = arith.constant 100 : index
    %556 = memref.load %arg4[%c100] : memref<135xf32, #tpu.memory_space<smem>>
    %557 = vector.broadcast %556 : f32 to vector<3x3x128xf32>
    %558 = arith.mulf %543, %557 : vector<3x3x128xf32>
    %559 = arith.addf %538, %558 : vector<3x3x128xf32>
    %c127 = arith.constant 127 : index
    %560 = memref.load %arg4[%c127] : memref<135xf32, #tpu.memory_space<smem>>
    %561 = vector.broadcast %560 : f32 to vector<3x3x128xf32>
    %562 = arith.mulf %543, %561 : vector<3x3x128xf32>
    %563 = arith.addf %542, %562 : vector<3x3x128xf32>
    %564 = vector.extract_strided_slice %133 {offsets = [0, 2, 0], sizes = [3, 3, 128], strides = [1, 1, 1]} : vector<5x5x128xf32> to vector<3x3x128xf32>
    %c20_35 = arith.constant 20 : index
    %565 = memref.load %arg4[%c20_35] : memref<135xf32, #tpu.memory_space<smem>>
    %566 = vector.broadcast %565 : f32 to vector<3x3x128xf32>
    %567 = arith.mulf %564, %566 : vector<3x3x128xf32>
    %568 = arith.addf %547, %567 : vector<3x3x128xf32>
    %c47 = arith.constant 47 : index
    %569 = memref.load %arg4[%c47] : memref<135xf32, #tpu.memory_space<smem>>
    %570 = vector.broadcast %569 : f32 to vector<3x3x128xf32>
    %571 = arith.mulf %564, %570 : vector<3x3x128xf32>
    %572 = arith.addf %551, %571 : vector<3x3x128xf32>
    %c74 = arith.constant 74 : index
    %573 = memref.load %arg4[%c74] : memref<135xf32, #tpu.memory_space<smem>>
    %574 = vector.broadcast %573 : f32 to vector<3x3x128xf32>
    %575 = arith.mulf %564, %574 : vector<3x3x128xf32>
    %576 = arith.addf %555, %575 : vector<3x3x128xf32>
    %c101 = arith.constant 101 : index
    %577 = memref.load %arg4[%c101] : memref<135xf32, #tpu.memory_space<smem>>
    %578 = vector.broadcast %577 : f32 to vector<3x3x128xf32>
    %579 = arith.mulf %564, %578 : vector<3x3x128xf32>
    %580 = arith.addf %559, %579 : vector<3x3x128xf32>
    %c128 = arith.constant 128 : index
    %581 = memref.load %arg4[%c128] : memref<135xf32, #tpu.memory_space<smem>>
    %582 = vector.broadcast %581 : f32 to vector<3x3x128xf32>
    %583 = arith.mulf %564, %582 : vector<3x3x128xf32>
    %584 = arith.addf %563, %583 : vector<3x3x128xf32>
    %585 = vector.extract_strided_slice %133 {offsets = [1, 0, 0], sizes = [3, 3, 128], strides = [1, 1, 1]} : vector<5x5x128xf32> to vector<3x3x128xf32>
    %c21_36 = arith.constant 21 : index
    %586 = memref.load %arg4[%c21_36] : memref<135xf32, #tpu.memory_space<smem>>
    %587 = vector.broadcast %586 : f32 to vector<3x3x128xf32>
    %588 = arith.mulf %585, %587 : vector<3x3x128xf32>
    %589 = arith.addf %568, %588 : vector<3x3x128xf32>
    %c48 = arith.constant 48 : index
    %590 = memref.load %arg4[%c48] : memref<135xf32, #tpu.memory_space<smem>>
    %591 = vector.broadcast %590 : f32 to vector<3x3x128xf32>
    %592 = arith.mulf %585, %591 : vector<3x3x128xf32>
    %593 = arith.addf %572, %592 : vector<3x3x128xf32>
    %c75 = arith.constant 75 : index
    %594 = memref.load %arg4[%c75] : memref<135xf32, #tpu.memory_space<smem>>
    %595 = vector.broadcast %594 : f32 to vector<3x3x128xf32>
    %596 = arith.mulf %585, %595 : vector<3x3x128xf32>
    %597 = arith.addf %576, %596 : vector<3x3x128xf32>
    %c102 = arith.constant 102 : index
    %598 = memref.load %arg4[%c102] : memref<135xf32, #tpu.memory_space<smem>>
    %599 = vector.broadcast %598 : f32 to vector<3x3x128xf32>
    %600 = arith.mulf %585, %599 : vector<3x3x128xf32>
    %601 = arith.addf %580, %600 : vector<3x3x128xf32>
    %c129 = arith.constant 129 : index
    %602 = memref.load %arg4[%c129] : memref<135xf32, #tpu.memory_space<smem>>
    %603 = vector.broadcast %602 : f32 to vector<3x3x128xf32>
    %604 = arith.mulf %585, %603 : vector<3x3x128xf32>
    %605 = arith.addf %584, %604 : vector<3x3x128xf32>
    %606 = vector.extract_strided_slice %133 {offsets = [1, 1, 0], sizes = [3, 3, 128], strides = [1, 1, 1]} : vector<5x5x128xf32> to vector<3x3x128xf32>
    %c22_37 = arith.constant 22 : index
    %607 = memref.load %arg4[%c22_37] : memref<135xf32, #tpu.memory_space<smem>>
    %608 = vector.broadcast %607 : f32 to vector<3x3x128xf32>
    %609 = arith.mulf %606, %608 : vector<3x3x128xf32>
    %610 = arith.addf %589, %609 : vector<3x3x128xf32>
    %c49 = arith.constant 49 : index
    %611 = memref.load %arg4[%c49] : memref<135xf32, #tpu.memory_space<smem>>
    %612 = vector.broadcast %611 : f32 to vector<3x3x128xf32>
    %613 = arith.mulf %606, %612 : vector<3x3x128xf32>
    %614 = arith.addf %593, %613 : vector<3x3x128xf32>
    %c76 = arith.constant 76 : index
    %615 = memref.load %arg4[%c76] : memref<135xf32, #tpu.memory_space<smem>>
    %616 = vector.broadcast %615 : f32 to vector<3x3x128xf32>
    %617 = arith.mulf %606, %616 : vector<3x3x128xf32>
    %618 = arith.addf %597, %617 : vector<3x3x128xf32>
    %c103 = arith.constant 103 : index
    %619 = memref.load %arg4[%c103] : memref<135xf32, #tpu.memory_space<smem>>
    %620 = vector.broadcast %619 : f32 to vector<3x3x128xf32>
    %621 = arith.mulf %606, %620 : vector<3x3x128xf32>
    %622 = arith.addf %601, %621 : vector<3x3x128xf32>
    %c130 = arith.constant 130 : index
    %623 = memref.load %arg4[%c130] : memref<135xf32, #tpu.memory_space<smem>>
    %624 = vector.broadcast %623 : f32 to vector<3x3x128xf32>
    %625 = arith.mulf %606, %624 : vector<3x3x128xf32>
    %626 = arith.addf %605, %625 : vector<3x3x128xf32>
    %627 = vector.extract_strided_slice %133 {offsets = [1, 2, 0], sizes = [3, 3, 128], strides = [1, 1, 1]} : vector<5x5x128xf32> to vector<3x3x128xf32>
    %c23_38 = arith.constant 23 : index
    %628 = memref.load %arg4[%c23_38] : memref<135xf32, #tpu.memory_space<smem>>
    %629 = vector.broadcast %628 : f32 to vector<3x3x128xf32>
    %630 = arith.mulf %627, %629 : vector<3x3x128xf32>
    %631 = arith.addf %610, %630 : vector<3x3x128xf32>
    %c50 = arith.constant 50 : index
    %632 = memref.load %arg4[%c50] : memref<135xf32, #tpu.memory_space<smem>>
    %633 = vector.broadcast %632 : f32 to vector<3x3x128xf32>
    %634 = arith.mulf %627, %633 : vector<3x3x128xf32>
    %635 = arith.addf %614, %634 : vector<3x3x128xf32>
    %c77 = arith.constant 77 : index
    %636 = memref.load %arg4[%c77] : memref<135xf32, #tpu.memory_space<smem>>
    %637 = vector.broadcast %636 : f32 to vector<3x3x128xf32>
    %638 = arith.mulf %627, %637 : vector<3x3x128xf32>
    %639 = arith.addf %618, %638 : vector<3x3x128xf32>
    %c104 = arith.constant 104 : index
    %640 = memref.load %arg4[%c104] : memref<135xf32, #tpu.memory_space<smem>>
    %641 = vector.broadcast %640 : f32 to vector<3x3x128xf32>
    %642 = arith.mulf %627, %641 : vector<3x3x128xf32>
    %643 = arith.addf %622, %642 : vector<3x3x128xf32>
    %c131 = arith.constant 131 : index
    %644 = memref.load %arg4[%c131] : memref<135xf32, #tpu.memory_space<smem>>
    %645 = vector.broadcast %644 : f32 to vector<3x3x128xf32>
    %646 = arith.mulf %627, %645 : vector<3x3x128xf32>
    %647 = arith.addf %626, %646 : vector<3x3x128xf32>
    %648 = vector.extract_strided_slice %133 {offsets = [2, 0, 0], sizes = [3, 3, 128], strides = [1, 1, 1]} : vector<5x5x128xf32> to vector<3x3x128xf32>
    %c24_39 = arith.constant 24 : index
    %649 = memref.load %arg4[%c24_39] : memref<135xf32, #tpu.memory_space<smem>>
    %650 = vector.broadcast %649 : f32 to vector<3x3x128xf32>
    %651 = arith.mulf %648, %650 : vector<3x3x128xf32>
    %652 = arith.addf %631, %651 : vector<3x3x128xf32>
    %c51 = arith.constant 51 : index
    %653 = memref.load %arg4[%c51] : memref<135xf32, #tpu.memory_space<smem>>
    %654 = vector.broadcast %653 : f32 to vector<3x3x128xf32>
    %655 = arith.mulf %648, %654 : vector<3x3x128xf32>
    %656 = arith.addf %635, %655 : vector<3x3x128xf32>
    %c78 = arith.constant 78 : index
    %657 = memref.load %arg4[%c78] : memref<135xf32, #tpu.memory_space<smem>>
    %658 = vector.broadcast %657 : f32 to vector<3x3x128xf32>
    %659 = arith.mulf %648, %658 : vector<3x3x128xf32>
    %660 = arith.addf %639, %659 : vector<3x3x128xf32>
    %c105 = arith.constant 105 : index
    %661 = memref.load %arg4[%c105] : memref<135xf32, #tpu.memory_space<smem>>
    %662 = vector.broadcast %661 : f32 to vector<3x3x128xf32>
    %663 = arith.mulf %648, %662 : vector<3x3x128xf32>
    %664 = arith.addf %643, %663 : vector<3x3x128xf32>
    %c132 = arith.constant 132 : index
    %665 = memref.load %arg4[%c132] : memref<135xf32, #tpu.memory_space<smem>>
    %666 = vector.broadcast %665 : f32 to vector<3x3x128xf32>
    %667 = arith.mulf %648, %666 : vector<3x3x128xf32>
    %668 = arith.addf %647, %667 : vector<3x3x128xf32>
    %669 = vector.extract_strided_slice %133 {offsets = [2, 1, 0], sizes = [3, 3, 128], strides = [1, 1, 1]} : vector<5x5x128xf32> to vector<3x3x128xf32>
    %c25_40 = arith.constant 25 : index
    %670 = memref.load %arg4[%c25_40] : memref<135xf32, #tpu.memory_space<smem>>
    %671 = vector.broadcast %670 : f32 to vector<3x3x128xf32>
    %672 = arith.mulf %669, %671 : vector<3x3x128xf32>
    %673 = arith.addf %652, %672 : vector<3x3x128xf32>
    %c52 = arith.constant 52 : index
    %674 = memref.load %arg4[%c52] : memref<135xf32, #tpu.memory_space<smem>>
    %675 = vector.broadcast %674 : f32 to vector<3x3x128xf32>
    %676 = arith.mulf %669, %675 : vector<3x3x128xf32>
    %677 = arith.addf %656, %676 : vector<3x3x128xf32>
    %c79 = arith.constant 79 : index
    %678 = memref.load %arg4[%c79] : memref<135xf32, #tpu.memory_space<smem>>
    %679 = vector.broadcast %678 : f32 to vector<3x3x128xf32>
    %680 = arith.mulf %669, %679 : vector<3x3x128xf32>
    %681 = arith.addf %660, %680 : vector<3x3x128xf32>
    %c106 = arith.constant 106 : index
    %682 = memref.load %arg4[%c106] : memref<135xf32, #tpu.memory_space<smem>>
    %683 = vector.broadcast %682 : f32 to vector<3x3x128xf32>
    %684 = arith.mulf %669, %683 : vector<3x3x128xf32>
    %685 = arith.addf %664, %684 : vector<3x3x128xf32>
    %c133 = arith.constant 133 : index
    %686 = memref.load %arg4[%c133] : memref<135xf32, #tpu.memory_space<smem>>
    %687 = vector.broadcast %686 : f32 to vector<3x3x128xf32>
    %688 = arith.mulf %669, %687 : vector<3x3x128xf32>
    %689 = arith.addf %668, %688 : vector<3x3x128xf32>
    %690 = vector.extract_strided_slice %133 {offsets = [2, 2, 0], sizes = [3, 3, 128], strides = [1, 1, 1]} : vector<5x5x128xf32> to vector<3x3x128xf32>
    %c26_41 = arith.constant 26 : index
    %691 = memref.load %arg4[%c26_41] : memref<135xf32, #tpu.memory_space<smem>>
    %692 = vector.broadcast %691 : f32 to vector<3x3x128xf32>
    %693 = arith.mulf %690, %692 : vector<3x3x128xf32>
    %694 = arith.addf %673, %693 : vector<3x3x128xf32>
    %c53 = arith.constant 53 : index
    %695 = memref.load %arg4[%c53] : memref<135xf32, #tpu.memory_space<smem>>
    %696 = vector.broadcast %695 : f32 to vector<3x3x128xf32>
    %697 = arith.mulf %690, %696 : vector<3x3x128xf32>
    %698 = arith.addf %677, %697 : vector<3x3x128xf32>
    %c80 = arith.constant 80 : index
    %699 = memref.load %arg4[%c80] : memref<135xf32, #tpu.memory_space<smem>>
    %700 = vector.broadcast %699 : f32 to vector<3x3x128xf32>
    %701 = arith.mulf %690, %700 : vector<3x3x128xf32>
    %702 = arith.addf %681, %701 : vector<3x3x128xf32>
    %c107 = arith.constant 107 : index
    %703 = memref.load %arg4[%c107] : memref<135xf32, #tpu.memory_space<smem>>
    %704 = vector.broadcast %703 : f32 to vector<3x3x128xf32>
    %705 = arith.mulf %690, %704 : vector<3x3x128xf32>
    %706 = arith.addf %685, %705 : vector<3x3x128xf32>
    %c134 = arith.constant 134 : index
    %707 = memref.load %arg4[%c134] : memref<135xf32, #tpu.memory_space<smem>>
    %708 = vector.broadcast %707 : f32 to vector<3x3x128xf32>
    %709 = arith.mulf %690, %708 : vector<3x3x128xf32>
    %710 = arith.addf %689, %709 : vector<3x3x128xf32>
    %cst_42 = arith.constant 0.000000e+00 : f32
    %711 = vector.broadcast %cst_42 : f32 to vector<3x3x128xf32>
    %712 = arith.maximumf %694, %711 : vector<3x3x128xf32>
    %713 = vector.extract_strided_slice %712 {offsets = [0, 0, 0], sizes = [1, 1, 128], strides = [1, 1, 1]} : vector<3x3x128xf32> to vector<1x1x128xf32>
    %714 = vector.shape_cast %713 : vector<1x1x128xf32> to vector<1x128xf32>
    %c0_43 = arith.constant 0 : index
    %715 = memref.load %arg6[%c0_43] : memref<225xf32, #tpu.memory_space<smem>>
    %716 = vector.broadcast %715 : f32 to vector<1x128xf32>
    %717 = arith.mulf %714, %716 : vector<1x128xf32>
    %c0_44 = arith.constant 0 : index
    %718 = memref.load %arg7[%c0_44] : memref<5xf32, #tpu.memory_space<smem>>
    %719 = vector.broadcast %718 : f32 to vector<1x128xf32>
    %720 = arith.addf %717, %719 : vector<1x128xf32>
    %c1_45 = arith.constant 1 : index
    %721 = memref.load %arg6[%c1_45] : memref<225xf32, #tpu.memory_space<smem>>
    %722 = vector.broadcast %721 : f32 to vector<1x128xf32>
    %723 = arith.mulf %714, %722 : vector<1x128xf32>
    %c1_46 = arith.constant 1 : index
    %724 = memref.load %arg7[%c1_46] : memref<5xf32, #tpu.memory_space<smem>>
    %725 = vector.broadcast %724 : f32 to vector<1x128xf32>
    %726 = arith.addf %723, %725 : vector<1x128xf32>
    %c2_47 = arith.constant 2 : index
    %727 = memref.load %arg6[%c2_47] : memref<225xf32, #tpu.memory_space<smem>>
    %728 = vector.broadcast %727 : f32 to vector<1x128xf32>
    %729 = arith.mulf %714, %728 : vector<1x128xf32>
    %c2_48 = arith.constant 2 : index
    %730 = memref.load %arg7[%c2_48] : memref<5xf32, #tpu.memory_space<smem>>
    %731 = vector.broadcast %730 : f32 to vector<1x128xf32>
    %732 = arith.addf %729, %731 : vector<1x128xf32>
    %c3_49 = arith.constant 3 : index
    %733 = memref.load %arg6[%c3_49] : memref<225xf32, #tpu.memory_space<smem>>
    %734 = vector.broadcast %733 : f32 to vector<1x128xf32>
    %735 = arith.mulf %714, %734 : vector<1x128xf32>
    %c3_50 = arith.constant 3 : index
    %736 = memref.load %arg7[%c3_50] : memref<5xf32, #tpu.memory_space<smem>>
    %737 = vector.broadcast %736 : f32 to vector<1x128xf32>
    %738 = arith.addf %735, %737 : vector<1x128xf32>
    %c4_51 = arith.constant 4 : index
    %739 = memref.load %arg6[%c4_51] : memref<225xf32, #tpu.memory_space<smem>>
    %740 = vector.broadcast %739 : f32 to vector<1x128xf32>
    %741 = arith.mulf %714, %740 : vector<1x128xf32>
    %c4_52 = arith.constant 4 : index
    %742 = memref.load %arg7[%c4_52] : memref<5xf32, #tpu.memory_space<smem>>
    %743 = vector.broadcast %742 : f32 to vector<1x128xf32>
    %744 = arith.addf %741, %743 : vector<1x128xf32>
    %745 = vector.extract_strided_slice %712 {offsets = [0, 1, 0], sizes = [1, 1, 128], strides = [1, 1, 1]} : vector<3x3x128xf32> to vector<1x1x128xf32>
    %746 = vector.shape_cast %745 : vector<1x1x128xf32> to vector<1x128xf32>
    %c5_53 = arith.constant 5 : index
    %747 = memref.load %arg6[%c5_53] : memref<225xf32, #tpu.memory_space<smem>>
    %748 = vector.broadcast %747 : f32 to vector<1x128xf32>
    %749 = arith.mulf %746, %748 : vector<1x128xf32>
    %750 = arith.addf %720, %749 : vector<1x128xf32>
    %c6_54 = arith.constant 6 : index
    %751 = memref.load %arg6[%c6_54] : memref<225xf32, #tpu.memory_space<smem>>
    %752 = vector.broadcast %751 : f32 to vector<1x128xf32>
    %753 = arith.mulf %746, %752 : vector<1x128xf32>
    %754 = arith.addf %726, %753 : vector<1x128xf32>
    %c7_55 = arith.constant 7 : index
    %755 = memref.load %arg6[%c7_55] : memref<225xf32, #tpu.memory_space<smem>>
    %756 = vector.broadcast %755 : f32 to vector<1x128xf32>
    %757 = arith.mulf %746, %756 : vector<1x128xf32>
    %758 = arith.addf %732, %757 : vector<1x128xf32>
    %c8_56 = arith.constant 8 : index
    %759 = memref.load %arg6[%c8_56] : memref<225xf32, #tpu.memory_space<smem>>
    %760 = vector.broadcast %759 : f32 to vector<1x128xf32>
    %761 = arith.mulf %746, %760 : vector<1x128xf32>
    %762 = arith.addf %738, %761 : vector<1x128xf32>
    %c9_57 = arith.constant 9 : index
    %763 = memref.load %arg6[%c9_57] : memref<225xf32, #tpu.memory_space<smem>>
    %764 = vector.broadcast %763 : f32 to vector<1x128xf32>
    %765 = arith.mulf %746, %764 : vector<1x128xf32>
    %766 = arith.addf %744, %765 : vector<1x128xf32>
    %767 = vector.extract_strided_slice %712 {offsets = [0, 2, 0], sizes = [1, 1, 128], strides = [1, 1, 1]} : vector<3x3x128xf32> to vector<1x1x128xf32>
    %768 = vector.shape_cast %767 : vector<1x1x128xf32> to vector<1x128xf32>
    %c10_58 = arith.constant 10 : index
    %769 = memref.load %arg6[%c10_58] : memref<225xf32, #tpu.memory_space<smem>>
    %770 = vector.broadcast %769 : f32 to vector<1x128xf32>
    %771 = arith.mulf %768, %770 : vector<1x128xf32>
    %772 = arith.addf %750, %771 : vector<1x128xf32>
    %c11_59 = arith.constant 11 : index
    %773 = memref.load %arg6[%c11_59] : memref<225xf32, #tpu.memory_space<smem>>
    %774 = vector.broadcast %773 : f32 to vector<1x128xf32>
    %775 = arith.mulf %768, %774 : vector<1x128xf32>
    %776 = arith.addf %754, %775 : vector<1x128xf32>
    %c12_60 = arith.constant 12 : index
    %777 = memref.load %arg6[%c12_60] : memref<225xf32, #tpu.memory_space<smem>>
    %778 = vector.broadcast %777 : f32 to vector<1x128xf32>
    %779 = arith.mulf %768, %778 : vector<1x128xf32>
    %780 = arith.addf %758, %779 : vector<1x128xf32>
    %c13_61 = arith.constant 13 : index
    %781 = memref.load %arg6[%c13_61] : memref<225xf32, #tpu.memory_space<smem>>
    %782 = vector.broadcast %781 : f32 to vector<1x128xf32>
    %783 = arith.mulf %768, %782 : vector<1x128xf32>
    %784 = arith.addf %762, %783 : vector<1x128xf32>
    %c14_62 = arith.constant 14 : index
    %785 = memref.load %arg6[%c14_62] : memref<225xf32, #tpu.memory_space<smem>>
    %786 = vector.broadcast %785 : f32 to vector<1x128xf32>
    %787 = arith.mulf %768, %786 : vector<1x128xf32>
    %788 = arith.addf %766, %787 : vector<1x128xf32>
    %789 = vector.extract_strided_slice %712 {offsets = [1, 0, 0], sizes = [1, 1, 128], strides = [1, 1, 1]} : vector<3x3x128xf32> to vector<1x1x128xf32>
    %790 = vector.shape_cast %789 : vector<1x1x128xf32> to vector<1x128xf32>
    %c15_63 = arith.constant 15 : index
    %791 = memref.load %arg6[%c15_63] : memref<225xf32, #tpu.memory_space<smem>>
    %792 = vector.broadcast %791 : f32 to vector<1x128xf32>
    %793 = arith.mulf %790, %792 : vector<1x128xf32>
    %794 = arith.addf %772, %793 : vector<1x128xf32>
    %c16_64 = arith.constant 16 : index
    %795 = memref.load %arg6[%c16_64] : memref<225xf32, #tpu.memory_space<smem>>
    %796 = vector.broadcast %795 : f32 to vector<1x128xf32>
    %797 = arith.mulf %790, %796 : vector<1x128xf32>
    %798 = arith.addf %776, %797 : vector<1x128xf32>
    %c17_65 = arith.constant 17 : index
    %799 = memref.load %arg6[%c17_65] : memref<225xf32, #tpu.memory_space<smem>>
    %800 = vector.broadcast %799 : f32 to vector<1x128xf32>
    %801 = arith.mulf %790, %800 : vector<1x128xf32>
    %802 = arith.addf %780, %801 : vector<1x128xf32>
    %c18_66 = arith.constant 18 : index
    %803 = memref.load %arg6[%c18_66] : memref<225xf32, #tpu.memory_space<smem>>
    %804 = vector.broadcast %803 : f32 to vector<1x128xf32>
    %805 = arith.mulf %790, %804 : vector<1x128xf32>
    %806 = arith.addf %784, %805 : vector<1x128xf32>
    %c19_67 = arith.constant 19 : index
    %807 = memref.load %arg6[%c19_67] : memref<225xf32, #tpu.memory_space<smem>>
    %808 = vector.broadcast %807 : f32 to vector<1x128xf32>
    %809 = arith.mulf %790, %808 : vector<1x128xf32>
    %810 = arith.addf %788, %809 : vector<1x128xf32>
    %811 = vector.extract_strided_slice %712 {offsets = [1, 1, 0], sizes = [1, 1, 128], strides = [1, 1, 1]} : vector<3x3x128xf32> to vector<1x1x128xf32>
    %812 = vector.shape_cast %811 : vector<1x1x128xf32> to vector<1x128xf32>
    %c20_68 = arith.constant 20 : index
    %813 = memref.load %arg6[%c20_68] : memref<225xf32, #tpu.memory_space<smem>>
    %814 = vector.broadcast %813 : f32 to vector<1x128xf32>
    %815 = arith.mulf %812, %814 : vector<1x128xf32>
    %816 = arith.addf %794, %815 : vector<1x128xf32>
    %c21_69 = arith.constant 21 : index
    %817 = memref.load %arg6[%c21_69] : memref<225xf32, #tpu.memory_space<smem>>
    %818 = vector.broadcast %817 : f32 to vector<1x128xf32>
    %819 = arith.mulf %812, %818 : vector<1x128xf32>
    %820 = arith.addf %798, %819 : vector<1x128xf32>
    %c22_70 = arith.constant 22 : index
    %821 = memref.load %arg6[%c22_70] : memref<225xf32, #tpu.memory_space<smem>>
    %822 = vector.broadcast %821 : f32 to vector<1x128xf32>
    %823 = arith.mulf %812, %822 : vector<1x128xf32>
    %824 = arith.addf %802, %823 : vector<1x128xf32>
    %c23_71 = arith.constant 23 : index
    %825 = memref.load %arg6[%c23_71] : memref<225xf32, #tpu.memory_space<smem>>
    %826 = vector.broadcast %825 : f32 to vector<1x128xf32>
    %827 = arith.mulf %812, %826 : vector<1x128xf32>
    %828 = arith.addf %806, %827 : vector<1x128xf32>
    %c24_72 = arith.constant 24 : index
    %829 = memref.load %arg6[%c24_72] : memref<225xf32, #tpu.memory_space<smem>>
    %830 = vector.broadcast %829 : f32 to vector<1x128xf32>
    %831 = arith.mulf %812, %830 : vector<1x128xf32>
    %832 = arith.addf %810, %831 : vector<1x128xf32>
    %833 = vector.extract_strided_slice %712 {offsets = [1, 2, 0], sizes = [1, 1, 128], strides = [1, 1, 1]} : vector<3x3x128xf32> to vector<1x1x128xf32>
    %834 = vector.shape_cast %833 : vector<1x1x128xf32> to vector<1x128xf32>
    %c25_73 = arith.constant 25 : index
    %835 = memref.load %arg6[%c25_73] : memref<225xf32, #tpu.memory_space<smem>>
    %836 = vector.broadcast %835 : f32 to vector<1x128xf32>
    %837 = arith.mulf %834, %836 : vector<1x128xf32>
    %838 = arith.addf %816, %837 : vector<1x128xf32>
    %c26_74 = arith.constant 26 : index
    %839 = memref.load %arg6[%c26_74] : memref<225xf32, #tpu.memory_space<smem>>
    %840 = vector.broadcast %839 : f32 to vector<1x128xf32>
    %841 = arith.mulf %834, %840 : vector<1x128xf32>
    %842 = arith.addf %820, %841 : vector<1x128xf32>
    %c27_75 = arith.constant 27 : index
    %843 = memref.load %arg6[%c27_75] : memref<225xf32, #tpu.memory_space<smem>>
    %844 = vector.broadcast %843 : f32 to vector<1x128xf32>
    %845 = arith.mulf %834, %844 : vector<1x128xf32>
    %846 = arith.addf %824, %845 : vector<1x128xf32>
    %c28_76 = arith.constant 28 : index
    %847 = memref.load %arg6[%c28_76] : memref<225xf32, #tpu.memory_space<smem>>
    %848 = vector.broadcast %847 : f32 to vector<1x128xf32>
    %849 = arith.mulf %834, %848 : vector<1x128xf32>
    %850 = arith.addf %828, %849 : vector<1x128xf32>
    %c29_77 = arith.constant 29 : index
    %851 = memref.load %arg6[%c29_77] : memref<225xf32, #tpu.memory_space<smem>>
    %852 = vector.broadcast %851 : f32 to vector<1x128xf32>
    %853 = arith.mulf %834, %852 : vector<1x128xf32>
    %854 = arith.addf %832, %853 : vector<1x128xf32>
    %855 = vector.extract_strided_slice %712 {offsets = [2, 0, 0], sizes = [1, 1, 128], strides = [1, 1, 1]} : vector<3x3x128xf32> to vector<1x1x128xf32>
    %856 = vector.shape_cast %855 : vector<1x1x128xf32> to vector<1x128xf32>
    %c30_78 = arith.constant 30 : index
    %857 = memref.load %arg6[%c30_78] : memref<225xf32, #tpu.memory_space<smem>>
    %858 = vector.broadcast %857 : f32 to vector<1x128xf32>
    %859 = arith.mulf %856, %858 : vector<1x128xf32>
    %860 = arith.addf %838, %859 : vector<1x128xf32>
    %c31_79 = arith.constant 31 : index
    %861 = memref.load %arg6[%c31_79] : memref<225xf32, #tpu.memory_space<smem>>
    %862 = vector.broadcast %861 : f32 to vector<1x128xf32>
    %863 = arith.mulf %856, %862 : vector<1x128xf32>
    %864 = arith.addf %842, %863 : vector<1x128xf32>
    %c32_80 = arith.constant 32 : index
    %865 = memref.load %arg6[%c32_80] : memref<225xf32, #tpu.memory_space<smem>>
    %866 = vector.broadcast %865 : f32 to vector<1x128xf32>
    %867 = arith.mulf %856, %866 : vector<1x128xf32>
    %868 = arith.addf %846, %867 : vector<1x128xf32>
    %c33_81 = arith.constant 33 : index
    %869 = memref.load %arg6[%c33_81] : memref<225xf32, #tpu.memory_space<smem>>
    %870 = vector.broadcast %869 : f32 to vector<1x128xf32>
    %871 = arith.mulf %856, %870 : vector<1x128xf32>
    %872 = arith.addf %850, %871 : vector<1x128xf32>
    %c34_82 = arith.constant 34 : index
    %873 = memref.load %arg6[%c34_82] : memref<225xf32, #tpu.memory_space<smem>>
    %874 = vector.broadcast %873 : f32 to vector<1x128xf32>
    %875 = arith.mulf %856, %874 : vector<1x128xf32>
    %876 = arith.addf %854, %875 : vector<1x128xf32>
    %877 = vector.extract_strided_slice %712 {offsets = [2, 1, 0], sizes = [1, 1, 128], strides = [1, 1, 1]} : vector<3x3x128xf32> to vector<1x1x128xf32>
    %878 = vector.shape_cast %877 : vector<1x1x128xf32> to vector<1x128xf32>
    %c35_83 = arith.constant 35 : index
    %879 = memref.load %arg6[%c35_83] : memref<225xf32, #tpu.memory_space<smem>>
    %880 = vector.broadcast %879 : f32 to vector<1x128xf32>
    %881 = arith.mulf %878, %880 : vector<1x128xf32>
    %882 = arith.addf %860, %881 : vector<1x128xf32>
    %c36_84 = arith.constant 36 : index
    %883 = memref.load %arg6[%c36_84] : memref<225xf32, #tpu.memory_space<smem>>
    %884 = vector.broadcast %883 : f32 to vector<1x128xf32>
    %885 = arith.mulf %878, %884 : vector<1x128xf32>
    %886 = arith.addf %864, %885 : vector<1x128xf32>
    %c37_85 = arith.constant 37 : index
    %887 = memref.load %arg6[%c37_85] : memref<225xf32, #tpu.memory_space<smem>>
    %888 = vector.broadcast %887 : f32 to vector<1x128xf32>
    %889 = arith.mulf %878, %888 : vector<1x128xf32>
    %890 = arith.addf %868, %889 : vector<1x128xf32>
    %c38_86 = arith.constant 38 : index
    %891 = memref.load %arg6[%c38_86] : memref<225xf32, #tpu.memory_space<smem>>
    %892 = vector.broadcast %891 : f32 to vector<1x128xf32>
    %893 = arith.mulf %878, %892 : vector<1x128xf32>
    %894 = arith.addf %872, %893 : vector<1x128xf32>
    %c39_87 = arith.constant 39 : index
    %895 = memref.load %arg6[%c39_87] : memref<225xf32, #tpu.memory_space<smem>>
    %896 = vector.broadcast %895 : f32 to vector<1x128xf32>
    %897 = arith.mulf %878, %896 : vector<1x128xf32>
    %898 = arith.addf %876, %897 : vector<1x128xf32>
    %899 = vector.extract_strided_slice %712 {offsets = [2, 2, 0], sizes = [1, 1, 128], strides = [1, 1, 1]} : vector<3x3x128xf32> to vector<1x1x128xf32>
    %900 = vector.shape_cast %899 : vector<1x1x128xf32> to vector<1x128xf32>
    %c40_88 = arith.constant 40 : index
    %901 = memref.load %arg6[%c40_88] : memref<225xf32, #tpu.memory_space<smem>>
    %902 = vector.broadcast %901 : f32 to vector<1x128xf32>
    %903 = arith.mulf %900, %902 : vector<1x128xf32>
    %904 = arith.addf %882, %903 : vector<1x128xf32>
    %c41_89 = arith.constant 41 : index
    %905 = memref.load %arg6[%c41_89] : memref<225xf32, #tpu.memory_space<smem>>
    %906 = vector.broadcast %905 : f32 to vector<1x128xf32>
    %907 = arith.mulf %900, %906 : vector<1x128xf32>
    %908 = arith.addf %886, %907 : vector<1x128xf32>
    %c42_90 = arith.constant 42 : index
    %909 = memref.load %arg6[%c42_90] : memref<225xf32, #tpu.memory_space<smem>>
    %910 = vector.broadcast %909 : f32 to vector<1x128xf32>
    %911 = arith.mulf %900, %910 : vector<1x128xf32>
    %912 = arith.addf %890, %911 : vector<1x128xf32>
    %c43_91 = arith.constant 43 : index
    %913 = memref.load %arg6[%c43_91] : memref<225xf32, #tpu.memory_space<smem>>
    %914 = vector.broadcast %913 : f32 to vector<1x128xf32>
    %915 = arith.mulf %900, %914 : vector<1x128xf32>
    %916 = arith.addf %894, %915 : vector<1x128xf32>
    %c44_92 = arith.constant 44 : index
    %917 = memref.load %arg6[%c44_92] : memref<225xf32, #tpu.memory_space<smem>>
    %918 = vector.broadcast %917 : f32 to vector<1x128xf32>
    %919 = arith.mulf %900, %918 : vector<1x128xf32>
    %920 = arith.addf %898, %919 : vector<1x128xf32>
    %cst_93 = arith.constant 0.000000e+00 : f32
    %921 = vector.broadcast %cst_93 : f32 to vector<3x3x128xf32>
    %922 = arith.maximumf %698, %921 : vector<3x3x128xf32>
    %923 = vector.extract_strided_slice %922 {offsets = [0, 0, 0], sizes = [1, 1, 128], strides = [1, 1, 1]} : vector<3x3x128xf32> to vector<1x1x128xf32>
    %924 = vector.shape_cast %923 : vector<1x1x128xf32> to vector<1x128xf32>
    %c45_94 = arith.constant 45 : index
    %925 = memref.load %arg6[%c45_94] : memref<225xf32, #tpu.memory_space<smem>>
    %926 = vector.broadcast %925 : f32 to vector<1x128xf32>
    %927 = arith.mulf %924, %926 : vector<1x128xf32>
    %928 = arith.addf %904, %927 : vector<1x128xf32>
    %c46_95 = arith.constant 46 : index
    %929 = memref.load %arg6[%c46_95] : memref<225xf32, #tpu.memory_space<smem>>
    %930 = vector.broadcast %929 : f32 to vector<1x128xf32>
    %931 = arith.mulf %924, %930 : vector<1x128xf32>
    %932 = arith.addf %908, %931 : vector<1x128xf32>
    %c47_96 = arith.constant 47 : index
    %933 = memref.load %arg6[%c47_96] : memref<225xf32, #tpu.memory_space<smem>>
    %934 = vector.broadcast %933 : f32 to vector<1x128xf32>
    %935 = arith.mulf %924, %934 : vector<1x128xf32>
    %936 = arith.addf %912, %935 : vector<1x128xf32>
    %c48_97 = arith.constant 48 : index
    %937 = memref.load %arg6[%c48_97] : memref<225xf32, #tpu.memory_space<smem>>
    %938 = vector.broadcast %937 : f32 to vector<1x128xf32>
    %939 = arith.mulf %924, %938 : vector<1x128xf32>
    %940 = arith.addf %916, %939 : vector<1x128xf32>
    %c49_98 = arith.constant 49 : index
    %941 = memref.load %arg6[%c49_98] : memref<225xf32, #tpu.memory_space<smem>>
    %942 = vector.broadcast %941 : f32 to vector<1x128xf32>
    %943 = arith.mulf %924, %942 : vector<1x128xf32>
    %944 = arith.addf %920, %943 : vector<1x128xf32>
    %945 = vector.extract_strided_slice %922 {offsets = [0, 1, 0], sizes = [1, 1, 128], strides = [1, 1, 1]} : vector<3x3x128xf32> to vector<1x1x128xf32>
    %946 = vector.shape_cast %945 : vector<1x1x128xf32> to vector<1x128xf32>
    %c50_99 = arith.constant 50 : index
    %947 = memref.load %arg6[%c50_99] : memref<225xf32, #tpu.memory_space<smem>>
    %948 = vector.broadcast %947 : f32 to vector<1x128xf32>
    %949 = arith.mulf %946, %948 : vector<1x128xf32>
    %950 = arith.addf %928, %949 : vector<1x128xf32>
    %c51_100 = arith.constant 51 : index
    %951 = memref.load %arg6[%c51_100] : memref<225xf32, #tpu.memory_space<smem>>
    %952 = vector.broadcast %951 : f32 to vector<1x128xf32>
    %953 = arith.mulf %946, %952 : vector<1x128xf32>
    %954 = arith.addf %932, %953 : vector<1x128xf32>
    %c52_101 = arith.constant 52 : index
    %955 = memref.load %arg6[%c52_101] : memref<225xf32, #tpu.memory_space<smem>>
    %956 = vector.broadcast %955 : f32 to vector<1x128xf32>
    %957 = arith.mulf %946, %956 : vector<1x128xf32>
    %958 = arith.addf %936, %957 : vector<1x128xf32>
    %c53_102 = arith.constant 53 : index
    %959 = memref.load %arg6[%c53_102] : memref<225xf32, #tpu.memory_space<smem>>
    %960 = vector.broadcast %959 : f32 to vector<1x128xf32>
    %961 = arith.mulf %946, %960 : vector<1x128xf32>
    %962 = arith.addf %940, %961 : vector<1x128xf32>
    %c54_103 = arith.constant 54 : index
    %963 = memref.load %arg6[%c54_103] : memref<225xf32, #tpu.memory_space<smem>>
    %964 = vector.broadcast %963 : f32 to vector<1x128xf32>
    %965 = arith.mulf %946, %964 : vector<1x128xf32>
    %966 = arith.addf %944, %965 : vector<1x128xf32>
    %967 = vector.extract_strided_slice %922 {offsets = [0, 2, 0], sizes = [1, 1, 128], strides = [1, 1, 1]} : vector<3x3x128xf32> to vector<1x1x128xf32>
    %968 = vector.shape_cast %967 : vector<1x1x128xf32> to vector<1x128xf32>
    %c55_104 = arith.constant 55 : index
    %969 = memref.load %arg6[%c55_104] : memref<225xf32, #tpu.memory_space<smem>>
    %970 = vector.broadcast %969 : f32 to vector<1x128xf32>
    %971 = arith.mulf %968, %970 : vector<1x128xf32>
    %972 = arith.addf %950, %971 : vector<1x128xf32>
    %c56_105 = arith.constant 56 : index
    %973 = memref.load %arg6[%c56_105] : memref<225xf32, #tpu.memory_space<smem>>
    %974 = vector.broadcast %973 : f32 to vector<1x128xf32>
    %975 = arith.mulf %968, %974 : vector<1x128xf32>
    %976 = arith.addf %954, %975 : vector<1x128xf32>
    %c57_106 = arith.constant 57 : index
    %977 = memref.load %arg6[%c57_106] : memref<225xf32, #tpu.memory_space<smem>>
    %978 = vector.broadcast %977 : f32 to vector<1x128xf32>
    %979 = arith.mulf %968, %978 : vector<1x128xf32>
    %980 = arith.addf %958, %979 : vector<1x128xf32>
    %c58_107 = arith.constant 58 : index
    %981 = memref.load %arg6[%c58_107] : memref<225xf32, #tpu.memory_space<smem>>
    %982 = vector.broadcast %981 : f32 to vector<1x128xf32>
    %983 = arith.mulf %968, %982 : vector<1x128xf32>
    %984 = arith.addf %962, %983 : vector<1x128xf32>
    %c59_108 = arith.constant 59 : index
    %985 = memref.load %arg6[%c59_108] : memref<225xf32, #tpu.memory_space<smem>>
    %986 = vector.broadcast %985 : f32 to vector<1x128xf32>
    %987 = arith.mulf %968, %986 : vector<1x128xf32>
    %988 = arith.addf %966, %987 : vector<1x128xf32>
    %989 = vector.extract_strided_slice %922 {offsets = [1, 0, 0], sizes = [1, 1, 128], strides = [1, 1, 1]} : vector<3x3x128xf32> to vector<1x1x128xf32>
    %990 = vector.shape_cast %989 : vector<1x1x128xf32> to vector<1x128xf32>
    %c60_109 = arith.constant 60 : index
    %991 = memref.load %arg6[%c60_109] : memref<225xf32, #tpu.memory_space<smem>>
    %992 = vector.broadcast %991 : f32 to vector<1x128xf32>
    %993 = arith.mulf %990, %992 : vector<1x128xf32>
    %994 = arith.addf %972, %993 : vector<1x128xf32>
    %c61_110 = arith.constant 61 : index
    %995 = memref.load %arg6[%c61_110] : memref<225xf32, #tpu.memory_space<smem>>
    %996 = vector.broadcast %995 : f32 to vector<1x128xf32>
    %997 = arith.mulf %990, %996 : vector<1x128xf32>
    %998 = arith.addf %976, %997 : vector<1x128xf32>
    %c62_111 = arith.constant 62 : index
    %999 = memref.load %arg6[%c62_111] : memref<225xf32, #tpu.memory_space<smem>>
    %1000 = vector.broadcast %999 : f32 to vector<1x128xf32>
    %1001 = arith.mulf %990, %1000 : vector<1x128xf32>
    %1002 = arith.addf %980, %1001 : vector<1x128xf32>
    %c63_112 = arith.constant 63 : index
    %1003 = memref.load %arg6[%c63_112] : memref<225xf32, #tpu.memory_space<smem>>
    %1004 = vector.broadcast %1003 : f32 to vector<1x128xf32>
    %1005 = arith.mulf %990, %1004 : vector<1x128xf32>
    %1006 = arith.addf %984, %1005 : vector<1x128xf32>
    %c64_113 = arith.constant 64 : index
    %1007 = memref.load %arg6[%c64_113] : memref<225xf32, #tpu.memory_space<smem>>
    %1008 = vector.broadcast %1007 : f32 to vector<1x128xf32>
    %1009 = arith.mulf %990, %1008 : vector<1x128xf32>
    %1010 = arith.addf %988, %1009 : vector<1x128xf32>
    %1011 = vector.extract_strided_slice %922 {offsets = [1, 1, 0], sizes = [1, 1, 128], strides = [1, 1, 1]} : vector<3x3x128xf32> to vector<1x1x128xf32>
    %1012 = vector.shape_cast %1011 : vector<1x1x128xf32> to vector<1x128xf32>
    %c65_114 = arith.constant 65 : index
    %1013 = memref.load %arg6[%c65_114] : memref<225xf32, #tpu.memory_space<smem>>
    %1014 = vector.broadcast %1013 : f32 to vector<1x128xf32>
    %1015 = arith.mulf %1012, %1014 : vector<1x128xf32>
    %1016 = arith.addf %994, %1015 : vector<1x128xf32>
    %c66_115 = arith.constant 66 : index
    %1017 = memref.load %arg6[%c66_115] : memref<225xf32, #tpu.memory_space<smem>>
    %1018 = vector.broadcast %1017 : f32 to vector<1x128xf32>
    %1019 = arith.mulf %1012, %1018 : vector<1x128xf32>
    %1020 = arith.addf %998, %1019 : vector<1x128xf32>
    %c67_116 = arith.constant 67 : index
    %1021 = memref.load %arg6[%c67_116] : memref<225xf32, #tpu.memory_space<smem>>
    %1022 = vector.broadcast %1021 : f32 to vector<1x128xf32>
    %1023 = arith.mulf %1012, %1022 : vector<1x128xf32>
    %1024 = arith.addf %1002, %1023 : vector<1x128xf32>
    %c68_117 = arith.constant 68 : index
    %1025 = memref.load %arg6[%c68_117] : memref<225xf32, #tpu.memory_space<smem>>
    %1026 = vector.broadcast %1025 : f32 to vector<1x128xf32>
    %1027 = arith.mulf %1012, %1026 : vector<1x128xf32>
    %1028 = arith.addf %1006, %1027 : vector<1x128xf32>
    %c69_118 = arith.constant 69 : index
    %1029 = memref.load %arg6[%c69_118] : memref<225xf32, #tpu.memory_space<smem>>
    %1030 = vector.broadcast %1029 : f32 to vector<1x128xf32>
    %1031 = arith.mulf %1012, %1030 : vector<1x128xf32>
    %1032 = arith.addf %1010, %1031 : vector<1x128xf32>
    %1033 = vector.extract_strided_slice %922 {offsets = [1, 2, 0], sizes = [1, 1, 128], strides = [1, 1, 1]} : vector<3x3x128xf32> to vector<1x1x128xf32>
    %1034 = vector.shape_cast %1033 : vector<1x1x128xf32> to vector<1x128xf32>
    %c70_119 = arith.constant 70 : index
    %1035 = memref.load %arg6[%c70_119] : memref<225xf32, #tpu.memory_space<smem>>
    %1036 = vector.broadcast %1035 : f32 to vector<1x128xf32>
    %1037 = arith.mulf %1034, %1036 : vector<1x128xf32>
    %1038 = arith.addf %1016, %1037 : vector<1x128xf32>
    %c71_120 = arith.constant 71 : index
    %1039 = memref.load %arg6[%c71_120] : memref<225xf32, #tpu.memory_space<smem>>
    %1040 = vector.broadcast %1039 : f32 to vector<1x128xf32>
    %1041 = arith.mulf %1034, %1040 : vector<1x128xf32>
    %1042 = arith.addf %1020, %1041 : vector<1x128xf32>
    %c72_121 = arith.constant 72 : index
    %1043 = memref.load %arg6[%c72_121] : memref<225xf32, #tpu.memory_space<smem>>
    %1044 = vector.broadcast %1043 : f32 to vector<1x128xf32>
    %1045 = arith.mulf %1034, %1044 : vector<1x128xf32>
    %1046 = arith.addf %1024, %1045 : vector<1x128xf32>
    %c73_122 = arith.constant 73 : index
    %1047 = memref.load %arg6[%c73_122] : memref<225xf32, #tpu.memory_space<smem>>
    %1048 = vector.broadcast %1047 : f32 to vector<1x128xf32>
    %1049 = arith.mulf %1034, %1048 : vector<1x128xf32>
    %1050 = arith.addf %1028, %1049 : vector<1x128xf32>
    %c74_123 = arith.constant 74 : index
    %1051 = memref.load %arg6[%c74_123] : memref<225xf32, #tpu.memory_space<smem>>
    %1052 = vector.broadcast %1051 : f32 to vector<1x128xf32>
    %1053 = arith.mulf %1034, %1052 : vector<1x128xf32>
    %1054 = arith.addf %1032, %1053 : vector<1x128xf32>
    %1055 = vector.extract_strided_slice %922 {offsets = [2, 0, 0], sizes = [1, 1, 128], strides = [1, 1, 1]} : vector<3x3x128xf32> to vector<1x1x128xf32>
    %1056 = vector.shape_cast %1055 : vector<1x1x128xf32> to vector<1x128xf32>
    %c75_124 = arith.constant 75 : index
    %1057 = memref.load %arg6[%c75_124] : memref<225xf32, #tpu.memory_space<smem>>
    %1058 = vector.broadcast %1057 : f32 to vector<1x128xf32>
    %1059 = arith.mulf %1056, %1058 : vector<1x128xf32>
    %1060 = arith.addf %1038, %1059 : vector<1x128xf32>
    %c76_125 = arith.constant 76 : index
    %1061 = memref.load %arg6[%c76_125] : memref<225xf32, #tpu.memory_space<smem>>
    %1062 = vector.broadcast %1061 : f32 to vector<1x128xf32>
    %1063 = arith.mulf %1056, %1062 : vector<1x128xf32>
    %1064 = arith.addf %1042, %1063 : vector<1x128xf32>
    %c77_126 = arith.constant 77 : index
    %1065 = memref.load %arg6[%c77_126] : memref<225xf32, #tpu.memory_space<smem>>
    %1066 = vector.broadcast %1065 : f32 to vector<1x128xf32>
    %1067 = arith.mulf %1056, %1066 : vector<1x128xf32>
    %1068 = arith.addf %1046, %1067 : vector<1x128xf32>
    %c78_127 = arith.constant 78 : index
    %1069 = memref.load %arg6[%c78_127] : memref<225xf32, #tpu.memory_space<smem>>
    %1070 = vector.broadcast %1069 : f32 to vector<1x128xf32>
    %1071 = arith.mulf %1056, %1070 : vector<1x128xf32>
    %1072 = arith.addf %1050, %1071 : vector<1x128xf32>
    %c79_128 = arith.constant 79 : index
    %1073 = memref.load %arg6[%c79_128] : memref<225xf32, #tpu.memory_space<smem>>
    %1074 = vector.broadcast %1073 : f32 to vector<1x128xf32>
    %1075 = arith.mulf %1056, %1074 : vector<1x128xf32>
    %1076 = arith.addf %1054, %1075 : vector<1x128xf32>
    %1077 = vector.extract_strided_slice %922 {offsets = [2, 1, 0], sizes = [1, 1, 128], strides = [1, 1, 1]} : vector<3x3x128xf32> to vector<1x1x128xf32>
    %1078 = vector.shape_cast %1077 : vector<1x1x128xf32> to vector<1x128xf32>
    %c80_129 = arith.constant 80 : index
    %1079 = memref.load %arg6[%c80_129] : memref<225xf32, #tpu.memory_space<smem>>
    %1080 = vector.broadcast %1079 : f32 to vector<1x128xf32>
    %1081 = arith.mulf %1078, %1080 : vector<1x128xf32>
    %1082 = arith.addf %1060, %1081 : vector<1x128xf32>
    %c81_130 = arith.constant 81 : index
    %1083 = memref.load %arg6[%c81_130] : memref<225xf32, #tpu.memory_space<smem>>
    %1084 = vector.broadcast %1083 : f32 to vector<1x128xf32>
    %1085 = arith.mulf %1078, %1084 : vector<1x128xf32>
    %1086 = arith.addf %1064, %1085 : vector<1x128xf32>
    %c82_131 = arith.constant 82 : index
    %1087 = memref.load %arg6[%c82_131] : memref<225xf32, #tpu.memory_space<smem>>
    %1088 = vector.broadcast %1087 : f32 to vector<1x128xf32>
    %1089 = arith.mulf %1078, %1088 : vector<1x128xf32>
    %1090 = arith.addf %1068, %1089 : vector<1x128xf32>
    %c83_132 = arith.constant 83 : index
    %1091 = memref.load %arg6[%c83_132] : memref<225xf32, #tpu.memory_space<smem>>
    %1092 = vector.broadcast %1091 : f32 to vector<1x128xf32>
    %1093 = arith.mulf %1078, %1092 : vector<1x128xf32>
    %1094 = arith.addf %1072, %1093 : vector<1x128xf32>
    %c84_133 = arith.constant 84 : index
    %1095 = memref.load %arg6[%c84_133] : memref<225xf32, #tpu.memory_space<smem>>
    %1096 = vector.broadcast %1095 : f32 to vector<1x128xf32>
    %1097 = arith.mulf %1078, %1096 : vector<1x128xf32>
    %1098 = arith.addf %1076, %1097 : vector<1x128xf32>
    %1099 = vector.extract_strided_slice %922 {offsets = [2, 2, 0], sizes = [1, 1, 128], strides = [1, 1, 1]} : vector<3x3x128xf32> to vector<1x1x128xf32>
    %1100 = vector.shape_cast %1099 : vector<1x1x128xf32> to vector<1x128xf32>
    %c85_134 = arith.constant 85 : index
    %1101 = memref.load %arg6[%c85_134] : memref<225xf32, #tpu.memory_space<smem>>
    %1102 = vector.broadcast %1101 : f32 to vector<1x128xf32>
    %1103 = arith.mulf %1100, %1102 : vector<1x128xf32>
    %1104 = arith.addf %1082, %1103 : vector<1x128xf32>
    %c86_135 = arith.constant 86 : index
    %1105 = memref.load %arg6[%c86_135] : memref<225xf32, #tpu.memory_space<smem>>
    %1106 = vector.broadcast %1105 : f32 to vector<1x128xf32>
    %1107 = arith.mulf %1100, %1106 : vector<1x128xf32>
    %1108 = arith.addf %1086, %1107 : vector<1x128xf32>
    %c87_136 = arith.constant 87 : index
    %1109 = memref.load %arg6[%c87_136] : memref<225xf32, #tpu.memory_space<smem>>
    %1110 = vector.broadcast %1109 : f32 to vector<1x128xf32>
    %1111 = arith.mulf %1100, %1110 : vector<1x128xf32>
    %1112 = arith.addf %1090, %1111 : vector<1x128xf32>
    %c88_137 = arith.constant 88 : index
    %1113 = memref.load %arg6[%c88_137] : memref<225xf32, #tpu.memory_space<smem>>
    %1114 = vector.broadcast %1113 : f32 to vector<1x128xf32>
    %1115 = arith.mulf %1100, %1114 : vector<1x128xf32>
    %1116 = arith.addf %1094, %1115 : vector<1x128xf32>
    %c89_138 = arith.constant 89 : index
    %1117 = memref.load %arg6[%c89_138] : memref<225xf32, #tpu.memory_space<smem>>
    %1118 = vector.broadcast %1117 : f32 to vector<1x128xf32>
    %1119 = arith.mulf %1100, %1118 : vector<1x128xf32>
    %1120 = arith.addf %1098, %1119 : vector<1x128xf32>
    %cst_139 = arith.constant 0.000000e+00 : f32
    %1121 = vector.broadcast %cst_139 : f32 to vector<3x3x128xf32>
    %1122 = arith.maximumf %702, %1121 : vector<3x3x128xf32>
    %1123 = vector.extract_strided_slice %1122 {offsets = [0, 0, 0], sizes = [1, 1, 128], strides = [1, 1, 1]} : vector<3x3x128xf32> to vector<1x1x128xf32>
    %1124 = vector.shape_cast %1123 : vector<1x1x128xf32> to vector<1x128xf32>
    %c90_140 = arith.constant 90 : index
    %1125 = memref.load %arg6[%c90_140] : memref<225xf32, #tpu.memory_space<smem>>
    %1126 = vector.broadcast %1125 : f32 to vector<1x128xf32>
    %1127 = arith.mulf %1124, %1126 : vector<1x128xf32>
    %1128 = arith.addf %1104, %1127 : vector<1x128xf32>
    %c91_141 = arith.constant 91 : index
    %1129 = memref.load %arg6[%c91_141] : memref<225xf32, #tpu.memory_space<smem>>
    %1130 = vector.broadcast %1129 : f32 to vector<1x128xf32>
    %1131 = arith.mulf %1124, %1130 : vector<1x128xf32>
    %1132 = arith.addf %1108, %1131 : vector<1x128xf32>
    %c92_142 = arith.constant 92 : index
    %1133 = memref.load %arg6[%c92_142] : memref<225xf32, #tpu.memory_space<smem>>
    %1134 = vector.broadcast %1133 : f32 to vector<1x128xf32>
    %1135 = arith.mulf %1124, %1134 : vector<1x128xf32>
    %1136 = arith.addf %1112, %1135 : vector<1x128xf32>
    %c93_143 = arith.constant 93 : index
    %1137 = memref.load %arg6[%c93_143] : memref<225xf32, #tpu.memory_space<smem>>
    %1138 = vector.broadcast %1137 : f32 to vector<1x128xf32>
    %1139 = arith.mulf %1124, %1138 : vector<1x128xf32>
    %1140 = arith.addf %1116, %1139 : vector<1x128xf32>
    %c94_144 = arith.constant 94 : index
    %1141 = memref.load %arg6[%c94_144] : memref<225xf32, #tpu.memory_space<smem>>
    %1142 = vector.broadcast %1141 : f32 to vector<1x128xf32>
    %1143 = arith.mulf %1124, %1142 : vector<1x128xf32>
    %1144 = arith.addf %1120, %1143 : vector<1x128xf32>
    %1145 = vector.extract_strided_slice %1122 {offsets = [0, 1, 0], sizes = [1, 1, 128], strides = [1, 1, 1]} : vector<3x3x128xf32> to vector<1x1x128xf32>
    %1146 = vector.shape_cast %1145 : vector<1x1x128xf32> to vector<1x128xf32>
    %c95_145 = arith.constant 95 : index
    %1147 = memref.load %arg6[%c95_145] : memref<225xf32, #tpu.memory_space<smem>>
    %1148 = vector.broadcast %1147 : f32 to vector<1x128xf32>
    %1149 = arith.mulf %1146, %1148 : vector<1x128xf32>
    %1150 = arith.addf %1128, %1149 : vector<1x128xf32>
    %c96_146 = arith.constant 96 : index
    %1151 = memref.load %arg6[%c96_146] : memref<225xf32, #tpu.memory_space<smem>>
    %1152 = vector.broadcast %1151 : f32 to vector<1x128xf32>
    %1153 = arith.mulf %1146, %1152 : vector<1x128xf32>
    %1154 = arith.addf %1132, %1153 : vector<1x128xf32>
    %c97_147 = arith.constant 97 : index
    %1155 = memref.load %arg6[%c97_147] : memref<225xf32, #tpu.memory_space<smem>>
    %1156 = vector.broadcast %1155 : f32 to vector<1x128xf32>
    %1157 = arith.mulf %1146, %1156 : vector<1x128xf32>
    %1158 = arith.addf %1136, %1157 : vector<1x128xf32>
    %c98_148 = arith.constant 98 : index
    %1159 = memref.load %arg6[%c98_148] : memref<225xf32, #tpu.memory_space<smem>>
    %1160 = vector.broadcast %1159 : f32 to vector<1x128xf32>
    %1161 = arith.mulf %1146, %1160 : vector<1x128xf32>
    %1162 = arith.addf %1140, %1161 : vector<1x128xf32>
    %c99_149 = arith.constant 99 : index
    %1163 = memref.load %arg6[%c99_149] : memref<225xf32, #tpu.memory_space<smem>>
    %1164 = vector.broadcast %1163 : f32 to vector<1x128xf32>
    %1165 = arith.mulf %1146, %1164 : vector<1x128xf32>
    %1166 = arith.addf %1144, %1165 : vector<1x128xf32>
    %1167 = vector.extract_strided_slice %1122 {offsets = [0, 2, 0], sizes = [1, 1, 128], strides = [1, 1, 1]} : vector<3x3x128xf32> to vector<1x1x128xf32>
    %1168 = vector.shape_cast %1167 : vector<1x1x128xf32> to vector<1x128xf32>
    %c100_150 = arith.constant 100 : index
    %1169 = memref.load %arg6[%c100_150] : memref<225xf32, #tpu.memory_space<smem>>
    %1170 = vector.broadcast %1169 : f32 to vector<1x128xf32>
    %1171 = arith.mulf %1168, %1170 : vector<1x128xf32>
    %1172 = arith.addf %1150, %1171 : vector<1x128xf32>
    %c101_151 = arith.constant 101 : index
    %1173 = memref.load %arg6[%c101_151] : memref<225xf32, #tpu.memory_space<smem>>
    %1174 = vector.broadcast %1173 : f32 to vector<1x128xf32>
    %1175 = arith.mulf %1168, %1174 : vector<1x128xf32>
    %1176 = arith.addf %1154, %1175 : vector<1x128xf32>
    %c102_152 = arith.constant 102 : index
    %1177 = memref.load %arg6[%c102_152] : memref<225xf32, #tpu.memory_space<smem>>
    %1178 = vector.broadcast %1177 : f32 to vector<1x128xf32>
    %1179 = arith.mulf %1168, %1178 : vector<1x128xf32>
    %1180 = arith.addf %1158, %1179 : vector<1x128xf32>
    %c103_153 = arith.constant 103 : index
    %1181 = memref.load %arg6[%c103_153] : memref<225xf32, #tpu.memory_space<smem>>
    %1182 = vector.broadcast %1181 : f32 to vector<1x128xf32>
    %1183 = arith.mulf %1168, %1182 : vector<1x128xf32>
    %1184 = arith.addf %1162, %1183 : vector<1x128xf32>
    %c104_154 = arith.constant 104 : index
    %1185 = memref.load %arg6[%c104_154] : memref<225xf32, #tpu.memory_space<smem>>
    %1186 = vector.broadcast %1185 : f32 to vector<1x128xf32>
    %1187 = arith.mulf %1168, %1186 : vector<1x128xf32>
    %1188 = arith.addf %1166, %1187 : vector<1x128xf32>
    %1189 = vector.extract_strided_slice %1122 {offsets = [1, 0, 0], sizes = [1, 1, 128], strides = [1, 1, 1]} : vector<3x3x128xf32> to vector<1x1x128xf32>
    %1190 = vector.shape_cast %1189 : vector<1x1x128xf32> to vector<1x128xf32>
    %c105_155 = arith.constant 105 : index
    %1191 = memref.load %arg6[%c105_155] : memref<225xf32, #tpu.memory_space<smem>>
    %1192 = vector.broadcast %1191 : f32 to vector<1x128xf32>
    %1193 = arith.mulf %1190, %1192 : vector<1x128xf32>
    %1194 = arith.addf %1172, %1193 : vector<1x128xf32>
    %c106_156 = arith.constant 106 : index
    %1195 = memref.load %arg6[%c106_156] : memref<225xf32, #tpu.memory_space<smem>>
    %1196 = vector.broadcast %1195 : f32 to vector<1x128xf32>
    %1197 = arith.mulf %1190, %1196 : vector<1x128xf32>
    %1198 = arith.addf %1176, %1197 : vector<1x128xf32>
    %c107_157 = arith.constant 107 : index
    %1199 = memref.load %arg6[%c107_157] : memref<225xf32, #tpu.memory_space<smem>>
    %1200 = vector.broadcast %1199 : f32 to vector<1x128xf32>
    %1201 = arith.mulf %1190, %1200 : vector<1x128xf32>
    %1202 = arith.addf %1180, %1201 : vector<1x128xf32>
    %c108_158 = arith.constant 108 : index
    %1203 = memref.load %arg6[%c108_158] : memref<225xf32, #tpu.memory_space<smem>>
    %1204 = vector.broadcast %1203 : f32 to vector<1x128xf32>
    %1205 = arith.mulf %1190, %1204 : vector<1x128xf32>
    %1206 = arith.addf %1184, %1205 : vector<1x128xf32>
    %c109_159 = arith.constant 109 : index
    %1207 = memref.load %arg6[%c109_159] : memref<225xf32, #tpu.memory_space<smem>>
    %1208 = vector.broadcast %1207 : f32 to vector<1x128xf32>
    %1209 = arith.mulf %1190, %1208 : vector<1x128xf32>
    %1210 = arith.addf %1188, %1209 : vector<1x128xf32>
    %1211 = vector.extract_strided_slice %1122 {offsets = [1, 1, 0], sizes = [1, 1, 128], strides = [1, 1, 1]} : vector<3x3x128xf32> to vector<1x1x128xf32>
    %1212 = vector.shape_cast %1211 : vector<1x1x128xf32> to vector<1x128xf32>
    %c110_160 = arith.constant 110 : index
    %1213 = memref.load %arg6[%c110_160] : memref<225xf32, #tpu.memory_space<smem>>
    %1214 = vector.broadcast %1213 : f32 to vector<1x128xf32>
    %1215 = arith.mulf %1212, %1214 : vector<1x128xf32>
    %1216 = arith.addf %1194, %1215 : vector<1x128xf32>
    %c111_161 = arith.constant 111 : index
    %1217 = memref.load %arg6[%c111_161] : memref<225xf32, #tpu.memory_space<smem>>
    %1218 = vector.broadcast %1217 : f32 to vector<1x128xf32>
    %1219 = arith.mulf %1212, %1218 : vector<1x128xf32>
    %1220 = arith.addf %1198, %1219 : vector<1x128xf32>
    %c112_162 = arith.constant 112 : index
    %1221 = memref.load %arg6[%c112_162] : memref<225xf32, #tpu.memory_space<smem>>
    %1222 = vector.broadcast %1221 : f32 to vector<1x128xf32>
    %1223 = arith.mulf %1212, %1222 : vector<1x128xf32>
    %1224 = arith.addf %1202, %1223 : vector<1x128xf32>
    %c113_163 = arith.constant 113 : index
    %1225 = memref.load %arg6[%c113_163] : memref<225xf32, #tpu.memory_space<smem>>
    %1226 = vector.broadcast %1225 : f32 to vector<1x128xf32>
    %1227 = arith.mulf %1212, %1226 : vector<1x128xf32>
    %1228 = arith.addf %1206, %1227 : vector<1x128xf32>
    %c114_164 = arith.constant 114 : index
    %1229 = memref.load %arg6[%c114_164] : memref<225xf32, #tpu.memory_space<smem>>
    %1230 = vector.broadcast %1229 : f32 to vector<1x128xf32>
    %1231 = arith.mulf %1212, %1230 : vector<1x128xf32>
    %1232 = arith.addf %1210, %1231 : vector<1x128xf32>
    %1233 = vector.extract_strided_slice %1122 {offsets = [1, 2, 0], sizes = [1, 1, 128], strides = [1, 1, 1]} : vector<3x3x128xf32> to vector<1x1x128xf32>
    %1234 = vector.shape_cast %1233 : vector<1x1x128xf32> to vector<1x128xf32>
    %c115_165 = arith.constant 115 : index
    %1235 = memref.load %arg6[%c115_165] : memref<225xf32, #tpu.memory_space<smem>>
    %1236 = vector.broadcast %1235 : f32 to vector<1x128xf32>
    %1237 = arith.mulf %1234, %1236 : vector<1x128xf32>
    %1238 = arith.addf %1216, %1237 : vector<1x128xf32>
    %c116_166 = arith.constant 116 : index
    %1239 = memref.load %arg6[%c116_166] : memref<225xf32, #tpu.memory_space<smem>>
    %1240 = vector.broadcast %1239 : f32 to vector<1x128xf32>
    %1241 = arith.mulf %1234, %1240 : vector<1x128xf32>
    %1242 = arith.addf %1220, %1241 : vector<1x128xf32>
    %c117_167 = arith.constant 117 : index
    %1243 = memref.load %arg6[%c117_167] : memref<225xf32, #tpu.memory_space<smem>>
    %1244 = vector.broadcast %1243 : f32 to vector<1x128xf32>
    %1245 = arith.mulf %1234, %1244 : vector<1x128xf32>
    %1246 = arith.addf %1224, %1245 : vector<1x128xf32>
    %c118_168 = arith.constant 118 : index
    %1247 = memref.load %arg6[%c118_168] : memref<225xf32, #tpu.memory_space<smem>>
    %1248 = vector.broadcast %1247 : f32 to vector<1x128xf32>
    %1249 = arith.mulf %1234, %1248 : vector<1x128xf32>
    %1250 = arith.addf %1228, %1249 : vector<1x128xf32>
    %c119_169 = arith.constant 119 : index
    %1251 = memref.load %arg6[%c119_169] : memref<225xf32, #tpu.memory_space<smem>>
    %1252 = vector.broadcast %1251 : f32 to vector<1x128xf32>
    %1253 = arith.mulf %1234, %1252 : vector<1x128xf32>
    %1254 = arith.addf %1232, %1253 : vector<1x128xf32>
    %1255 = vector.extract_strided_slice %1122 {offsets = [2, 0, 0], sizes = [1, 1, 128], strides = [1, 1, 1]} : vector<3x3x128xf32> to vector<1x1x128xf32>
    %1256 = vector.shape_cast %1255 : vector<1x1x128xf32> to vector<1x128xf32>
    %c120_170 = arith.constant 120 : index
    %1257 = memref.load %arg6[%c120_170] : memref<225xf32, #tpu.memory_space<smem>>
    %1258 = vector.broadcast %1257 : f32 to vector<1x128xf32>
    %1259 = arith.mulf %1256, %1258 : vector<1x128xf32>
    %1260 = arith.addf %1238, %1259 : vector<1x128xf32>
    %c121_171 = arith.constant 121 : index
    %1261 = memref.load %arg6[%c121_171] : memref<225xf32, #tpu.memory_space<smem>>
    %1262 = vector.broadcast %1261 : f32 to vector<1x128xf32>
    %1263 = arith.mulf %1256, %1262 : vector<1x128xf32>
    %1264 = arith.addf %1242, %1263 : vector<1x128xf32>
    %c122_172 = arith.constant 122 : index
    %1265 = memref.load %arg6[%c122_172] : memref<225xf32, #tpu.memory_space<smem>>
    %1266 = vector.broadcast %1265 : f32 to vector<1x128xf32>
    %1267 = arith.mulf %1256, %1266 : vector<1x128xf32>
    %1268 = arith.addf %1246, %1267 : vector<1x128xf32>
    %c123_173 = arith.constant 123 : index
    %1269 = memref.load %arg6[%c123_173] : memref<225xf32, #tpu.memory_space<smem>>
    %1270 = vector.broadcast %1269 : f32 to vector<1x128xf32>
    %1271 = arith.mulf %1256, %1270 : vector<1x128xf32>
    %1272 = arith.addf %1250, %1271 : vector<1x128xf32>
    %c124_174 = arith.constant 124 : index
    %1273 = memref.load %arg6[%c124_174] : memref<225xf32, #tpu.memory_space<smem>>
    %1274 = vector.broadcast %1273 : f32 to vector<1x128xf32>
    %1275 = arith.mulf %1256, %1274 : vector<1x128xf32>
    %1276 = arith.addf %1254, %1275 : vector<1x128xf32>
    %1277 = vector.extract_strided_slice %1122 {offsets = [2, 1, 0], sizes = [1, 1, 128], strides = [1, 1, 1]} : vector<3x3x128xf32> to vector<1x1x128xf32>
    %1278 = vector.shape_cast %1277 : vector<1x1x128xf32> to vector<1x128xf32>
    %c125_175 = arith.constant 125 : index
    %1279 = memref.load %arg6[%c125_175] : memref<225xf32, #tpu.memory_space<smem>>
    %1280 = vector.broadcast %1279 : f32 to vector<1x128xf32>
    %1281 = arith.mulf %1278, %1280 : vector<1x128xf32>
    %1282 = arith.addf %1260, %1281 : vector<1x128xf32>
    %c126_176 = arith.constant 126 : index
    %1283 = memref.load %arg6[%c126_176] : memref<225xf32, #tpu.memory_space<smem>>
    %1284 = vector.broadcast %1283 : f32 to vector<1x128xf32>
    %1285 = arith.mulf %1278, %1284 : vector<1x128xf32>
    %1286 = arith.addf %1264, %1285 : vector<1x128xf32>
    %c127_177 = arith.constant 127 : index
    %1287 = memref.load %arg6[%c127_177] : memref<225xf32, #tpu.memory_space<smem>>
    %1288 = vector.broadcast %1287 : f32 to vector<1x128xf32>
    %1289 = arith.mulf %1278, %1288 : vector<1x128xf32>
    %1290 = arith.addf %1268, %1289 : vector<1x128xf32>
    %c128_178 = arith.constant 128 : index
    %1291 = memref.load %arg6[%c128_178] : memref<225xf32, #tpu.memory_space<smem>>
    %1292 = vector.broadcast %1291 : f32 to vector<1x128xf32>
    %1293 = arith.mulf %1278, %1292 : vector<1x128xf32>
    %1294 = arith.addf %1272, %1293 : vector<1x128xf32>
    %c129_179 = arith.constant 129 : index
    %1295 = memref.load %arg6[%c129_179] : memref<225xf32, #tpu.memory_space<smem>>
    %1296 = vector.broadcast %1295 : f32 to vector<1x128xf32>
    %1297 = arith.mulf %1278, %1296 : vector<1x128xf32>
    %1298 = arith.addf %1276, %1297 : vector<1x128xf32>
    %1299 = vector.extract_strided_slice %1122 {offsets = [2, 2, 0], sizes = [1, 1, 128], strides = [1, 1, 1]} : vector<3x3x128xf32> to vector<1x1x128xf32>
    %1300 = vector.shape_cast %1299 : vector<1x1x128xf32> to vector<1x128xf32>
    %c130_180 = arith.constant 130 : index
    %1301 = memref.load %arg6[%c130_180] : memref<225xf32, #tpu.memory_space<smem>>
    %1302 = vector.broadcast %1301 : f32 to vector<1x128xf32>
    %1303 = arith.mulf %1300, %1302 : vector<1x128xf32>
    %1304 = arith.addf %1282, %1303 : vector<1x128xf32>
    %c131_181 = arith.constant 131 : index
    %1305 = memref.load %arg6[%c131_181] : memref<225xf32, #tpu.memory_space<smem>>
    %1306 = vector.broadcast %1305 : f32 to vector<1x128xf32>
    %1307 = arith.mulf %1300, %1306 : vector<1x128xf32>
    %1308 = arith.addf %1286, %1307 : vector<1x128xf32>
    %c132_182 = arith.constant 132 : index
    %1309 = memref.load %arg6[%c132_182] : memref<225xf32, #tpu.memory_space<smem>>
    %1310 = vector.broadcast %1309 : f32 to vector<1x128xf32>
    %1311 = arith.mulf %1300, %1310 : vector<1x128xf32>
    %1312 = arith.addf %1290, %1311 : vector<1x128xf32>
    %c133_183 = arith.constant 133 : index
    %1313 = memref.load %arg6[%c133_183] : memref<225xf32, #tpu.memory_space<smem>>
    %1314 = vector.broadcast %1313 : f32 to vector<1x128xf32>
    %1315 = arith.mulf %1300, %1314 : vector<1x128xf32>
    %1316 = arith.addf %1294, %1315 : vector<1x128xf32>
    %c134_184 = arith.constant 134 : index
    %1317 = memref.load %arg6[%c134_184] : memref<225xf32, #tpu.memory_space<smem>>
    %1318 = vector.broadcast %1317 : f32 to vector<1x128xf32>
    %1319 = arith.mulf %1300, %1318 : vector<1x128xf32>
    %1320 = arith.addf %1298, %1319 : vector<1x128xf32>
    %cst_185 = arith.constant 0.000000e+00 : f32
    %1321 = vector.broadcast %cst_185 : f32 to vector<3x3x128xf32>
    %1322 = arith.maximumf %706, %1321 : vector<3x3x128xf32>
    %1323 = vector.extract_strided_slice %1322 {offsets = [0, 0, 0], sizes = [1, 1, 128], strides = [1, 1, 1]} : vector<3x3x128xf32> to vector<1x1x128xf32>
    %1324 = vector.shape_cast %1323 : vector<1x1x128xf32> to vector<1x128xf32>
    %c135 = arith.constant 135 : index
    %1325 = memref.load %arg6[%c135] : memref<225xf32, #tpu.memory_space<smem>>
    %1326 = vector.broadcast %1325 : f32 to vector<1x128xf32>
    %1327 = arith.mulf %1324, %1326 : vector<1x128xf32>
    %1328 = arith.addf %1304, %1327 : vector<1x128xf32>
    %c136 = arith.constant 136 : index
    %1329 = memref.load %arg6[%c136] : memref<225xf32, #tpu.memory_space<smem>>
    %1330 = vector.broadcast %1329 : f32 to vector<1x128xf32>
    %1331 = arith.mulf %1324, %1330 : vector<1x128xf32>
    %1332 = arith.addf %1308, %1331 : vector<1x128xf32>
    %c137 = arith.constant 137 : index
    %1333 = memref.load %arg6[%c137] : memref<225xf32, #tpu.memory_space<smem>>
    %1334 = vector.broadcast %1333 : f32 to vector<1x128xf32>
    %1335 = arith.mulf %1324, %1334 : vector<1x128xf32>
    %1336 = arith.addf %1312, %1335 : vector<1x128xf32>
    %c138 = arith.constant 138 : index
    %1337 = memref.load %arg6[%c138] : memref<225xf32, #tpu.memory_space<smem>>
    %1338 = vector.broadcast %1337 : f32 to vector<1x128xf32>
    %1339 = arith.mulf %1324, %1338 : vector<1x128xf32>
    %1340 = arith.addf %1316, %1339 : vector<1x128xf32>
    %c139 = arith.constant 139 : index
    %1341 = memref.load %arg6[%c139] : memref<225xf32, #tpu.memory_space<smem>>
    %1342 = vector.broadcast %1341 : f32 to vector<1x128xf32>
    %1343 = arith.mulf %1324, %1342 : vector<1x128xf32>
    %1344 = arith.addf %1320, %1343 : vector<1x128xf32>
    %1345 = vector.extract_strided_slice %1322 {offsets = [0, 1, 0], sizes = [1, 1, 128], strides = [1, 1, 1]} : vector<3x3x128xf32> to vector<1x1x128xf32>
    %1346 = vector.shape_cast %1345 : vector<1x1x128xf32> to vector<1x128xf32>
    %c140 = arith.constant 140 : index
    %1347 = memref.load %arg6[%c140] : memref<225xf32, #tpu.memory_space<smem>>
    %1348 = vector.broadcast %1347 : f32 to vector<1x128xf32>
    %1349 = arith.mulf %1346, %1348 : vector<1x128xf32>
    %1350 = arith.addf %1328, %1349 : vector<1x128xf32>
    %c141 = arith.constant 141 : index
    %1351 = memref.load %arg6[%c141] : memref<225xf32, #tpu.memory_space<smem>>
    %1352 = vector.broadcast %1351 : f32 to vector<1x128xf32>
    %1353 = arith.mulf %1346, %1352 : vector<1x128xf32>
    %1354 = arith.addf %1332, %1353 : vector<1x128xf32>
    %c142 = arith.constant 142 : index
    %1355 = memref.load %arg6[%c142] : memref<225xf32, #tpu.memory_space<smem>>
    %1356 = vector.broadcast %1355 : f32 to vector<1x128xf32>
    %1357 = arith.mulf %1346, %1356 : vector<1x128xf32>
    %1358 = arith.addf %1336, %1357 : vector<1x128xf32>
    %c143 = arith.constant 143 : index
    %1359 = memref.load %arg6[%c143] : memref<225xf32, #tpu.memory_space<smem>>
    %1360 = vector.broadcast %1359 : f32 to vector<1x128xf32>
    %1361 = arith.mulf %1346, %1360 : vector<1x128xf32>
    %1362 = arith.addf %1340, %1361 : vector<1x128xf32>
    %c144 = arith.constant 144 : index
    %1363 = memref.load %arg6[%c144] : memref<225xf32, #tpu.memory_space<smem>>
    %1364 = vector.broadcast %1363 : f32 to vector<1x128xf32>
    %1365 = arith.mulf %1346, %1364 : vector<1x128xf32>
    %1366 = arith.addf %1344, %1365 : vector<1x128xf32>
    %1367 = vector.extract_strided_slice %1322 {offsets = [0, 2, 0], sizes = [1, 1, 128], strides = [1, 1, 1]} : vector<3x3x128xf32> to vector<1x1x128xf32>
    %1368 = vector.shape_cast %1367 : vector<1x1x128xf32> to vector<1x128xf32>
    %c145 = arith.constant 145 : index
    %1369 = memref.load %arg6[%c145] : memref<225xf32, #tpu.memory_space<smem>>
    %1370 = vector.broadcast %1369 : f32 to vector<1x128xf32>
    %1371 = arith.mulf %1368, %1370 : vector<1x128xf32>
    %1372 = arith.addf %1350, %1371 : vector<1x128xf32>
    %c146 = arith.constant 146 : index
    %1373 = memref.load %arg6[%c146] : memref<225xf32, #tpu.memory_space<smem>>
    %1374 = vector.broadcast %1373 : f32 to vector<1x128xf32>
    %1375 = arith.mulf %1368, %1374 : vector<1x128xf32>
    %1376 = arith.addf %1354, %1375 : vector<1x128xf32>
    %c147 = arith.constant 147 : index
    %1377 = memref.load %arg6[%c147] : memref<225xf32, #tpu.memory_space<smem>>
    %1378 = vector.broadcast %1377 : f32 to vector<1x128xf32>
    %1379 = arith.mulf %1368, %1378 : vector<1x128xf32>
    %1380 = arith.addf %1358, %1379 : vector<1x128xf32>
    %c148 = arith.constant 148 : index
    %1381 = memref.load %arg6[%c148] : memref<225xf32, #tpu.memory_space<smem>>
    %1382 = vector.broadcast %1381 : f32 to vector<1x128xf32>
    %1383 = arith.mulf %1368, %1382 : vector<1x128xf32>
    %1384 = arith.addf %1362, %1383 : vector<1x128xf32>
    %c149 = arith.constant 149 : index
    %1385 = memref.load %arg6[%c149] : memref<225xf32, #tpu.memory_space<smem>>
    %1386 = vector.broadcast %1385 : f32 to vector<1x128xf32>
    %1387 = arith.mulf %1368, %1386 : vector<1x128xf32>
    %1388 = arith.addf %1366, %1387 : vector<1x128xf32>
    %1389 = vector.extract_strided_slice %1322 {offsets = [1, 0, 0], sizes = [1, 1, 128], strides = [1, 1, 1]} : vector<3x3x128xf32> to vector<1x1x128xf32>
    %1390 = vector.shape_cast %1389 : vector<1x1x128xf32> to vector<1x128xf32>
    %c150 = arith.constant 150 : index
    %1391 = memref.load %arg6[%c150] : memref<225xf32, #tpu.memory_space<smem>>
    %1392 = vector.broadcast %1391 : f32 to vector<1x128xf32>
    %1393 = arith.mulf %1390, %1392 : vector<1x128xf32>
    %1394 = arith.addf %1372, %1393 : vector<1x128xf32>
    %c151 = arith.constant 151 : index
    %1395 = memref.load %arg6[%c151] : memref<225xf32, #tpu.memory_space<smem>>
    %1396 = vector.broadcast %1395 : f32 to vector<1x128xf32>
    %1397 = arith.mulf %1390, %1396 : vector<1x128xf32>
    %1398 = arith.addf %1376, %1397 : vector<1x128xf32>
    %c152 = arith.constant 152 : index
    %1399 = memref.load %arg6[%c152] : memref<225xf32, #tpu.memory_space<smem>>
    %1400 = vector.broadcast %1399 : f32 to vector<1x128xf32>
    %1401 = arith.mulf %1390, %1400 : vector<1x128xf32>
    %1402 = arith.addf %1380, %1401 : vector<1x128xf32>
    %c153 = arith.constant 153 : index
    %1403 = memref.load %arg6[%c153] : memref<225xf32, #tpu.memory_space<smem>>
    %1404 = vector.broadcast %1403 : f32 to vector<1x128xf32>
    %1405 = arith.mulf %1390, %1404 : vector<1x128xf32>
    %1406 = arith.addf %1384, %1405 : vector<1x128xf32>
    %c154 = arith.constant 154 : index
    %1407 = memref.load %arg6[%c154] : memref<225xf32, #tpu.memory_space<smem>>
    %1408 = vector.broadcast %1407 : f32 to vector<1x128xf32>
    %1409 = arith.mulf %1390, %1408 : vector<1x128xf32>
    %1410 = arith.addf %1388, %1409 : vector<1x128xf32>
    %1411 = vector.extract_strided_slice %1322 {offsets = [1, 1, 0], sizes = [1, 1, 128], strides = [1, 1, 1]} : vector<3x3x128xf32> to vector<1x1x128xf32>
    %1412 = vector.shape_cast %1411 : vector<1x1x128xf32> to vector<1x128xf32>
    %c155 = arith.constant 155 : index
    %1413 = memref.load %arg6[%c155] : memref<225xf32, #tpu.memory_space<smem>>
    %1414 = vector.broadcast %1413 : f32 to vector<1x128xf32>
    %1415 = arith.mulf %1412, %1414 : vector<1x128xf32>
    %1416 = arith.addf %1394, %1415 : vector<1x128xf32>
    %c156 = arith.constant 156 : index
    %1417 = memref.load %arg6[%c156] : memref<225xf32, #tpu.memory_space<smem>>
    %1418 = vector.broadcast %1417 : f32 to vector<1x128xf32>
    %1419 = arith.mulf %1412, %1418 : vector<1x128xf32>
    %1420 = arith.addf %1398, %1419 : vector<1x128xf32>
    %c157 = arith.constant 157 : index
    %1421 = memref.load %arg6[%c157] : memref<225xf32, #tpu.memory_space<smem>>
    %1422 = vector.broadcast %1421 : f32 to vector<1x128xf32>
    %1423 = arith.mulf %1412, %1422 : vector<1x128xf32>
    %1424 = arith.addf %1402, %1423 : vector<1x128xf32>
    %c158 = arith.constant 158 : index
    %1425 = memref.load %arg6[%c158] : memref<225xf32, #tpu.memory_space<smem>>
    %1426 = vector.broadcast %1425 : f32 to vector<1x128xf32>
    %1427 = arith.mulf %1412, %1426 : vector<1x128xf32>
    %1428 = arith.addf %1406, %1427 : vector<1x128xf32>
    %c159 = arith.constant 159 : index
    %1429 = memref.load %arg6[%c159] : memref<225xf32, #tpu.memory_space<smem>>
    %1430 = vector.broadcast %1429 : f32 to vector<1x128xf32>
    %1431 = arith.mulf %1412, %1430 : vector<1x128xf32>
    %1432 = arith.addf %1410, %1431 : vector<1x128xf32>
    %1433 = vector.extract_strided_slice %1322 {offsets = [1, 2, 0], sizes = [1, 1, 128], strides = [1, 1, 1]} : vector<3x3x128xf32> to vector<1x1x128xf32>
    %1434 = vector.shape_cast %1433 : vector<1x1x128xf32> to vector<1x128xf32>
    %c160 = arith.constant 160 : index
    %1435 = memref.load %arg6[%c160] : memref<225xf32, #tpu.memory_space<smem>>
    %1436 = vector.broadcast %1435 : f32 to vector<1x128xf32>
    %1437 = arith.mulf %1434, %1436 : vector<1x128xf32>
    %1438 = arith.addf %1416, %1437 : vector<1x128xf32>
    %c161 = arith.constant 161 : index
    %1439 = memref.load %arg6[%c161] : memref<225xf32, #tpu.memory_space<smem>>
    %1440 = vector.broadcast %1439 : f32 to vector<1x128xf32>
    %1441 = arith.mulf %1434, %1440 : vector<1x128xf32>
    %1442 = arith.addf %1420, %1441 : vector<1x128xf32>
    %c162 = arith.constant 162 : index
    %1443 = memref.load %arg6[%c162] : memref<225xf32, #tpu.memory_space<smem>>
    %1444 = vector.broadcast %1443 : f32 to vector<1x128xf32>
    %1445 = arith.mulf %1434, %1444 : vector<1x128xf32>
    %1446 = arith.addf %1424, %1445 : vector<1x128xf32>
    %c163 = arith.constant 163 : index
    %1447 = memref.load %arg6[%c163] : memref<225xf32, #tpu.memory_space<smem>>
    %1448 = vector.broadcast %1447 : f32 to vector<1x128xf32>
    %1449 = arith.mulf %1434, %1448 : vector<1x128xf32>
    %1450 = arith.addf %1428, %1449 : vector<1x128xf32>
    %c164 = arith.constant 164 : index
    %1451 = memref.load %arg6[%c164] : memref<225xf32, #tpu.memory_space<smem>>
    %1452 = vector.broadcast %1451 : f32 to vector<1x128xf32>
    %1453 = arith.mulf %1434, %1452 : vector<1x128xf32>
    %1454 = arith.addf %1432, %1453 : vector<1x128xf32>
    %1455 = vector.extract_strided_slice %1322 {offsets = [2, 0, 0], sizes = [1, 1, 128], strides = [1, 1, 1]} : vector<3x3x128xf32> to vector<1x1x128xf32>
    %1456 = vector.shape_cast %1455 : vector<1x1x128xf32> to vector<1x128xf32>
    %c165 = arith.constant 165 : index
    %1457 = memref.load %arg6[%c165] : memref<225xf32, #tpu.memory_space<smem>>
    %1458 = vector.broadcast %1457 : f32 to vector<1x128xf32>
    %1459 = arith.mulf %1456, %1458 : vector<1x128xf32>
    %1460 = arith.addf %1438, %1459 : vector<1x128xf32>
    %c166 = arith.constant 166 : index
    %1461 = memref.load %arg6[%c166] : memref<225xf32, #tpu.memory_space<smem>>
    %1462 = vector.broadcast %1461 : f32 to vector<1x128xf32>
    %1463 = arith.mulf %1456, %1462 : vector<1x128xf32>
    %1464 = arith.addf %1442, %1463 : vector<1x128xf32>
    %c167 = arith.constant 167 : index
    %1465 = memref.load %arg6[%c167] : memref<225xf32, #tpu.memory_space<smem>>
    %1466 = vector.broadcast %1465 : f32 to vector<1x128xf32>
    %1467 = arith.mulf %1456, %1466 : vector<1x128xf32>
    %1468 = arith.addf %1446, %1467 : vector<1x128xf32>
    %c168 = arith.constant 168 : index
    %1469 = memref.load %arg6[%c168] : memref<225xf32, #tpu.memory_space<smem>>
    %1470 = vector.broadcast %1469 : f32 to vector<1x128xf32>
    %1471 = arith.mulf %1456, %1470 : vector<1x128xf32>
    %1472 = arith.addf %1450, %1471 : vector<1x128xf32>
    %c169 = arith.constant 169 : index
    %1473 = memref.load %arg6[%c169] : memref<225xf32, #tpu.memory_space<smem>>
    %1474 = vector.broadcast %1473 : f32 to vector<1x128xf32>
    %1475 = arith.mulf %1456, %1474 : vector<1x128xf32>
    %1476 = arith.addf %1454, %1475 : vector<1x128xf32>
    %1477 = vector.extract_strided_slice %1322 {offsets = [2, 1, 0], sizes = [1, 1, 128], strides = [1, 1, 1]} : vector<3x3x128xf32> to vector<1x1x128xf32>
    %1478 = vector.shape_cast %1477 : vector<1x1x128xf32> to vector<1x128xf32>
    %c170 = arith.constant 170 : index
    %1479 = memref.load %arg6[%c170] : memref<225xf32, #tpu.memory_space<smem>>
    %1480 = vector.broadcast %1479 : f32 to vector<1x128xf32>
    %1481 = arith.mulf %1478, %1480 : vector<1x128xf32>
    %1482 = arith.addf %1460, %1481 : vector<1x128xf32>
    %c171 = arith.constant 171 : index
    %1483 = memref.load %arg6[%c171] : memref<225xf32, #tpu.memory_space<smem>>
    %1484 = vector.broadcast %1483 : f32 to vector<1x128xf32>
    %1485 = arith.mulf %1478, %1484 : vector<1x128xf32>
    %1486 = arith.addf %1464, %1485 : vector<1x128xf32>
    %c172 = arith.constant 172 : index
    %1487 = memref.load %arg6[%c172] : memref<225xf32, #tpu.memory_space<smem>>
    %1488 = vector.broadcast %1487 : f32 to vector<1x128xf32>
    %1489 = arith.mulf %1478, %1488 : vector<1x128xf32>
    %1490 = arith.addf %1468, %1489 : vector<1x128xf32>
    %c173 = arith.constant 173 : index
    %1491 = memref.load %arg6[%c173] : memref<225xf32, #tpu.memory_space<smem>>
    %1492 = vector.broadcast %1491 : f32 to vector<1x128xf32>
    %1493 = arith.mulf %1478, %1492 : vector<1x128xf32>
    %1494 = arith.addf %1472, %1493 : vector<1x128xf32>
    %c174 = arith.constant 174 : index
    %1495 = memref.load %arg6[%c174] : memref<225xf32, #tpu.memory_space<smem>>
    %1496 = vector.broadcast %1495 : f32 to vector<1x128xf32>
    %1497 = arith.mulf %1478, %1496 : vector<1x128xf32>
    %1498 = arith.addf %1476, %1497 : vector<1x128xf32>
    %1499 = vector.extract_strided_slice %1322 {offsets = [2, 2, 0], sizes = [1, 1, 128], strides = [1, 1, 1]} : vector<3x3x128xf32> to vector<1x1x128xf32>
    %1500 = vector.shape_cast %1499 : vector<1x1x128xf32> to vector<1x128xf32>
    %c175 = arith.constant 175 : index
    %1501 = memref.load %arg6[%c175] : memref<225xf32, #tpu.memory_space<smem>>
    %1502 = vector.broadcast %1501 : f32 to vector<1x128xf32>
    %1503 = arith.mulf %1500, %1502 : vector<1x128xf32>
    %1504 = arith.addf %1482, %1503 : vector<1x128xf32>
    %c176 = arith.constant 176 : index
    %1505 = memref.load %arg6[%c176] : memref<225xf32, #tpu.memory_space<smem>>
    %1506 = vector.broadcast %1505 : f32 to vector<1x128xf32>
    %1507 = arith.mulf %1500, %1506 : vector<1x128xf32>
    %1508 = arith.addf %1486, %1507 : vector<1x128xf32>
    %c177 = arith.constant 177 : index
    %1509 = memref.load %arg6[%c177] : memref<225xf32, #tpu.memory_space<smem>>
    %1510 = vector.broadcast %1509 : f32 to vector<1x128xf32>
    %1511 = arith.mulf %1500, %1510 : vector<1x128xf32>
    %1512 = arith.addf %1490, %1511 : vector<1x128xf32>
    %c178 = arith.constant 178 : index
    %1513 = memref.load %arg6[%c178] : memref<225xf32, #tpu.memory_space<smem>>
    %1514 = vector.broadcast %1513 : f32 to vector<1x128xf32>
    %1515 = arith.mulf %1500, %1514 : vector<1x128xf32>
    %1516 = arith.addf %1494, %1515 : vector<1x128xf32>
    %c179 = arith.constant 179 : index
    %1517 = memref.load %arg6[%c179] : memref<225xf32, #tpu.memory_space<smem>>
    %1518 = vector.broadcast %1517 : f32 to vector<1x128xf32>
    %1519 = arith.mulf %1500, %1518 : vector<1x128xf32>
    %1520 = arith.addf %1498, %1519 : vector<1x128xf32>
    %cst_186 = arith.constant 0.000000e+00 : f32
    %1521 = vector.broadcast %cst_186 : f32 to vector<3x3x128xf32>
    %1522 = arith.maximumf %710, %1521 : vector<3x3x128xf32>
    %1523 = vector.extract_strided_slice %1522 {offsets = [0, 0, 0], sizes = [1, 1, 128], strides = [1, 1, 1]} : vector<3x3x128xf32> to vector<1x1x128xf32>
    %1524 = vector.shape_cast %1523 : vector<1x1x128xf32> to vector<1x128xf32>
    %c180 = arith.constant 180 : index
    %1525 = memref.load %arg6[%c180] : memref<225xf32, #tpu.memory_space<smem>>
    %1526 = vector.broadcast %1525 : f32 to vector<1x128xf32>
    %1527 = arith.mulf %1524, %1526 : vector<1x128xf32>
    %1528 = arith.addf %1504, %1527 : vector<1x128xf32>
    %c181 = arith.constant 181 : index
    %1529 = memref.load %arg6[%c181] : memref<225xf32, #tpu.memory_space<smem>>
    %1530 = vector.broadcast %1529 : f32 to vector<1x128xf32>
    %1531 = arith.mulf %1524, %1530 : vector<1x128xf32>
    %1532 = arith.addf %1508, %1531 : vector<1x128xf32>
    %c182 = arith.constant 182 : index
    %1533 = memref.load %arg6[%c182] : memref<225xf32, #tpu.memory_space<smem>>
    %1534 = vector.broadcast %1533 : f32 to vector<1x128xf32>
    %1535 = arith.mulf %1524, %1534 : vector<1x128xf32>
    %1536 = arith.addf %1512, %1535 : vector<1x128xf32>
    %c183 = arith.constant 183 : index
    %1537 = memref.load %arg6[%c183] : memref<225xf32, #tpu.memory_space<smem>>
    %1538 = vector.broadcast %1537 : f32 to vector<1x128xf32>
    %1539 = arith.mulf %1524, %1538 : vector<1x128xf32>
    %1540 = arith.addf %1516, %1539 : vector<1x128xf32>
    %c184 = arith.constant 184 : index
    %1541 = memref.load %arg6[%c184] : memref<225xf32, #tpu.memory_space<smem>>
    %1542 = vector.broadcast %1541 : f32 to vector<1x128xf32>
    %1543 = arith.mulf %1524, %1542 : vector<1x128xf32>
    %1544 = arith.addf %1520, %1543 : vector<1x128xf32>
    %1545 = vector.extract_strided_slice %1522 {offsets = [0, 1, 0], sizes = [1, 1, 128], strides = [1, 1, 1]} : vector<3x3x128xf32> to vector<1x1x128xf32>
    %1546 = vector.shape_cast %1545 : vector<1x1x128xf32> to vector<1x128xf32>
    %c185 = arith.constant 185 : index
    %1547 = memref.load %arg6[%c185] : memref<225xf32, #tpu.memory_space<smem>>
    %1548 = vector.broadcast %1547 : f32 to vector<1x128xf32>
    %1549 = arith.mulf %1546, %1548 : vector<1x128xf32>
    %1550 = arith.addf %1528, %1549 : vector<1x128xf32>
    %c186 = arith.constant 186 : index
    %1551 = memref.load %arg6[%c186] : memref<225xf32, #tpu.memory_space<smem>>
    %1552 = vector.broadcast %1551 : f32 to vector<1x128xf32>
    %1553 = arith.mulf %1546, %1552 : vector<1x128xf32>
    %1554 = arith.addf %1532, %1553 : vector<1x128xf32>
    %c187 = arith.constant 187 : index
    %1555 = memref.load %arg6[%c187] : memref<225xf32, #tpu.memory_space<smem>>
    %1556 = vector.broadcast %1555 : f32 to vector<1x128xf32>
    %1557 = arith.mulf %1546, %1556 : vector<1x128xf32>
    %1558 = arith.addf %1536, %1557 : vector<1x128xf32>
    %c188 = arith.constant 188 : index
    %1559 = memref.load %arg6[%c188] : memref<225xf32, #tpu.memory_space<smem>>
    %1560 = vector.broadcast %1559 : f32 to vector<1x128xf32>
    %1561 = arith.mulf %1546, %1560 : vector<1x128xf32>
    %1562 = arith.addf %1540, %1561 : vector<1x128xf32>
    %c189 = arith.constant 189 : index
    %1563 = memref.load %arg6[%c189] : memref<225xf32, #tpu.memory_space<smem>>
    %1564 = vector.broadcast %1563 : f32 to vector<1x128xf32>
    %1565 = arith.mulf %1546, %1564 : vector<1x128xf32>
    %1566 = arith.addf %1544, %1565 : vector<1x128xf32>
    %1567 = vector.extract_strided_slice %1522 {offsets = [0, 2, 0], sizes = [1, 1, 128], strides = [1, 1, 1]} : vector<3x3x128xf32> to vector<1x1x128xf32>
    %1568 = vector.shape_cast %1567 : vector<1x1x128xf32> to vector<1x128xf32>
    %c190 = arith.constant 190 : index
    %1569 = memref.load %arg6[%c190] : memref<225xf32, #tpu.memory_space<smem>>
    %1570 = vector.broadcast %1569 : f32 to vector<1x128xf32>
    %1571 = arith.mulf %1568, %1570 : vector<1x128xf32>
    %1572 = arith.addf %1550, %1571 : vector<1x128xf32>
    %c191 = arith.constant 191 : index
    %1573 = memref.load %arg6[%c191] : memref<225xf32, #tpu.memory_space<smem>>
    %1574 = vector.broadcast %1573 : f32 to vector<1x128xf32>
    %1575 = arith.mulf %1568, %1574 : vector<1x128xf32>
    %1576 = arith.addf %1554, %1575 : vector<1x128xf32>
    %c192 = arith.constant 192 : index
    %1577 = memref.load %arg6[%c192] : memref<225xf32, #tpu.memory_space<smem>>
    %1578 = vector.broadcast %1577 : f32 to vector<1x128xf32>
    %1579 = arith.mulf %1568, %1578 : vector<1x128xf32>
    %1580 = arith.addf %1558, %1579 : vector<1x128xf32>
    %c193 = arith.constant 193 : index
    %1581 = memref.load %arg6[%c193] : memref<225xf32, #tpu.memory_space<smem>>
    %1582 = vector.broadcast %1581 : f32 to vector<1x128xf32>
    %1583 = arith.mulf %1568, %1582 : vector<1x128xf32>
    %1584 = arith.addf %1562, %1583 : vector<1x128xf32>
    %c194 = arith.constant 194 : index
    %1585 = memref.load %arg6[%c194] : memref<225xf32, #tpu.memory_space<smem>>
    %1586 = vector.broadcast %1585 : f32 to vector<1x128xf32>
    %1587 = arith.mulf %1568, %1586 : vector<1x128xf32>
    %1588 = arith.addf %1566, %1587 : vector<1x128xf32>
    %1589 = vector.extract_strided_slice %1522 {offsets = [1, 0, 0], sizes = [1, 1, 128], strides = [1, 1, 1]} : vector<3x3x128xf32> to vector<1x1x128xf32>
    %1590 = vector.shape_cast %1589 : vector<1x1x128xf32> to vector<1x128xf32>
    %c195 = arith.constant 195 : index
    %1591 = memref.load %arg6[%c195] : memref<225xf32, #tpu.memory_space<smem>>
    %1592 = vector.broadcast %1591 : f32 to vector<1x128xf32>
    %1593 = arith.mulf %1590, %1592 : vector<1x128xf32>
    %1594 = arith.addf %1572, %1593 : vector<1x128xf32>
    %c196 = arith.constant 196 : index
    %1595 = memref.load %arg6[%c196] : memref<225xf32, #tpu.memory_space<smem>>
    %1596 = vector.broadcast %1595 : f32 to vector<1x128xf32>
    %1597 = arith.mulf %1590, %1596 : vector<1x128xf32>
    %1598 = arith.addf %1576, %1597 : vector<1x128xf32>
    %c197 = arith.constant 197 : index
    %1599 = memref.load %arg6[%c197] : memref<225xf32, #tpu.memory_space<smem>>
    %1600 = vector.broadcast %1599 : f32 to vector<1x128xf32>
    %1601 = arith.mulf %1590, %1600 : vector<1x128xf32>
    %1602 = arith.addf %1580, %1601 : vector<1x128xf32>
    %c198 = arith.constant 198 : index
    %1603 = memref.load %arg6[%c198] : memref<225xf32, #tpu.memory_space<smem>>
    %1604 = vector.broadcast %1603 : f32 to vector<1x128xf32>
    %1605 = arith.mulf %1590, %1604 : vector<1x128xf32>
    %1606 = arith.addf %1584, %1605 : vector<1x128xf32>
    %c199 = arith.constant 199 : index
    %1607 = memref.load %arg6[%c199] : memref<225xf32, #tpu.memory_space<smem>>
    %1608 = vector.broadcast %1607 : f32 to vector<1x128xf32>
    %1609 = arith.mulf %1590, %1608 : vector<1x128xf32>
    %1610 = arith.addf %1588, %1609 : vector<1x128xf32>
    %1611 = vector.extract_strided_slice %1522 {offsets = [1, 1, 0], sizes = [1, 1, 128], strides = [1, 1, 1]} : vector<3x3x128xf32> to vector<1x1x128xf32>
    %1612 = vector.shape_cast %1611 : vector<1x1x128xf32> to vector<1x128xf32>
    %c200 = arith.constant 200 : index
    %1613 = memref.load %arg6[%c200] : memref<225xf32, #tpu.memory_space<smem>>
    %1614 = vector.broadcast %1613 : f32 to vector<1x128xf32>
    %1615 = arith.mulf %1612, %1614 : vector<1x128xf32>
    %1616 = arith.addf %1594, %1615 : vector<1x128xf32>
    %c201 = arith.constant 201 : index
    %1617 = memref.load %arg6[%c201] : memref<225xf32, #tpu.memory_space<smem>>
    %1618 = vector.broadcast %1617 : f32 to vector<1x128xf32>
    %1619 = arith.mulf %1612, %1618 : vector<1x128xf32>
    %1620 = arith.addf %1598, %1619 : vector<1x128xf32>
    %c202 = arith.constant 202 : index
    %1621 = memref.load %arg6[%c202] : memref<225xf32, #tpu.memory_space<smem>>
    %1622 = vector.broadcast %1621 : f32 to vector<1x128xf32>
    %1623 = arith.mulf %1612, %1622 : vector<1x128xf32>
    %1624 = arith.addf %1602, %1623 : vector<1x128xf32>
    %c203 = arith.constant 203 : index
    %1625 = memref.load %arg6[%c203] : memref<225xf32, #tpu.memory_space<smem>>
    %1626 = vector.broadcast %1625 : f32 to vector<1x128xf32>
    %1627 = arith.mulf %1612, %1626 : vector<1x128xf32>
    %1628 = arith.addf %1606, %1627 : vector<1x128xf32>
    %c204 = arith.constant 204 : index
    %1629 = memref.load %arg6[%c204] : memref<225xf32, #tpu.memory_space<smem>>
    %1630 = vector.broadcast %1629 : f32 to vector<1x128xf32>
    %1631 = arith.mulf %1612, %1630 : vector<1x128xf32>
    %1632 = arith.addf %1610, %1631 : vector<1x128xf32>
    %1633 = vector.extract_strided_slice %1522 {offsets = [1, 2, 0], sizes = [1, 1, 128], strides = [1, 1, 1]} : vector<3x3x128xf32> to vector<1x1x128xf32>
    %1634 = vector.shape_cast %1633 : vector<1x1x128xf32> to vector<1x128xf32>
    %c205 = arith.constant 205 : index
    %1635 = memref.load %arg6[%c205] : memref<225xf32, #tpu.memory_space<smem>>
    %1636 = vector.broadcast %1635 : f32 to vector<1x128xf32>
    %1637 = arith.mulf %1634, %1636 : vector<1x128xf32>
    %1638 = arith.addf %1616, %1637 : vector<1x128xf32>
    %c206 = arith.constant 206 : index
    %1639 = memref.load %arg6[%c206] : memref<225xf32, #tpu.memory_space<smem>>
    %1640 = vector.broadcast %1639 : f32 to vector<1x128xf32>
    %1641 = arith.mulf %1634, %1640 : vector<1x128xf32>
    %1642 = arith.addf %1620, %1641 : vector<1x128xf32>
    %c207 = arith.constant 207 : index
    %1643 = memref.load %arg6[%c207] : memref<225xf32, #tpu.memory_space<smem>>
    %1644 = vector.broadcast %1643 : f32 to vector<1x128xf32>
    %1645 = arith.mulf %1634, %1644 : vector<1x128xf32>
    %1646 = arith.addf %1624, %1645 : vector<1x128xf32>
    %c208 = arith.constant 208 : index
    %1647 = memref.load %arg6[%c208] : memref<225xf32, #tpu.memory_space<smem>>
    %1648 = vector.broadcast %1647 : f32 to vector<1x128xf32>
    %1649 = arith.mulf %1634, %1648 : vector<1x128xf32>
    %1650 = arith.addf %1628, %1649 : vector<1x128xf32>
    %c209 = arith.constant 209 : index
    %1651 = memref.load %arg6[%c209] : memref<225xf32, #tpu.memory_space<smem>>
    %1652 = vector.broadcast %1651 : f32 to vector<1x128xf32>
    %1653 = arith.mulf %1634, %1652 : vector<1x128xf32>
    %1654 = arith.addf %1632, %1653 : vector<1x128xf32>
    %1655 = vector.extract_strided_slice %1522 {offsets = [2, 0, 0], sizes = [1, 1, 128], strides = [1, 1, 1]} : vector<3x3x128xf32> to vector<1x1x128xf32>
    %1656 = vector.shape_cast %1655 : vector<1x1x128xf32> to vector<1x128xf32>
    %c210 = arith.constant 210 : index
    %1657 = memref.load %arg6[%c210] : memref<225xf32, #tpu.memory_space<smem>>
    %1658 = vector.broadcast %1657 : f32 to vector<1x128xf32>
    %1659 = arith.mulf %1656, %1658 : vector<1x128xf32>
    %1660 = arith.addf %1638, %1659 : vector<1x128xf32>
    %c211 = arith.constant 211 : index
    %1661 = memref.load %arg6[%c211] : memref<225xf32, #tpu.memory_space<smem>>
    %1662 = vector.broadcast %1661 : f32 to vector<1x128xf32>
    %1663 = arith.mulf %1656, %1662 : vector<1x128xf32>
    %1664 = arith.addf %1642, %1663 : vector<1x128xf32>
    %c212 = arith.constant 212 : index
    %1665 = memref.load %arg6[%c212] : memref<225xf32, #tpu.memory_space<smem>>
    %1666 = vector.broadcast %1665 : f32 to vector<1x128xf32>
    %1667 = arith.mulf %1656, %1666 : vector<1x128xf32>
    %1668 = arith.addf %1646, %1667 : vector<1x128xf32>
    %c213 = arith.constant 213 : index
    %1669 = memref.load %arg6[%c213] : memref<225xf32, #tpu.memory_space<smem>>
    %1670 = vector.broadcast %1669 : f32 to vector<1x128xf32>
    %1671 = arith.mulf %1656, %1670 : vector<1x128xf32>
    %1672 = arith.addf %1650, %1671 : vector<1x128xf32>
    %c214 = arith.constant 214 : index
    %1673 = memref.load %arg6[%c214] : memref<225xf32, #tpu.memory_space<smem>>
    %1674 = vector.broadcast %1673 : f32 to vector<1x128xf32>
    %1675 = arith.mulf %1656, %1674 : vector<1x128xf32>
    %1676 = arith.addf %1654, %1675 : vector<1x128xf32>
    %1677 = vector.extract_strided_slice %1522 {offsets = [2, 1, 0], sizes = [1, 1, 128], strides = [1, 1, 1]} : vector<3x3x128xf32> to vector<1x1x128xf32>
    %1678 = vector.shape_cast %1677 : vector<1x1x128xf32> to vector<1x128xf32>
    %c215 = arith.constant 215 : index
    %1679 = memref.load %arg6[%c215] : memref<225xf32, #tpu.memory_space<smem>>
    %1680 = vector.broadcast %1679 : f32 to vector<1x128xf32>
    %1681 = arith.mulf %1678, %1680 : vector<1x128xf32>
    %1682 = arith.addf %1660, %1681 : vector<1x128xf32>
    %c216 = arith.constant 216 : index
    %1683 = memref.load %arg6[%c216] : memref<225xf32, #tpu.memory_space<smem>>
    %1684 = vector.broadcast %1683 : f32 to vector<1x128xf32>
    %1685 = arith.mulf %1678, %1684 : vector<1x128xf32>
    %1686 = arith.addf %1664, %1685 : vector<1x128xf32>
    %c217 = arith.constant 217 : index
    %1687 = memref.load %arg6[%c217] : memref<225xf32, #tpu.memory_space<smem>>
    %1688 = vector.broadcast %1687 : f32 to vector<1x128xf32>
    %1689 = arith.mulf %1678, %1688 : vector<1x128xf32>
    %1690 = arith.addf %1668, %1689 : vector<1x128xf32>
    %c218 = arith.constant 218 : index
    %1691 = memref.load %arg6[%c218] : memref<225xf32, #tpu.memory_space<smem>>
    %1692 = vector.broadcast %1691 : f32 to vector<1x128xf32>
    %1693 = arith.mulf %1678, %1692 : vector<1x128xf32>
    %1694 = arith.addf %1672, %1693 : vector<1x128xf32>
    %c219 = arith.constant 219 : index
    %1695 = memref.load %arg6[%c219] : memref<225xf32, #tpu.memory_space<smem>>
    %1696 = vector.broadcast %1695 : f32 to vector<1x128xf32>
    %1697 = arith.mulf %1678, %1696 : vector<1x128xf32>
    %1698 = arith.addf %1676, %1697 : vector<1x128xf32>
    %1699 = vector.extract_strided_slice %1522 {offsets = [2, 2, 0], sizes = [1, 1, 128], strides = [1, 1, 1]} : vector<3x3x128xf32> to vector<1x1x128xf32>
    %1700 = vector.shape_cast %1699 : vector<1x1x128xf32> to vector<1x128xf32>
    %c220 = arith.constant 220 : index
    %1701 = memref.load %arg6[%c220] : memref<225xf32, #tpu.memory_space<smem>>
    %1702 = vector.broadcast %1701 : f32 to vector<1x128xf32>
    %1703 = arith.mulf %1700, %1702 : vector<1x128xf32>
    %1704 = arith.addf %1682, %1703 : vector<1x128xf32>
    %c221 = arith.constant 221 : index
    %1705 = memref.load %arg6[%c221] : memref<225xf32, #tpu.memory_space<smem>>
    %1706 = vector.broadcast %1705 : f32 to vector<1x128xf32>
    %1707 = arith.mulf %1700, %1706 : vector<1x128xf32>
    %1708 = arith.addf %1686, %1707 : vector<1x128xf32>
    %c222 = arith.constant 222 : index
    %1709 = memref.load %arg6[%c222] : memref<225xf32, #tpu.memory_space<smem>>
    %1710 = vector.broadcast %1709 : f32 to vector<1x128xf32>
    %1711 = arith.mulf %1700, %1710 : vector<1x128xf32>
    %1712 = arith.addf %1690, %1711 : vector<1x128xf32>
    %c223 = arith.constant 223 : index
    %1713 = memref.load %arg6[%c223] : memref<225xf32, #tpu.memory_space<smem>>
    %1714 = vector.broadcast %1713 : f32 to vector<1x128xf32>
    %1715 = arith.mulf %1700, %1714 : vector<1x128xf32>
    %1716 = arith.addf %1694, %1715 : vector<1x128xf32>
    %c224 = arith.constant 224 : index
    %1717 = memref.load %arg6[%c224] : memref<225xf32, #tpu.memory_space<smem>>
    %1718 = vector.broadcast %1717 : f32 to vector<1x128xf32>
    %1719 = arith.mulf %1700, %1718 : vector<1x128xf32>
    %1720 = arith.addf %1698, %1719 : vector<1x128xf32>
    %1721 = arith.maximumf %1704, %1708 : vector<1x128xf32>
    %1722 = arith.maximumf %1721, %1712 : vector<1x128xf32>
    %1723 = arith.maximumf %1722, %1716 : vector<1x128xf32>
    %1724 = arith.maximumf %1723, %1720 : vector<1x128xf32>
    %1725 = arith.subf %1704, %1724 : vector<1x128xf32>
    %1726 = math.exp %1725 : vector<1x128xf32>
    %1727 = arith.subf %1708, %1724 : vector<1x128xf32>
    %1728 = math.exp %1727 : vector<1x128xf32>
    %1729 = arith.subf %1712, %1724 : vector<1x128xf32>
    %1730 = math.exp %1729 : vector<1x128xf32>
    %1731 = arith.subf %1716, %1724 : vector<1x128xf32>
    %1732 = math.exp %1731 : vector<1x128xf32>
    %1733 = arith.subf %1720, %1724 : vector<1x128xf32>
    %1734 = math.exp %1733 : vector<1x128xf32>
    %1735 = arith.addf %1726, %1728 : vector<1x128xf32>
    %1736 = arith.addf %1735, %1730 : vector<1x128xf32>
    %1737 = arith.addf %1736, %1732 : vector<1x128xf32>
    %1738 = arith.addf %1737, %1734 : vector<1x128xf32>
    %1739 = tpu.reciprocal %1738 : vector<1x128xf32> -> vector<1x128xf32>
    %1740 = arith.mulf %1726, %1739 : vector<1x128xf32>
    %1741 = arith.mulf %1728, %1739 : vector<1x128xf32>
    %1742 = arith.mulf %1730, %1739 : vector<1x128xf32>
    %1743 = arith.mulf %1732, %1739 : vector<1x128xf32>
    %1744 = arith.mulf %1734, %1739 : vector<1x128xf32>
    %1745 = tpu.concatenate %1740, %1741, %1742, %1743, %1744 in 0 : vector<1x128xf32>, vector<1x128xf32>, vector<1x128xf32>, vector<1x128xf32>, vector<1x128xf32> -> vector<5x128xf32>
    %c0_187 = arith.constant 0 : index
    %c0_188 = arith.constant 0 : index
    %1746 = vector.load %arg8[%c0_187, %c0_188] : memref<5x128xf32, #tpu.memory_space<vmem>>, vector<5x128xf32>
    tpu.vector_store %arg8[%c0_187, %c0_188], %1745 {strides = array<i32>} : memref<5x128xf32, #tpu.memory_space<vmem>>, vector<5x128xf32>,
    return
  }
  func.func @transform_0(%arg0: i32) -> (i32, i32, i32) {
    %c0_i32 = arith.constant 0 : i32
    %c0_i32_0 = arith.constant 0 : i32
    %c0_i32_1 = arith.constant 0 : i32
    return %c0_i32, %c0_i32_0, %arg0 : i32, i32, i32
  }
  func.func @transform_1(%arg0: i32) -> i32 {
    %c0_i32 = arith.constant 0 : i32
    %c0_i32_0 = arith.constant 0 : i32
    return %c0_i32 : i32
  }
  func.func @transform_2(%arg0: i32) -> i32 {
    %c0_i32 = arith.constant 0 : i32
    %c0_i32_0 = arith.constant 0 : i32
    return %c0_i32 : i32
  }
  func.func @transform_3(%arg0: i32) -> i32 {
    %c0_i32 = arith.constant 0 : i32
    %c0_i32_0 = arith.constant 0 : i32
    return %c0_i32 : i32
  }
  func.func @transform_4(%arg0: i32) -> i32 {
    %c0_i32 = arith.constant 0 : i32
    %c0_i32_0 = arith.constant 0 : i32
    return %c0_i32 : i32
  }
  func.func @transform_5(%arg0: i32) -> i32 {
    %c0_i32 = arith.constant 0 : i32
    %c0_i32_0 = arith.constant 0 : i32
    return %c0_i32 : i32
  }
  func.func @transform_6(%arg0: i32) -> i32 {
    %c0_i32 = arith.constant 0 : i32
    %c0_i32_0 = arith.constant 0 : i32
    return %c0_i32 : i32
  }
  func.func @transform_7(%arg0: i32) -> (i32, i32) {
    %c0_i32 = arith.constant 0 : i32
    %c0_i32_0 = arith.constant 0 : i32
    return %c0_i32, %arg0 : i32, i32
  }
}

</mosaic_0001>

<llo_original>
// kernel: tpu_custom_call.1
$region0: #{tpu_custom_call.1}
  #allocation0 [shape = 'u32[]', space=smem, size = 0x4, offset = 0x4, fixed_abs, tag = 'smem constant byte address 0x4 - core index']
  #allocation1 [shape = 'u32[144,128]{1,0:T(1,128)}', space=vmem, size = 0x12000, scoped, tag = 'internal scratch']
  %s0 = inlined_call_operand.hbm [shape: f32[5,5,128], index: 0, kind: input, shape index: {}]
  %s1 = inlined_call_operand.vmem [shape: f32[27], index: 1, kind: input, shape index: {}]
  %s2 = inlined_call_operand.hbm [shape: f32[3], index: 2, kind: input, shape index: {}]
  %s3 = inlined_call_operand.vmem [shape: f32[135], index: 3, kind: input, shape index: {}]
  %s4 = inlined_call_operand.vmem [shape: f32[5], index: 4, kind: input, shape index: {}]
  %s5 = inlined_call_operand.vmem [shape: f32[225], index: 5, kind: input, shape index: {}]
  %s6 = inlined_call_operand.vmem [shape: f32[5], index: 6, kind: input, shape index: {}]
  %s7 = inlined_call_operand.hbm [shape: f32[5,128], index: 7, kind: output, shape index: {}]
  %s8 = sld [smem:[#allocation0]]
  $region66: #{tpu_custom_call.1} parent=0
    _
  %s10 = ssub.s32 1, %s8
  %s11 = scalar_select 0, %s10, %s8
  $region1: #{tpu_custom_call.1} parent=0
    #allocation2 [shape = 'u8[20480]{0}', space=vmem, size = 0x5000, scoped, tag = 'input window, operand 0, single buffered']
    #allocation3 [shape = 's32[1]{0}', space=sflag, size = 0x4, scoped, tag = 'scoped memory for tpu_custom_call.1']
    #allocation4 [shape = 's32[1]{0}', space=sflag, size = 0x4, scoped, tag = 'scoped memory for tpu_custom_call.1']
    #allocation5 [shape = 's32[1]{0}', space=sflag, size = 0x4, scoped, tag = 'scoped memory for tpu_custom_call.1']
    #allocation6 [shape = 's32[1]{0}', space=sflag, size = 0x4, scoped, tag = 'scoped memory for tpu_custom_call.1']
    #allocation7 [shape = 'u8[512]{0}', space=smem, size = 0x200, scoped, tag = 'input window, operand 1, single buffered']
    #allocation8 [shape = 'u8[512]{0}', space=smem, size = 0x200, scoped, tag = 'input window, operand 2, single buffered']
    #allocation9 [shape = 'u8[1024]{0}', space=smem, size = 0x400, scoped, tag = 'input window, operand 3, single buffered']
    #allocation10 [shape = 's32[1]{0}', space=sflag, size = 0x4, scoped, tag = 'scoped memory for tpu_custom_call.1']
    #allocation11 [shape = 'u8[512]{0}', space=smem, size = 0x200, scoped, tag = 'input window, operand 4, single buffered']
    #allocation12 [shape = 'u8[1024]{0}', space=smem, size = 0x400, scoped, tag = 'input window, operand 5, single buffered']
    #allocation13 [shape = 's32[1]{0}', space=sflag, size = 0x4, scoped, tag = 'scoped memory for tpu_custom_call.1']
    #allocation14 [shape = 'u8[512]{0}', space=smem, size = 0x200, scoped, tag = 'input window, operand 6, single buffered']
    #allocation15 [shape = 'u8[4096]{0}', space=vmem, size = 0x1000, scoped, tag = 'output window, operand 0, single buffered']
    %12 = vsyncpa [#allocation3], 0
    %13 = vsyncpa [#allocation6], 0
    %14 = vsyncpa [#allocation5], 0
    %15 = vsyncpa [#allocation10], 0
    %16 = vsyncpa [#allocation13], 0
    %17 = vsyncpa [#allocation4], 0
    // Predicated region
    $region2: #{tpu_custom_call.1} parent=1 // pred_check
      _
    $region3: #{tpu_custom_call.1} parent=1 // pred_check_branch
      %19 = sbr.rel (0) target = $region5
    $region4: #{tpu_custom_call.1} parent=1 // pred_region
      %s21 = ssub.s32 640, 640
      %22 = vsyncadd [#allocation3], %s21
      %s23 = sshll.u32 [#allocation2], 4
      %s24 = int_to_ptr.vmem [resolvable:$true] %s23
      %29 = dma.hbm_to_vmem [thread:$0]  %s0, 640, %s24, [#allocation3], 128, 128, 8
    $region5: #{tpu_custom_call.1} parent=1 // pred_fallthru
      _
    // Predicated region
    $region6: #{tpu_custom_call.1} parent=1 // pred_check
      _
    $region7: #{tpu_custom_call.1} parent=1 // pred_check_branch
      %31 = sbr.rel (0) target = $region9
    $region8: #{tpu_custom_call.1} parent=1 // pred_region
      %s33 = ssub.s32 16, 16
      %34 = vsyncadd [#allocation6], %s33
      %s36 = sshll.u32 %s1, 4
      %s37 = int_to_ptr.vmem [resolvable:$true] %s36
      %39 = dma.vmem_to_smem %s37, 16, [#allocation7], [#allocation6]
    $region9: #{tpu_custom_call.1} parent=1 // pred_fallthru
      _
    // Predicated region
    $region10: #{tpu_custom_call.1} parent=1 // pred_check
      _
    $region11: #{tpu_custom_call.1} parent=1 // pred_check_branch
      %41 = sbr.rel (0) target = $region13
    $region12: #{tpu_custom_call.1} parent=1 // pred_region
      %s43 = ssub.s32 16, 16
      %44 = vsyncadd [#allocation5], %s43
      %47 = dma.hbm_to_smem %s2, 16, [#allocation8], [#allocation5]
    $region13: #{tpu_custom_call.1} parent=1 // pred_fallthru
      _
    // Predicated region
    $region14: #{tpu_custom_call.1} parent=1 // pred_check
      _
    $region15: #{tpu_custom_call.1} parent=1 // pred_check_branch
      %49 = sbr.rel (0) target = $region17
    $region16: #{tpu_custom_call.1} parent=1 // pred_region
      %s51 = ssub.s32 32, 32
      %52 = vsyncadd [#allocation10], %s51
      %s54 = sshll.u32 %s3, 4
      %s55 = int_to_ptr.vmem [resolvable:$true] %s54
      %57 = dma.vmem_to_smem %s55, 32, [#allocation9], [#allocation10]
    $region17: #{tpu_custom_call.1} parent=1 // pred_fallthru
      _
    // Predicated region
    $region18: #{tpu_custom_call.1} parent=1 // pred_check
      _
    $region19: #{tpu_custom_call.1} parent=1 // pred_check_branch
      %59 = sbr.rel (0) target = $region21
    $region20: #{tpu_custom_call.1} parent=1 // pred_region
      %s61 = ssub.s32 16, 16
      %62 = vsyncadd [#allocation10], %s61
      %s64 = sshll.u32 %s4, 4
      %s65 = int_to_ptr.vmem [resolvable:$true] %s64
      %67 = dma.vmem_to_smem %s65, 16, [#allocation11], [#allocation10]
    $region21: #{tpu_custom_call.1} parent=1 // pred_fallthru
      _
    // Predicated region
    $region22: #{tpu_custom_call.1} parent=1 // pred_check
      _
    $region23: #{tpu_custom_call.1} parent=1 // pred_check_branch
      %69 = sbr.rel (0) target = $region25
    $region24: #{tpu_custom_call.1} parent=1 // pred_region
      %s71 = ssub.s32 32, 32
      %72 = vsyncadd [#allocation13], %s71
      %s74 = sshll.u32 %s5, 4
      %s75 = int_to_ptr.vmem [resolvable:$true] %s74
      %77 = dma.vmem_to_smem %s75, 32, [#allocation12], [#allocation13]
    $region25: #{tpu_custom_call.1} parent=1 // pred_fallthru
      _
    // Predicated region
    $region26: #{tpu_custom_call.1} parent=1 // pred_check
      _
    $region27: #{tpu_custom_call.1} parent=1 // pred_check_branch
      %79 = sbr.rel (0) target = $region29
    $region28: #{tpu_custom_call.1} parent=1 // pred_region
      %s81 = ssub.s32 16, 16
      %82 = vsyncadd [#allocation13], %s81
      %s84 = sshll.u32 %s6, 4
      %s85 = int_to_ptr.vmem [resolvable:$true] %s84
      %87 = dma.vmem_to_smem %s85, 16, [#allocation14], [#allocation13]
    $region29: #{tpu_custom_call.1} parent=1 // pred_fallthru
      _
    // Predicated region
    $region30: #{tpu_custom_call.1} parent=1 // pred_check
      _
    $region31: #{tpu_custom_call.1} parent=1 // pred_check_branch
      %89 = sbr.rel (0) target = $region33
    $region32: #{tpu_custom_call.1} parent=1 // pred_region
      %90 = dma.done [#allocation3], 640
    $region33: #{tpu_custom_call.1} parent=1 // pred_fallthru
      _
    // Predicated region
    $region34: #{tpu_custom_call.1} parent=1 // pred_check
      _
    $region35: #{tpu_custom_call.1} parent=1 // pred_check_branch
      %92 = sbr.rel (0) target = $region37
    $region36: #{tpu_custom_call.1} parent=1 // pred_region
      %93 = dma.done [#allocation6], 16
    $region37: #{tpu_custom_call.1} parent=1 // pred_fallthru
      _
    // Predicated region
    $region38: #{tpu_custom_call.1} parent=1 // pred_check
      _
    $region39: #{tpu_custom_call.1} parent=1 // pred_check_branch
      %95 = sbr.rel (0) target = $region41
    $region40: #{tpu_custom_call.1} parent=1 // pred_region
      %96 = dma.done [#allocation5], 16
    $region41: #{tpu_custom_call.1} parent=1 // pred_fallthru
      _
    // Predicated region
    $region42: #{tpu_custom_call.1} parent=1 // pred_check
      _
    $region43: #{tpu_custom_call.1} parent=1 // pred_check_branch
      %98 = sbr.rel (0) target = $region45
    $region44: #{tpu_custom_call.1} parent=1 // pred_region
      %99 = dma.done [#allocation10], 32
    $region45: #{tpu_custom_call.1} parent=1 // pred_fallthru
      _
    // Predicated region
    $region46: #{tpu_custom_call.1} parent=1 // pred_check
      _
    $region47: #{tpu_custom_call.1} parent=1 // pred_check_branch
      %101 = sbr.rel (0) target = $region49
    $region48: #{tpu_custom_call.1} parent=1 // pred_region
      %102 = dma.done [#allocation10], 16
    $region49: #{tpu_custom_call.1} parent=1 // pred_fallthru
      _
    // Predicated region
    $region50: #{tpu_custom_call.1} parent=1 // pred_check
      _
    $region51: #{tpu_custom_call.1} parent=1 // pred_check_branch
      %104 = sbr.rel (0) target = $region53
    $region52: #{tpu_custom_call.1} parent=1 // pred_region
      %105 = dma.done [#allocation13], 32
    $region53: #{tpu_custom_call.1} parent=1 // pred_fallthru
      _
    // Predicated region
    $region54: #{tpu_custom_call.1} parent=1 // pred_check
      _
    $region55: #{tpu_custom_call.1} parent=1 // pred_check_branch
      %107 = sbr.rel (0) target = $region57
    $region56: #{tpu_custom_call.1} parent=1 // pred_region
      %108 = dma.done [#allocation13], 16
    $region57: #{tpu_custom_call.1} parent=1 // pred_fallthru
      _
    %109 = sfence
    %v110 = vld [vmem:[#allocation2] sm:$0x1f]
    %v111 = vld [vmem:[#allocation2 + $0x8] sm:$0x1f]
    %v112 = vld [vmem:[#allocation2 + $0x10] sm:$0x1f]
    %v113 = vld [vmem:[#allocation2 + $0x18] sm:$0x1f]
    %v114 = vld [vmem:[#allocation2 + $0x20] sm:$0x1f]
    %v121 = vrot.slane 0.0, 7
    %v122 = vrot.slane %v110, 7
    %v123 = vrot.slane %v111, 7
    %v124 = vrot.slane %v112, 7
    %v125 = vrot.slane %v113, 7
    %v126 = vrot.slane %v114, 7
    %vm133 = vcmask 1040384
    %v134 = vsel %vm133, 0.0, %v121
    %v135 = vsel %vm133, 0.0, %v122
    %v136 = vsel %vm133, 0.0, %v123
    %v137 = vsel %vm133, 0.0, %v124
    %v138 = vsel %vm133, 0.0, %v125
    %v139 = vsel %vm133, 0.0, %v126
    %vm140 = vcmask 1045504
    %v141 = vsel %vm140, %v134, 0.0
    %v142 = vsel %vm140, %v135, 0.0
    %v143 = vsel %vm140, %v136, 0.0
    %v144 = vsel %vm140, %v137, 0.0
    %v145 = vsel %vm140, %v138, 0.0
    %v146 = vsel %vm140, %v139, 0.0
    %s147 = sld [smem:[#allocation7]]
    %v148 = vstv %s147
    %v149 = vmul.f32 %v141, %v148
    %v150 = vmul.f32 %v142, %v148
    %v151 = vmul.f32 %v143, %v148
    %v152 = vmul.f32 %v144, %v148
    %v153 = vmul.f32 %v145, %v148
    %s154 = sld [smem:[#allocation8]]
    %v155 = vstv %s154
    %v156 = vadd.f32 %v149, %v155
    %v157 = vadd.f32 %v150, %v155
    %v158 = vadd.f32 %v151, %v155
    %v159 = vadd.f32 %v152, %v155
    %v160 = vadd.f32 %v153, %v155
    %s161 = sld [smem:[#allocation7 + $0x9]]
    %v162 = vstv %s161
    %v163 = vmul.f32 %v141, %v162
    %v164 = vmul.f32 %v142, %v162
    %v165 = vmul.f32 %v143, %v162
    %v166 = vmul.f32 %v144, %v162
    %v167 = vmul.f32 %v145, %v162
    %s168 = sld [smem:[#allocation8 + $0x1]]
    %v169 = vstv %s168
    %v170 = vadd.f32 %v163, %v169
    %v171 = vadd.f32 %v164, %v169
    %v172 = vadd.f32 %v165, %v169
    %v173 = vadd.f32 %v166, %v169
    %v174 = vadd.f32 %v167, %v169
    %s175 = sld [smem:[#allocation7 + $0x12]]
    %v176 = vstv %s175
    %v177 = vmul.f32 %v141, %v176
    %v178 = vmul.f32 %v142, %v176
    %v179 = vmul.f32 %v143, %v176
    %v180 = vmul.f32 %v144, %v176
    %v181 = vmul.f32 %v145, %v176
    %s182 = sld [smem:[#allocation8 + $0x2]]
    %v183 = vstv %s182
    %v184 = vadd.f32 %v177, %v183
    %v185 = vadd.f32 %v178, %v183
    %v186 = vadd.f32 %v179, %v183
    %v187 = vadd.f32 %v180, %v183
    %v188 = vadd.f32 %v181, %v183
    %s189 = sld [smem:[#allocation7 + $0x1]]
    %v190 = vstv %s189
    %v191 = vmul.f32 %v141, %v190
    %v192 = vmul.f32 %v142, %v190
    %v193 = vmul.f32 %v143, %v190
    %v194 = vmul.f32 %v144, %v190
    %v195 = vmul.f32 %v145, %v190
    %v201 = vrot.slane %v191, 1
    %v202 = vrot.slane %v192, 1
    %v203 = vrot.slane %v193, 1
    %v204 = vrot.slane %v194, 1
    %v205 = vrot.slane %v195, 1
    %v211 = vadd.f32 %v156, %v201
    %v212 = vadd.f32 %v157, %v202
    %v213 = vadd.f32 %v158, %v203
    %v214 = vadd.f32 %v159, %v204
    %v215 = vadd.f32 %v160, %v205
    %s216 = sld [smem:[#allocation7 + $0xa]]
    %v217 = vstv %s216
    %v218 = vmul.f32 %v141, %v217
    %v219 = vmul.f32 %v142, %v217
    %v220 = vmul.f32 %v143, %v217
    %v221 = vmul.f32 %v144, %v217
    %v222 = vmul.f32 %v145, %v217
    %v228 = vrot.slane %v218, 1
    %v229 = vrot.slane %v219, 1
    %v230 = vrot.slane %v220, 1
    %v231 = vrot.slane %v221, 1
    %v232 = vrot.slane %v222, 1
    %v238 = vadd.f32 %v170, %v228
    %v239 = vadd.f32 %v171, %v229
    %v240 = vadd.f32 %v172, %v230
    %v241 = vadd.f32 %v173, %v231
    %v242 = vadd.f32 %v174, %v232
    %s243 = sld [smem:[#allocation7 + $0x13]]
    %v244 = vstv %s243
    %v245 = vmul.f32 %v141, %v244
    %v246 = vmul.f32 %v142, %v244
    %v247 = vmul.f32 %v143, %v244
    %v248 = vmul.f32 %v144, %v244
    %v249 = vmul.f32 %v145, %v244
    %v255 = vrot.slane %v245, 1
    %v256 = vrot.slane %v246, 1
    %v257 = vrot.slane %v247, 1
    %v258 = vrot.slane %v248, 1
    %v259 = vrot.slane %v249, 1
    %v265 = vadd.f32 %v184, %v255
    %v266 = vadd.f32 %v185, %v256
    %v267 = vadd.f32 %v186, %v257
    %v268 = vadd.f32 %v187, %v258
    %v269 = vadd.f32 %v188, %v259
    %s270 = sld [smem:[#allocation7 + $0x2]]
    %v271 = vstv %s270
    %v272 = vmul.f32 %v141, %v271
    %v273 = vmul.f32 %v142, %v271
    %v274 = vmul.f32 %v143, %v271
    %v275 = vmul.f32 %v144, %v271
    %v276 = vmul.f32 %v145, %v271
    %v282 = vrot.slane %v272, 2
    %v283 = vrot.slane %v273, 2
    %v284 = vrot.slane %v274, 2
    %v285 = vrot.slane %v275, 2
    %v286 = vrot.slane %v276, 2
    %v292 = vadd.f32 %v211, %v282
    %v293 = vadd.f32 %v212, %v283
    %v294 = vadd.f32 %v213, %v284
    %v295 = vadd.f32 %v214, %v285
    %v296 = vadd.f32 %v215, %v286
    %s297 = sld [smem:[#allocation7 + $0xb]]
    %v298 = vstv %s297
    %v299 = vmul.f32 %v141, %v298
    %v300 = vmul.f32 %v142, %v298
    %v301 = vmul.f32 %v143, %v298
    %v302 = vmul.f32 %v144, %v298
    %v303 = vmul.f32 %v145, %v298
    %v309 = vrot.slane %v299, 2
    %v310 = vrot.slane %v300, 2
    %v311 = vrot.slane %v301, 2
    %v312 = vrot.slane %v302, 2
    %v313 = vrot.slane %v303, 2
    %v319 = vadd.f32 %v238, %v309
    %v320 = vadd.f32 %v239, %v310
    %v321 = vadd.f32 %v240, %v311
    %v322 = vadd.f32 %v241, %v312
    %v323 = vadd.f32 %v242, %v313
    %s324 = sld [smem:[#allocation7 + $0x14]]
    %v325 = vstv %s324
    %v326 = vmul.f32 %v141, %v325
    %v327 = vmul.f32 %v142, %v325
    %v328 = vmul.f32 %v143, %v325
    %v329 = vmul.f32 %v144, %v325
    %v330 = vmul.f32 %v145, %v325
    %v336 = vrot.slane %v326, 2
    %v337 = vrot.slane %v327, 2
    %v338 = vrot.slane %v328, 2
    %v339 = vrot.slane %v329, 2
    %v340 = vrot.slane %v330, 2
    %v346 = vadd.f32 %v265, %v336
    %v347 = vadd.f32 %v266, %v337
    %v348 = vadd.f32 %v267, %v338
    %v349 = vadd.f32 %v268, %v339
    %v350 = vadd.f32 %v269, %v340
    %s351 = sld [smem:[#allocation7 + $0x3]]
    %v352 = vstv %s351
    %v353 = vmul.f32 %v142, %v352
    %v354 = vmul.f32 %v143, %v352
    %v355 = vmul.f32 %v144, %v352
    %v356 = vmul.f32 %v145, %v352
    %v357 = vmul.f32 %v146, %v352
    %v358 = vadd.f32 %v292, %v353
    %v359 = vadd.f32 %v293, %v354
    %v360 = vadd.f32 %v294, %v355
    %v361 = vadd.f32 %v295, %v356
    %v362 = vadd.f32 %v296, %v357
    %s363 = sld [smem:[#allocation7 + $0xc]]
    %v364 = vstv %s363
    %v365 = vmul.f32 %v142, %v364
    %v366 = vmul.f32 %v143, %v364
    %v367 = vmul.f32 %v144, %v364
    %v368 = vmul.f32 %v145, %v364
    %v369 = vmul.f32 %v146, %v364
    %v370 = vadd.f32 %v319, %v365
    %v371 = vadd.f32 %v320, %v366
    %v372 = vadd.f32 %v321, %v367
    %v373 = vadd.f32 %v322, %v368
    %v374 = vadd.f32 %v323, %v369
    %s375 = sld [smem:[#allocation7 + $0x15]]
    %v376 = vstv %s375
    %v377 = vmul.f32 %v142, %v376
    %v378 = vmul.f32 %v143, %v376
    %v379 = vmul.f32 %v144, %v376
    %v380 = vmul.f32 %v145, %v376
    %v381 = vmul.f32 %v146, %v376
    %v382 = vadd.f32 %v346, %v377
    %v383 = vadd.f32 %v347, %v378
    %v384 = vadd.f32 %v348, %v379
    %v385 = vadd.f32 %v349, %v380
    %v386 = vadd.f32 %v350, %v381
    %s387 = sld [smem:[#allocation7 + $0x4]]
    %v388 = vstv %s387
    %v389 = vmul.f32 %v142, %v388
    %v390 = vmul.f32 %v143, %v388
    %v391 = vmul.f32 %v144, %v388
    %v392 = vmul.f32 %v145, %v388
    %v393 = vmul.f32 %v146, %v388
    %v399 = vrot.slane %v389, 1
    %v400 = vrot.slane %v390, 1
    %v401 = vrot.slane %v391, 1
    %v402 = vrot.slane %v392, 1
    %v403 = vrot.slane %v393, 1
    %v409 = vadd.f32 %v358, %v399
    %v410 = vadd.f32 %v359, %v400
    %v411 = vadd.f32 %v360, %v401
    %v412 = vadd.f32 %v361, %v402
    %v413 = vadd.f32 %v362, %v403
    %s414 = sld [smem:[#allocation7 + $0xd]]
    %v415 = vstv %s414
    %v416 = vmul.f32 %v142, %v415
    %v417 = vmul.f32 %v143, %v415
    %v418 = vmul.f32 %v144, %v415
    %v419 = vmul.f32 %v145, %v415
    %v420 = vmul.f32 %v146, %v415
    %v426 = vrot.slane %v416, 1
    %v427 = vrot.slane %v417, 1
    %v428 = vrot.slane %v418, 1
    %v429 = vrot.slane %v419, 1
    %v430 = vrot.slane %v420, 1
    %v436 = vadd.f32 %v370, %v426
    %v437 = vadd.f32 %v371, %v427
    %v438 = vadd.f32 %v372, %v428
    %v439 = vadd.f32 %v373, %v429
    %v440 = vadd.f32 %v374, %v430
    %s441 = sld [smem:[#allocation7 + $0x16]]
    %v442 = vstv %s441
    %v443 = vmul.f32 %v142, %v442
    %v444 = vmul.f32 %v143, %v442
    %v445 = vmul.f32 %v144, %v442
    %v446 = vmul.f32 %v145, %v442
    %v447 = vmul.f32 %v146, %v442
    %v453 = vrot.slane %v443, 1
    %v454 = vrot.slane %v444, 1
    %v455 = vrot.slane %v445, 1
    %v456 = vrot.slane %v446, 1
    %v457 = vrot.slane %v447, 1
    %v463 = vadd.f32 %v382, %v453
    %v464 = vadd.f32 %v383, %v454
    %v465 = vadd.f32 %v384, %v455
    %v466 = vadd.f32 %v385, %v456
    %v467 = vadd.f32 %v386, %v457
    %s468 = sld [smem:[#allocation7 + $0x5]]
    %v469 = vstv %s468
    %v470 = vmul.f32 %v142, %v469
    %v471 = vmul.f32 %v143, %v469
    %v472 = vmul.f32 %v144, %v469
    %v473 = vmul.f32 %v145, %v469
    %v474 = vmul.f32 %v146, %v469
    %v480 = vrot.slane %v470, 2
    %v481 = vrot.slane %v471, 2
    %v482 = vrot.slane %v472, 2
    %v483 = vrot.slane %v473, 2
    %v484 = vrot.slane %v474, 2
    %v490 = vadd.f32 %v409, %v480
    %v491 = vadd.f32 %v410, %v481
    %v492 = vadd.f32 %v411, %v482
    %v493 = vadd.f32 %v412, %v483
    %v494 = vadd.f32 %v413, %v484
    %s495 = sld [smem:[#allocation7 + $0xe]]
    %v496 = vstv %s495
    %v497 = vmul.f32 %v142, %v496
    %v498 = vmul.f32 %v143, %v496
    %v499 = vmul.f32 %v144, %v496
    %v500 = vmul.f32 %v145, %v496
    %v501 = vmul.f32 %v146, %v496
    %v507 = vrot.slane %v497, 2
    %v508 = vrot.slane %v498, 2
    %v509 = vrot.slane %v499, 2
    %v510 = vrot.slane %v500, 2
    %v511 = vrot.slane %v501, 2
    %v517 = vadd.f32 %v436, %v507
    %v518 = vadd.f32 %v437, %v508
    %v519 = vadd.f32 %v438, %v509
    %v520 = vadd.f32 %v439, %v510
    %v521 = vadd.f32 %v440, %v511
    %s522 = sld [smem:[#allocation7 + $0x17]]
    %v523 = vstv %s522
    %v524 = vmul.f32 %v142, %v523
    %v525 = vmul.f32 %v143, %v523
    %v526 = vmul.f32 %v144, %v523
    %v527 = vmul.f32 %v145, %v523
    %v528 = vmul.f32 %v146, %v523
    %v534 = vrot.slane %v524, 2
    %v535 = vrot.slane %v525, 2
    %v536 = vrot.slane %v526, 2
    %v537 = vrot.slane %v527, 2
    %v538 = vrot.slane %v528, 2
    %v544 = vadd.f32 %v463, %v534
    %v545 = vadd.f32 %v464, %v535
    %v546 = vadd.f32 %v465, %v536
    %v547 = vadd.f32 %v466, %v537
    %v548 = vadd.f32 %v467, %v538
    %s549 = sld [smem:[#allocation7 + $0x6]]
    %v550 = vstv %s549
    %v551 = vmul.f32 %v143, %v550
    %v552 = vmul.f32 %v144, %v550
    %v553 = vmul.f32 %v145, %v550
    %v554 = vmul.f32 %v146, %v550
    %v555 = vmul.f32 %v141, %v550
    %v556 = vadd.f32 %v490, %v551
    %v557 = vadd.f32 %v491, %v552
    %v558 = vadd.f32 %v492, %v553
    %v559 = vadd.f32 %v493, %v554
    %v560 = vadd.f32 %v494, %v555
    %s561 = sld [smem:[#allocation7 + $0xf]]
    %v562 = vstv %s561
    %v563 = vmul.f32 %v143, %v562
    %v564 = vmul.f32 %v144, %v562
    %v565 = vmul.f32 %v145, %v562
    %v566 = vmul.f32 %v146, %v562
    %v567 = vmul.f32 %v141, %v562
    %v568 = vadd.f32 %v517, %v563
    %v569 = vadd.f32 %v518, %v564
    %v570 = vadd.f32 %v519, %v565
    %v571 = vadd.f32 %v520, %v566
    %v572 = vadd.f32 %v521, %v567
    %s573 = sld [smem:[#allocation7 + $0x18]]
    %v574 = vstv %s573
    %v575 = vmul.f32 %v143, %v574
    %v576 = vmul.f32 %v144, %v574
    %v577 = vmul.f32 %v145, %v574
    %v578 = vmul.f32 %v146, %v574
    %v579 = vmul.f32 %v141, %v574
    %v580 = vadd.f32 %v544, %v575
    %v581 = vadd.f32 %v545, %v576
    %v582 = vadd.f32 %v546, %v577
    %v583 = vadd.f32 %v547, %v578
    %v584 = vadd.f32 %v548, %v579
    %s585 = sld [smem:[#allocation7 + $0x7]]
    %v586 = vstv %s585
    %v587 = vmul.f32 %v143, %v586
    %v588 = vmul.f32 %v144, %v586
    %v589 = vmul.f32 %v145, %v586
    %v590 = vmul.f32 %v146, %v586
    %v591 = vmul.f32 %v141, %v586
    %v597 = vrot.slane %v587, 1
    %v598 = vrot.slane %v588, 1
    %v599 = vrot.slane %v589, 1
    %v600 = vrot.slane %v590, 1
    %v601 = vrot.slane %v591, 1
    %v607 = vadd.f32 %v556, %v597
    %v608 = vadd.f32 %v557, %v598
    %v609 = vadd.f32 %v558, %v599
    %v610 = vadd.f32 %v559, %v600
    %v611 = vadd.f32 %v560, %v601
    %s612 = sld [smem:[#allocation7 + $0x10]]
    %v613 = vstv %s612
    %v614 = vmul.f32 %v143, %v613
    %v615 = vmul.f32 %v144, %v613
    %v616 = vmul.f32 %v145, %v613
    %v617 = vmul.f32 %v146, %v613
    %v618 = vmul.f32 %v141, %v613
    %v624 = vrot.slane %v614, 1
    %v625 = vrot.slane %v615, 1
    %v626 = vrot.slane %v616, 1
    %v627 = vrot.slane %v617, 1
    %v628 = vrot.slane %v618, 1
    %v634 = vadd.f32 %v568, %v624
    %v635 = vadd.f32 %v569, %v625
    %v636 = vadd.f32 %v570, %v626
    %v637 = vadd.f32 %v571, %v627
    %v638 = vadd.f32 %v572, %v628
    %s639 = sld [smem:[#allocation7 + $0x19]]
    %v640 = vstv %s639
    %v641 = vmul.f32 %v143, %v640
    %v642 = vmul.f32 %v144, %v640
    %v643 = vmul.f32 %v145, %v640
    %v644 = vmul.f32 %v146, %v640
    %v645 = vmul.f32 %v141, %v640
    %v651 = vrot.slane %v641, 1
    %v652 = vrot.slane %v642, 1
    %v653 = vrot.slane %v643, 1
    %v654 = vrot.slane %v644, 1
    %v655 = vrot.slane %v645, 1
    %v661 = vadd.f32 %v580, %v651
    %v662 = vadd.f32 %v581, %v652
    %v663 = vadd.f32 %v582, %v653
    %v664 = vadd.f32 %v583, %v654
    %v665 = vadd.f32 %v584, %v655
    %s666 = sld [smem:[#allocation7 + $0x8]]
    %v667 = vstv %s666
    %v668 = vmul.f32 %v143, %v667
    %v669 = vmul.f32 %v144, %v667
    %v670 = vmul.f32 %v145, %v667
    %v671 = vmul.f32 %v146, %v667
    %v672 = vmul.f32 %v141, %v667
    %v678 = vrot.slane %v668, 2
    %v679 = vrot.slane %v669, 2
    %v680 = vrot.slane %v670, 2
    %v681 = vrot.slane %v671, 2
    %v682 = vrot.slane %v672, 2
    %v688 = vadd.f32 %v607, %v678
    %v689 = vadd.f32 %v608, %v679
    %v690 = vadd.f32 %v609, %v680
    %v691 = vadd.f32 %v610, %v681
    %v692 = vadd.f32 %v611, %v682
    %s693 = sld [smem:[#allocation7 + $0x11]]
    %v694 = vstv %s693
    %v695 = vmul.f32 %v143, %v694
    %v696 = vmul.f32 %v144, %v694
    %v697 = vmul.f32 %v145, %v694
    %v698 = vmul.f32 %v146, %v694
    %v699 = vmul.f32 %v141, %v694
    %v705 = vrot.slane %v695, 2
    %v706 = vrot.slane %v696, 2
    %v707 = vrot.slane %v697, 2
    %v708 = vrot.slane %v698, 2
    %v709 = vrot.slane %v699, 2
    %v715 = vadd.f32 %v634, %v705
    %v716 = vadd.f32 %v635, %v706
    %v717 = vadd.f32 %v636, %v707
    %v718 = vadd.f32 %v637, %v708
    %v719 = vadd.f32 %v638, %v709
    %s720 = sld [smem:[#allocation7 + $0x1a]]
    %v721 = vstv %s720
    %v722 = vmul.f32 %v143, %v721
    %v723 = vmul.f32 %v144, %v721
    %v724 = vmul.f32 %v145, %v721
    %v725 = vmul.f32 %v146, %v721
    %v726 = vmul.f32 %v141, %v721
    %v732 = vrot.slane %v722, 2
    %v733 = vrot.slane %v723, 2
    %v734 = vrot.slane %v724, 2
    %v735 = vrot.slane %v725, 2
    %v736 = vrot.slane %v726, 2
    %v742 = vadd.f32 %v661, %v732
    %v743 = vadd.f32 %v662, %v733
    %v744 = vadd.f32 %v663, %v734
    %v745 = vadd.f32 %v664, %v735
    %v746 = vadd.f32 %v665, %v736
    %v747 = vmax.f32 %v688, 0.0
    %v748 = vmax.f32 %v689, 0.0
    %v749 = vmax.f32 %v690, 0.0
    %v750 = vmax.f32 %v691, 0.0
    %v751 = vmax.f32 %v692, 0.0
    %v752 = vmax.f32 %v715, 0.0
    %v753 = vmax.f32 %v716, 0.0
    %v754 = vmax.f32 %v717, 0.0
    %v755 = vmax.f32 %v718, 0.0
    %v756 = vmax.f32 %v719, 0.0
    %v757 = vmax.f32 %v742, 0.0
    %v758 = vmax.f32 %v743, 0.0
    %v759 = vmax.f32 %v744, 0.0
    %v760 = vmax.f32 %v745, 0.0
    %v761 = vmax.f32 %v746, 0.0
    %s762 = sld [smem:[#allocation9]]
    %v763 = vstv %s762
    %v764 = vmul.f32 %v747, %v763
    %v765 = vmul.f32 %v748, %v763
    %v766 = vmul.f32 %v749, %v763
    %s767 = sld [smem:[#allocation11]]
    %v768 = vstv %s767
    %v769 = vadd.f32 %v764, %v768
    %v770 = vadd.f32 %v765, %v768
    %v771 = vadd.f32 %v766, %v768
    %s772 = sld [smem:[#allocation9 + $0x1b]]
    %v773 = vstv %s772
    %v774 = vmul.f32 %v747, %v773
    %v775 = vmul.f32 %v748, %v773
    %v776 = vmul.f32 %v749, %v773
    %s777 = sld [smem:[#allocation11 + $0x1]]
    %v778 = vstv %s777
    %v779 = vadd.f32 %v774, %v778
    %v780 = vadd.f32 %v775, %v778
    %v781 = vadd.f32 %v776, %v778
    %s782 = sld [smem:[#allocation9 + $0x36]]
    %v783 = vstv %s782
    %v784 = vmul.f32 %v747, %v783
    %v785 = vmul.f32 %v748, %v783
    %v786 = vmul.f32 %v749, %v783
    %s787 = sld [smem:[#allocation11 + $0x2]]
    %v788 = vstv %s787
    %v789 = vadd.f32 %v784, %v788
    %v790 = vadd.f32 %v785, %v788
    %v791 = vadd.f32 %v786, %v788
    %s792 = sld [smem:[#allocation9 + $0x51]]
    %v793 = vstv %s792
    %v794 = vmul.f32 %v747, %v793
    %v795 = vmul.f32 %v748, %v793
    %v796 = vmul.f32 %v749, %v793
    %s797 = sld [smem:[#allocation11 + $0x3]]
    %v798 = vstv %s797
    %v799 = vadd.f32 %v794, %v798
    %v800 = vadd.f32 %v795, %v798
    %v801 = vadd.f32 %v796, %v798
    %s802 = sld [smem:[#allocation9 + $0x6c]]
    %v803 = vstv %s802
    %v804 = vmul.f32 %v747, %v803
    %v805 = vmul.f32 %v748, %v803
    %v806 = vmul.f32 %v749, %v803
    %s807 = sld [smem:[#allocation11 + $0x4]]
    %v808 = vstv %s807
    %v809 = vadd.f32 %v804, %v808
    %v810 = vadd.f32 %v805, %v808
    %v811 = vadd.f32 %v806, %v808
    %s812 = sld [smem:[#allocation9 + $0x1]]
    %v813 = vstv %s812
    %v814 = vmul.f32 %v747, %v813
    %v815 = vmul.f32 %v748, %v813
    %v816 = vmul.f32 %v749, %v813
    %v820 = vrot.slane %v814, 1
    %v821 = vrot.slane %v815, 1
    %v822 = vrot.slane %v816, 1
    %v826 = vadd.f32 %v769, %v820
    %v827 = vadd.f32 %v770, %v821
    %v828 = vadd.f32 %v771, %v822
    %s829 = sld [smem:[#allocation9 + $0x1c]]
    %v830 = vstv %s829
    %v831 = vmul.f32 %v747, %v830
    %v832 = vmul.f32 %v748, %v830
    %v833 = vmul.f32 %v749, %v830
    %v837 = vrot.slane %v831, 1
    %v838 = vrot.slane %v832, 1
    %v839 = vrot.slane %v833, 1
    %v843 = vadd.f32 %v779, %v837
    %v844 = vadd.f32 %v780, %v838
    %v845 = vadd.f32 %v781, %v839
    %s846 = sld [smem:[#allocation9 + $0x37]]
    %v847 = vstv %s846
    %v848 = vmul.f32 %v747, %v847
    %v849 = vmul.f32 %v748, %v847
    %v850 = vmul.f32 %v749, %v847
    %v854 = vrot.slane %v848, 1
    %v855 = vrot.slane %v849, 1
    %v856 = vrot.slane %v850, 1
    %v860 = vadd.f32 %v789, %v854
    %v861 = vadd.f32 %v790, %v855
    %v862 = vadd.f32 %v791, %v856
    %s863 = sld [smem:[#allocation9 + $0x52]]
    %v864 = vstv %s863
    %v865 = vmul.f32 %v747, %v864
    %v866 = vmul.f32 %v748, %v864
    %v867 = vmul.f32 %v749, %v864
    %v871 = vrot.slane %v865, 1
    %v872 = vrot.slane %v866, 1
    %v873 = vrot.slane %v867, 1
    %v877 = vadd.f32 %v799, %v871
    %v878 = vadd.f32 %v800, %v872
    %v879 = vadd.f32 %v801, %v873
    %s880 = sld [smem:[#allocation9 + $0x6d]]
    %v881 = vstv %s880
    %v882 = vmul.f32 %v747, %v881
    %v883 = vmul.f32 %v748, %v881
    %v884 = vmul.f32 %v749, %v881
    %v888 = vrot.slane %v882, 1
    %v889 = vrot.slane %v883, 1
    %v890 = vrot.slane %v884, 1
    %v894 = vadd.f32 %v809, %v888
    %v895 = vadd.f32 %v810, %v889
    %v896 = vadd.f32 %v811, %v890
    %s897 = sld [smem:[#allocation9 + $0x2]]
    %v898 = vstv %s897
    %v899 = vmul.f32 %v747, %v898
    %v900 = vmul.f32 %v748, %v898
    %v901 = vmul.f32 %v749, %v898
    %v905 = vrot.slane %v899, 2
    %v906 = vrot.slane %v900, 2
    %v907 = vrot.slane %v901, 2
    %v911 = vadd.f32 %v826, %v905
    %v912 = vadd.f32 %v827, %v906
    %v913 = vadd.f32 %v828, %v907
    %s914 = sld [smem:[#allocation9 + $0x1d]]
    %v915 = vstv %s914
    %v916 = vmul.f32 %v747, %v915
    %v917 = vmul.f32 %v748, %v915
    %v918 = vmul.f32 %v749, %v915
    %v922 = vrot.slane %v916, 2
    %v923 = vrot.slane %v917, 2
    %v924 = vrot.slane %v918, 2
    %v928 = vadd.f32 %v843, %v922
    %v929 = vadd.f32 %v844, %v923
    %v930 = vadd.f32 %v845, %v924
    %s931 = sld [smem:[#allocation9 + $0x38]]
    %v932 = vstv %s931
    %v933 = vmul.f32 %v747, %v932
    %v934 = vmul.f32 %v748, %v932
    %v935 = vmul.f32 %v749, %v932
    %v939 = vrot.slane %v933, 2
    %v940 = vrot.slane %v934, 2
    %v941 = vrot.slane %v935, 2
    %v945 = vadd.f32 %v860, %v939
    %v946 = vadd.f32 %v861, %v940
    %v947 = vadd.f32 %v862, %v941
    %s948 = sld [smem:[#allocation9 + $0x53]]
    %v949 = vstv %s948
    %v950 = vmul.f32 %v747, %v949
    %v951 = vmul.f32 %v748, %v949
    %v952 = vmul.f32 %v749, %v949
    %v956 = vrot.slane %v950, 2
    %v957 = vrot.slane %v951, 2
    %v958 = vrot.slane %v952, 2
    %v962 = vadd.f32 %v877, %v956
    %v963 = vadd.f32 %v878, %v957
    %v964 = vadd.f32 %v879, %v958
    %s965 = sld [smem:[#allocation9 + $0x6e]]
    %v966 = vstv %s965
    %v967 = vmul.f32 %v747, %v966
    %v968 = vmul.f32 %v748, %v966
    %v969 = vmul.f32 %v749, %v966
    %v973 = vrot.slane %v967, 2
    %v974 = vrot.slane %v968, 2
    %v975 = vrot.slane %v969, 2
    %v979 = vadd.f32 %v894, %v973
    %v980 = vadd.f32 %v895, %v974
    %v981 = vadd.f32 %v896, %v975
    %s982 = sld [smem:[#allocation9 + $0x3]]
    %v983 = vstv %s982
    %v984 = vmul.f32 %v748, %v983
    %v985 = vmul.f32 %v749, %v983
    %v986 = vmul.f32 %v750, %v983
    %v987 = vadd.f32 %v911, %v984
    %v988 = vadd.f32 %v912, %v985
    %v989 = vadd.f32 %v913, %v986
    %s990 = sld [smem:[#allocation9 + $0x1e]]
    %v991 = vstv %s990
    %v992 = vmul.f32 %v748, %v991
    %v993 = vmul.f32 %v749, %v991
    %v994 = vmul.f32 %v750, %v991
    %v995 = vadd.f32 %v928, %v992
    %v996 = vadd.f32 %v929, %v993
    %v997 = vadd.f32 %v930, %v994
    %s998 = sld [smem:[#allocation9 + $0x39]]
    %v999 = vstv %s998
    %v1000 = vmul.f32 %v748, %v999
    %v1001 = vmul.f32 %v749, %v999
    %v1002 = vmul.f32 %v750, %v999
    %v1003 = vadd.f32 %v945, %v1000
    %v1004 = vadd.f32 %v946, %v1001
    %v1005 = vadd.f32 %v947, %v1002
    %s1006 = sld [smem:[#allocation9 + $0x54]]
    %v1007 = vstv %s1006
    %v1008 = vmul.f32 %v748, %v1007
    %v1009 = vmul.f32 %v749, %v1007
    %v1010 = vmul.f32 %v750, %v1007
    %v1011 = vadd.f32 %v962, %v1008
    %v1012 = vadd.f32 %v963, %v1009
    %v1013 = vadd.f32 %v964, %v1010
    %s1014 = sld [smem:[#allocation9 + $0x6f]]
    %v1015 = vstv %s1014
    %v1016 = vmul.f32 %v748, %v1015
    %v1017 = vmul.f32 %v749, %v1015
    %v1018 = vmul.f32 %v750, %v1015
    %v1019 = vadd.f32 %v979, %v1016
    %v1020 = vadd.f32 %v980, %v1017
    %v1021 = vadd.f32 %v981, %v1018
    %s1022 = sld [smem:[#allocation9 + $0x4]]
    %v1023 = vstv %s1022
    %v1024 = vmul.f32 %v748, %v1023
    %v1025 = vmul.f32 %v749, %v1023
    %v1026 = vmul.f32 %v750, %v1023
    %v1030 = vrot.slane %v1024, 1
    %v1031 = vrot.slane %v1025, 1
    %v1032 = vrot.slane %v1026, 1
    %v1036 = vadd.f32 %v987, %v1030
    %v1037 = vadd.f32 %v988, %v1031
    %v1038 = vadd.f32 %v989, %v1032
    %s1039 = sld [smem:[#allocation9 + $0x1f]]
    %v1040 = vstv %s1039
    %v1041 = vmul.f32 %v748, %v1040
    %v1042 = vmul.f32 %v749, %v1040
    %v1043 = vmul.f32 %v750, %v1040
    %v1047 = vrot.slane %v1041, 1
    %v1048 = vrot.slane %v1042, 1
    %v1049 = vrot.slane %v1043, 1
    %v1053 = vadd.f32 %v995, %v1047
    %v1054 = vadd.f32 %v996, %v1048
    %v1055 = vadd.f32 %v997, %v1049
    %s1056 = sld [smem:[#allocation9 + $0x3a]]
    %v1057 = vstv %s1056
    %v1058 = vmul.f32 %v748, %v1057
    %v1059 = vmul.f32 %v749, %v1057
    %v1060 = vmul.f32 %v750, %v1057
    %v1064 = vrot.slane %v1058, 1
    %v1065 = vrot.slane %v1059, 1
    %v1066 = vrot.slane %v1060, 1
    %v1070 = vadd.f32 %v1003, %v1064
    %v1071 = vadd.f32 %v1004, %v1065
    %v1072 = vadd.f32 %v1005, %v1066
    %s1073 = sld [smem:[#allocation9 + $0x55]]
    %v1074 = vstv %s1073
    %v1075 = vmul.f32 %v748, %v1074
    %v1076 = vmul.f32 %v749, %v1074
    %v1077 = vmul.f32 %v750, %v1074
    %v1081 = vrot.slane %v1075, 1
    %v1082 = vrot.slane %v1076, 1
    %v1083 = vrot.slane %v1077, 1
    %v1087 = vadd.f32 %v1011, %v1081
    %v1088 = vadd.f32 %v1012, %v1082
    %v1089 = vadd.f32 %v1013, %v1083
    %s1090 = sld [smem:[#allocation9 + $0x70]]
    %v1091 = vstv %s1090
    %v1092 = vmul.f32 %v748, %v1091
    %v1093 = vmul.f32 %v749, %v1091
    %v1094 = vmul.f32 %v750, %v1091
    %v1098 = vrot.slane %v1092, 1
    %v1099 = vrot.slane %v1093, 1
    %v1100 = vrot.slane %v1094, 1
    %v1104 = vadd.f32 %v1019, %v1098
    %v1105 = vadd.f32 %v1020, %v1099
    %v1106 = vadd.f32 %v1021, %v1100
    %s1107 = sld [smem:[#allocation9 + $0x5]]
    %v1108 = vstv %s1107
    %v1109 = vmul.f32 %v748, %v1108
    %v1110 = vmul.f32 %v749, %v1108
    %v1111 = vmul.f32 %v750, %v1108
    %v1115 = vrot.slane %v1109, 2
    %v1116 = vrot.slane %v1110, 2
    %v1117 = vrot.slane %v1111, 2
    %v1121 = vadd.f32 %v1036, %v1115
    %v1122 = vadd.f32 %v1037, %v1116
    %v1123 = vadd.f32 %v1038, %v1117
    %s1124 = sld [smem:[#allocation9 + $0x20]]
    %v1125 = vstv %s1124
    %v1126 = vmul.f32 %v748, %v1125
    %v1127 = vmul.f32 %v749, %v1125
    %v1128 = vmul.f32 %v750, %v1125
    %v1132 = vrot.slane %v1126, 2
    %v1133 = vrot.slane %v1127, 2
    %v1134 = vrot.slane %v1128, 2
    %v1138 = vadd.f32 %v1053, %v1132
    %v1139 = vadd.f32 %v1054, %v1133
    %v1140 = vadd.f32 %v1055, %v1134
    %s1141 = sld [smem:[#allocation9 + $0x3b]]
    %v1142 = vstv %s1141
    %v1143 = vmul.f32 %v748, %v1142
    %v1144 = vmul.f32 %v749, %v1142
    %v1145 = vmul.f32 %v750, %v1142
    %v1149 = vrot.slane %v1143, 2
    %v1150 = vrot.slane %v1144, 2
    %v1151 = vrot.slane %v1145, 2
    %v1155 = vadd.f32 %v1070, %v1149
    %v1156 = vadd.f32 %v1071, %v1150
    %v1157 = vadd.f32 %v1072, %v1151
    %s1158 = sld [smem:[#allocation9 + $0x56]]
    %v1159 = vstv %s1158
    %v1160 = vmul.f32 %v748, %v1159
    %v1161 = vmul.f32 %v749, %v1159
    %v1162 = vmul.f32 %v750, %v1159
    %v1166 = vrot.slane %v1160, 2
    %v1167 = vrot.slane %v1161, 2
    %v1168 = vrot.slane %v1162, 2
    %v1172 = vadd.f32 %v1087, %v1166
    %v1173 = vadd.f32 %v1088, %v1167
    %v1174 = vadd.f32 %v1089, %v1168
    %s1175 = sld [smem:[#allocation9 + $0x71]]
    %v1176 = vstv %s1175
    %v1177 = vmul.f32 %v748, %v1176
    %v1178 = vmul.f32 %v749, %v1176
    %v1179 = vmul.f32 %v750, %v1176
    %v1183 = vrot.slane %v1177, 2
    %v1184 = vrot.slane %v1178, 2
    %v1185 = vrot.slane %v1179, 2
    %v1189 = vadd.f32 %v1104, %v1183
    %v1190 = vadd.f32 %v1105, %v1184
    %v1191 = vadd.f32 %v1106, %v1185
    %s1192 = sld [smem:[#allocation9 + $0x6]]
    %v1193 = vstv %s1192
    %v1194 = vmul.f32 %v749, %v1193
    %v1195 = vmul.f32 %v750, %v1193
    %v1196 = vmul.f32 %v751, %v1193
    %v1197 = vadd.f32 %v1121, %v1194
    %v1198 = vadd.f32 %v1122, %v1195
    %v1199 = vadd.f32 %v1123, %v1196
    %s1200 = sld [smem:[#allocation9 + $0x21]]
    %v1201 = vstv %s1200
    %v1202 = vmul.f32 %v749, %v1201
    %v1203 = vmul.f32 %v750, %v1201
    %v1204 = vmul.f32 %v751, %v1201
    %v1205 = vadd.f32 %v1138, %v1202
    %v1206 = vadd.f32 %v1139, %v1203
    %v1207 = vadd.f32 %v1140, %v1204
    %s1208 = sld [smem:[#allocation9 + $0x3c]]
    %v1209 = vstv %s1208
    %v1210 = vmul.f32 %v749, %v1209
    %v1211 = vmul.f32 %v750, %v1209
    %v1212 = vmul.f32 %v751, %v1209
    %v1213 = vadd.f32 %v1155, %v1210
    %v1214 = vadd.f32 %v1156, %v1211
    %v1215 = vadd.f32 %v1157, %v1212
    %s1216 = sld [smem:[#allocation9 + $0x57]]
    %v1217 = vstv %s1216
    %v1218 = vmul.f32 %v749, %v1217
    %v1219 = vmul.f32 %v750, %v1217
    %v1220 = vmul.f32 %v751, %v1217
    %v1221 = vadd.f32 %v1172, %v1218
    %v1222 = vadd.f32 %v1173, %v1219
    %v1223 = vadd.f32 %v1174, %v1220
    %s1224 = sld [smem:[#allocation9 + $0x72]]
    %v1225 = vstv %s1224
    %v1226 = vmul.f32 %v749, %v1225
    %v1227 = vmul.f32 %v750, %v1225
    %v1228 = vmul.f32 %v751, %v1225
    %v1229 = vadd.f32 %v1189, %v1226
    %v1230 = vadd.f32 %v1190, %v1227
    %v1231 = vadd.f32 %v1191, %v1228
    %s1232 = sld [smem:[#allocation9 + $0x7]]
    %v1233 = vstv %s1232
    %v1234 = vmul.f32 %v749, %v1233
    %v1235 = vmul.f32 %v750, %v1233
    %v1236 = vmul.f32 %v751, %v1233
    %v1240 = vrot.slane %v1234, 1
    %v1241 = vrot.slane %v1235, 1
    %v1242 = vrot.slane %v1236, 1
    %v1246 = vadd.f32 %v1197, %v1240
    %v1247 = vadd.f32 %v1198, %v1241
    %v1248 = vadd.f32 %v1199, %v1242
    %s1249 = sld [smem:[#allocation9 + $0x22]]
    %v1250 = vstv %s1249
    %v1251 = vmul.f32 %v749, %v1250
    %v1252 = vmul.f32 %v750, %v1250
    %v1253 = vmul.f32 %v751, %v1250
    %v1257 = vrot.slane %v1251, 1
    %v1258 = vrot.slane %v1252, 1
    %v1259 = vrot.slane %v1253, 1
    %v1263 = vadd.f32 %v1205, %v1257
    %v1264 = vadd.f32 %v1206, %v1258
    %v1265 = vadd.f32 %v1207, %v1259
    %s1266 = sld [smem:[#allocation9 + $0x3d]]
    %v1267 = vstv %s1266
    %v1268 = vmul.f32 %v749, %v1267
    %v1269 = vmul.f32 %v750, %v1267
    %v1270 = vmul.f32 %v751, %v1267
    %v1274 = vrot.slane %v1268, 1
    %v1275 = vrot.slane %v1269, 1
    %v1276 = vrot.slane %v1270, 1
    %v1280 = vadd.f32 %v1213, %v1274
    %v1281 = vadd.f32 %v1214, %v1275
    %v1282 = vadd.f32 %v1215, %v1276
    %s1283 = sld [smem:[#allocation9 + $0x58]]
    %v1284 = vstv %s1283
    %v1285 = vmul.f32 %v749, %v1284
    %v1286 = vmul.f32 %v750, %v1284
    %v1287 = vmul.f32 %v751, %v1284
    %v1291 = vrot.slane %v1285, 1
    %v1292 = vrot.slane %v1286, 1
    %v1293 = vrot.slane %v1287, 1
    %v1297 = vadd.f32 %v1221, %v1291
    %v1298 = vadd.f32 %v1222, %v1292
    %v1299 = vadd.f32 %v1223, %v1293
    %s1300 = sld [smem:[#allocation9 + $0x73]]
    %v1301 = vstv %s1300
    %v1302 = vmul.f32 %v749, %v1301
    %v1303 = vmul.f32 %v750, %v1301
    %v1304 = vmul.f32 %v751, %v1301
    %v1308 = vrot.slane %v1302, 1
    %v1309 = vrot.slane %v1303, 1
    %v1310 = vrot.slane %v1304, 1
    %v1314 = vadd.f32 %v1229, %v1308
    %v1315 = vadd.f32 %v1230, %v1309
    %v1316 = vadd.f32 %v1231, %v1310
    %s1317 = sld [smem:[#allocation9 + $0x8]]
    %v1318 = vstv %s1317
    %v1319 = vmul.f32 %v749, %v1318
    %v1320 = vmul.f32 %v750, %v1318
    %v1321 = vmul.f32 %v751, %v1318
    %v1325 = vrot.slane %v1319, 2
    %v1326 = vrot.slane %v1320, 2
    %v1327 = vrot.slane %v1321, 2
    %v1331 = vadd.f32 %v1246, %v1325
    %v1332 = vadd.f32 %v1247, %v1326
    %v1333 = vadd.f32 %v1248, %v1327
    %s1334 = sld [smem:[#allocation9 + $0x23]]
    %v1335 = vstv %s1334
    %v1336 = vmul.f32 %v749, %v1335
    %v1337 = vmul.f32 %v750, %v1335
    %v1338 = vmul.f32 %v751, %v1335
    %v1342 = vrot.slane %v1336, 2
    %v1343 = vrot.slane %v1337, 2
    %v1344 = vrot.slane %v1338, 2
    %v1348 = vadd.f32 %v1263, %v1342
    %v1349 = vadd.f32 %v1264, %v1343
    %v1350 = vadd.f32 %v1265, %v1344
    %s1351 = sld [smem:[#allocation9 + $0x3e]]
    %v1352 = vstv %s1351
    %v1353 = vmul.f32 %v749, %v1352
    %v1354 = vmul.f32 %v750, %v1352
    %v1355 = vmul.f32 %v751, %v1352
    %v1359 = vrot.slane %v1353, 2
    %v1360 = vrot.slane %v1354, 2
    %v1361 = vrot.slane %v1355, 2
    %v1365 = vadd.f32 %v1280, %v1359
    %v1366 = vadd.f32 %v1281, %v1360
    %v1367 = vadd.f32 %v1282, %v1361
    %s1368 = sld [smem:[#allocation9 + $0x59]]
    %v1369 = vstv %s1368
    %v1370 = vmul.f32 %v749, %v1369
    %v1371 = vmul.f32 %v750, %v1369
    %v1372 = vmul.f32 %v751, %v1369
    %v1376 = vrot.slane %v1370, 2
    %v1377 = vrot.slane %v1371, 2
    %v1378 = vrot.slane %v1372, 2
    %v1382 = vadd.f32 %v1297, %v1376
    %v1383 = vadd.f32 %v1298, %v1377
    %v1384 = vadd.f32 %v1299, %v1378
    %s1385 = sld [smem:[#allocation9 + $0x74]]
    %v1386 = vstv %s1385
    %v1387 = vmul.f32 %v749, %v1386
    %v1388 = vmul.f32 %v750, %v1386
    %v1389 = vmul.f32 %v751, %v1386
    %v1393 = vrot.slane %v1387, 2
    %v1394 = vrot.slane %v1388, 2
    %v1395 = vrot.slane %v1389, 2
    %v1399 = vadd.f32 %v1314, %v1393
    %v1400 = vadd.f32 %v1315, %v1394
    %v1401 = vadd.f32 %v1316, %v1395
    %s1402 = sld [smem:[#allocation9 + $0x9]]
    %v1403 = vstv %s1402
    %v1404 = vmul.f32 %v752, %v1403
    %v1405 = vmul.f32 %v753, %v1403
    %v1406 = vmul.f32 %v754, %v1403
    %v1407 = vadd.f32 %v1331, %v1404
    %v1408 = vadd.f32 %v1332, %v1405
    %v1409 = vadd.f32 %v1333, %v1406
    %s1410 = sld [smem:[#allocation9 + $0x24]]
    %v1411 = vstv %s1410
    %v1412 = vmul.f32 %v752, %v1411
    %v1413 = vmul.f32 %v753, %v1411
    %v1414 = vmul.f32 %v754, %v1411
    %v1415 = vadd.f32 %v1348, %v1412
    %v1416 = vadd.f32 %v1349, %v1413
    %v1417 = vadd.f32 %v1350, %v1414
    %s1418 = sld [smem:[#allocation9 + $0x3f]]
    %v1419 = vstv %s1418
    %v1420 = vmul.f32 %v752, %v1419
    %v1421 = vmul.f32 %v753, %v1419
    %v1422 = vmul.f32 %v754, %v1419
    %v1423 = vadd.f32 %v1365, %v1420
    %v1424 = vadd.f32 %v1366, %v1421
    %v1425 = vadd.f32 %v1367, %v1422
    %s1426 = sld [smem:[#allocation9 + $0x5a]]
    %v1427 = vstv %s1426
    %v1428 = vmul.f32 %v752, %v1427
    %v1429 = vmul.f32 %v753, %v1427
    %v1430 = vmul.f32 %v754, %v1427
    %v1431 = vadd.f32 %v1382, %v1428
    %v1432 = vadd.f32 %v1383, %v1429
    %v1433 = vadd.f32 %v1384, %v1430
    %s1434 = sld [smem:[#allocation9 + $0x75]]
    %v1435 = vstv %s1434
    %v1436 = vmul.f32 %v752, %v1435
    %v1437 = vmul.f32 %v753, %v1435
    %v1438 = vmul.f32 %v754, %v1435
    %v1439 = vadd.f32 %v1399, %v1436
    %v1440 = vadd.f32 %v1400, %v1437
    %v1441 = vadd.f32 %v1401, %v1438
    %s1442 = sld [smem:[#allocation9 + $0xa]]
    %v1443 = vstv %s1442
    %v1444 = vmul.f32 %v752, %v1443
    %v1445 = vmul.f32 %v753, %v1443
    %v1446 = vmul.f32 %v754, %v1443
    %v1450 = vrot.slane %v1444, 1
    %v1451 = vrot.slane %v1445, 1
    %v1452 = vrot.slane %v1446, 1
    %v1456 = vadd.f32 %v1407, %v1450
    %v1457 = vadd.f32 %v1408, %v1451
    %v1458 = vadd.f32 %v1409, %v1452
    %s1459 = sld [smem:[#allocation9 + $0x25]]
    %v1460 = vstv %s1459
    %v1461 = vmul.f32 %v752, %v1460
    %v1462 = vmul.f32 %v753, %v1460
    %v1463 = vmul.f32 %v754, %v1460
    %v1467 = vrot.slane %v1461, 1
    %v1468 = vrot.slane %v1462, 1
    %v1469 = vrot.slane %v1463, 1
    %v1473 = vadd.f32 %v1415, %v1467
    %v1474 = vadd.f32 %v1416, %v1468
    %v1475 = vadd.f32 %v1417, %v1469
    %s1476 = sld [smem:[#allocation9 + $0x40]]
    %v1477 = vstv %s1476
    %v1478 = vmul.f32 %v752, %v1477
    %v1479 = vmul.f32 %v753, %v1477
    %v1480 = vmul.f32 %v754, %v1477
    %v1484 = vrot.slane %v1478, 1
    %v1485 = vrot.slane %v1479, 1
    %v1486 = vrot.slane %v1480, 1
    %v1490 = vadd.f32 %v1423, %v1484
    %v1491 = vadd.f32 %v1424, %v1485
    %v1492 = vadd.f32 %v1425, %v1486
    %s1493 = sld [smem:[#allocation9 + $0x5b]]
    %v1494 = vstv %s1493
    %v1495 = vmul.f32 %v752, %v1494
    %v1496 = vmul.f32 %v753, %v1494
    %v1497 = vmul.f32 %v754, %v1494
    %v1501 = vrot.slane %v1495, 1
    %v1502 = vrot.slane %v1496, 1
    %v1503 = vrot.slane %v1497, 1
    %v1507 = vadd.f32 %v1431, %v1501
    %v1508 = vadd.f32 %v1432, %v1502
    %v1509 = vadd.f32 %v1433, %v1503
    %s1510 = sld [smem:[#allocation9 + $0x76]]
    %v1511 = vstv %s1510
    %v1512 = vmul.f32 %v752, %v1511
    %v1513 = vmul.f32 %v753, %v1511
    %v1514 = vmul.f32 %v754, %v1511
    %v1518 = vrot.slane %v1512, 1
    %v1519 = vrot.slane %v1513, 1
    %v1520 = vrot.slane %v1514, 1
    %v1524 = vadd.f32 %v1439, %v1518
    %v1525 = vadd.f32 %v1440, %v1519
    %v1526 = vadd.f32 %v1441, %v1520
    %s1527 = sld [smem:[#allocation9 + $0xb]]
    %v1528 = vstv %s1527
    %v1529 = vmul.f32 %v752, %v1528
    %v1530 = vmul.f32 %v753, %v1528
    %v1531 = vmul.f32 %v754, %v1528
    %v1535 = vrot.slane %v1529, 2
    %v1536 = vrot.slane %v1530, 2
    %v1537 = vrot.slane %v1531, 2
    %v1541 = vadd.f32 %v1456, %v1535
    %v1542 = vadd.f32 %v1457, %v1536
    %v1543 = vadd.f32 %v1458, %v1537
    %s1544 = sld [smem:[#allocation9 + $0x26]]
    %v1545 = vstv %s1544
    %v1546 = vmul.f32 %v752, %v1545
    %v1547 = vmul.f32 %v753, %v1545
    %v1548 = vmul.f32 %v754, %v1545
    %v1552 = vrot.slane %v1546, 2
    %v1553 = vrot.slane %v1547, 2
    %v1554 = vrot.slane %v1548, 2
    %v1558 = vadd.f32 %v1473, %v1552
    %v1559 = vadd.f32 %v1474, %v1553
    %v1560 = vadd.f32 %v1475, %v1554
    %s1561 = sld [smem:[#allocation9 + $0x41]]
    %v1562 = vstv %s1561
    %v1563 = vmul.f32 %v752, %v1562
    %v1564 = vmul.f32 %v753, %v1562
    %v1565 = vmul.f32 %v754, %v1562
    %v1569 = vrot.slane %v1563, 2
    %v1570 = vrot.slane %v1564, 2
    %v1571 = vrot.slane %v1565, 2
    %v1575 = vadd.f32 %v1490, %v1569
    %v1576 = vadd.f32 %v1491, %v1570
    %v1577 = vadd.f32 %v1492, %v1571
    %s1578 = sld [smem:[#allocation9 + $0x5c]]
    %v1579 = vstv %s1578
    %v1580 = vmul.f32 %v752, %v1579
    %v1581 = vmul.f32 %v753, %v1579
    %v1582 = vmul.f32 %v754, %v1579
    %v1586 = vrot.slane %v1580, 2
    %v1587 = vrot.slane %v1581, 2
    %v1588 = vrot.slane %v1582, 2
    %v1592 = vadd.f32 %v1507, %v1586
    %v1593 = vadd.f32 %v1508, %v1587
    %v1594 = vadd.f32 %v1509, %v1588
    %s1595 = sld [smem:[#allocation9 + $0x77]]
    %v1596 = vstv %s1595
    %v1597 = vmul.f32 %v752, %v1596
    %v1598 = vmul.f32 %v753, %v1596
    %v1599 = vmul.f32 %v754, %v1596
    %v1603 = vrot.slane %v1597, 2
    %v1604 = vrot.slane %v1598, 2
    %v1605 = vrot.slane %v1599, 2
    %v1609 = vadd.f32 %v1524, %v1603
    %v1610 = vadd.f32 %v1525, %v1604
    %v1611 = vadd.f32 %v1526, %v1605
    %s1612 = sld [smem:[#allocation9 + $0xc]]
    %v1613 = vstv %s1612
    %v1614 = vmul.f32 %v753, %v1613
    %v1615 = vmul.f32 %v754, %v1613
    %v1616 = vmul.f32 %v755, %v1613
    %v1617 = vadd.f32 %v1541, %v1614
    %v1618 = vadd.f32 %v1542, %v1615
    %v1619 = vadd.f32 %v1543, %v1616
    %s1620 = sld [smem:[#allocation9 + $0x27]]
    %v1621 = vstv %s1620
    %v1622 = vmul.f32 %v753, %v1621
    %v1623 = vmul.f32 %v754, %v1621
    %v1624 = vmul.f32 %v755, %v1621
    %v1625 = vadd.f32 %v1558, %v1622
    %v1626 = vadd.f32 %v1559, %v1623
    %v1627 = vadd.f32 %v1560, %v1624
    %s1628 = sld [smem:[#allocation9 + $0x42]]
    %v1629 = vstv %s1628
    %v1630 = vmul.f32 %v753, %v1629
    %v1631 = vmul.f32 %v754, %v1629
    %v1632 = vmul.f32 %v755, %v1629
    %v1633 = vadd.f32 %v1575, %v1630
    %v1634 = vadd.f32 %v1576, %v1631
    %v1635 = vadd.f32 %v1577, %v1632
    %s1636 = sld [smem:[#allocation9 + $0x5d]]
    %v1637 = vstv %s1636
    %v1638 = vmul.f32 %v753, %v1637
    %v1639 = vmul.f32 %v754, %v1637
    %v1640 = vmul.f32 %v755, %v1637
    %v1641 = vadd.f32 %v1592, %v1638
    %v1642 = vadd.f32 %v1593, %v1639
    %v1643 = vadd.f32 %v1594, %v1640
    %s1644 = sld [smem:[#allocation9 + $0x78]]
    %v1645 = vstv %s1644
    %v1646 = vmul.f32 %v753, %v1645
    %v1647 = vmul.f32 %v754, %v1645
    %v1648 = vmul.f32 %v755, %v1645
    %v1649 = vadd.f32 %v1609, %v1646
    %v1650 = vadd.f32 %v1610, %v1647
    %v1651 = vadd.f32 %v1611, %v1648
    %s1652 = sld [smem:[#allocation9 + $0xd]]
    %v1653 = vstv %s1652
    %v1654 = vmul.f32 %v753, %v1653
    %v1655 = vmul.f32 %v754, %v1653
    %v1656 = vmul.f32 %v755, %v1653
    %v1660 = vrot.slane %v1654, 1
    %v1661 = vrot.slane %v1655, 1
    %v1662 = vrot.slane %v1656, 1
    %v1666 = vadd.f32 %v1617, %v1660
    %v1667 = vadd.f32 %v1618, %v1661
    %v1668 = vadd.f32 %v1619, %v1662
    %s1669 = sld [smem:[#allocation9 + $0x28]]
    %v1670 = vstv %s1669
    %v1671 = vmul.f32 %v753, %v1670
    %v1672 = vmul.f32 %v754, %v1670
    %v1673 = vmul.f32 %v755, %v1670
    %v1677 = vrot.slane %v1671, 1
    %v1678 = vrot.slane %v1672, 1
    %v1679 = vrot.slane %v1673, 1
    %v1683 = vadd.f32 %v1625, %v1677
    %v1684 = vadd.f32 %v1626, %v1678
    %v1685 = vadd.f32 %v1627, %v1679
    %s1686 = sld [smem:[#allocation9 + $0x43]]
    %v1687 = vstv %s1686
    %v1688 = vmul.f32 %v753, %v1687
    %v1689 = vmul.f32 %v754, %v1687
    %v1690 = vmul.f32 %v755, %v1687
    %v1694 = vrot.slane %v1688, 1
    %v1695 = vrot.slane %v1689, 1
    %v1696 = vrot.slane %v1690, 1
    %v1700 = vadd.f32 %v1633, %v1694
    %v1701 = vadd.f32 %v1634, %v1695
    %v1702 = vadd.f32 %v1635, %v1696
    %s1703 = sld [smem:[#allocation9 + $0x5e]]
    %v1704 = vstv %s1703
    %v1705 = vmul.f32 %v753, %v1704
    %v1706 = vmul.f32 %v754, %v1704
    %v1707 = vmul.f32 %v755, %v1704
    %v1711 = vrot.slane %v1705, 1
    %v1712 = vrot.slane %v1706, 1
    %v1713 = vrot.slane %v1707, 1
    %v1717 = vadd.f32 %v1641, %v1711
    %v1718 = vadd.f32 %v1642, %v1712
    %v1719 = vadd.f32 %v1643, %v1713
    %s1720 = sld [smem:[#allocation9 + $0x79]]
    %v1721 = vstv %s1720
    %v1722 = vmul.f32 %v753, %v1721
    %v1723 = vmul.f32 %v754, %v1721
    %v1724 = vmul.f32 %v755, %v1721
    %v1728 = vrot.slane %v1722, 1
    %v1729 = vrot.slane %v1723, 1
    %v1730 = vrot.slane %v1724, 1
    %v1734 = vadd.f32 %v1649, %v1728
    %v1735 = vadd.f32 %v1650, %v1729
    %v1736 = vadd.f32 %v1651, %v1730
    %s1737 = sld [smem:[#allocation9 + $0xe]]
    %v1738 = vstv %s1737
    %v1739 = vmul.f32 %v753, %v1738
    %v1740 = vmul.f32 %v754, %v1738
    %v1741 = vmul.f32 %v755, %v1738
    %v1745 = vrot.slane %v1739, 2
    %v1746 = vrot.slane %v1740, 2
    %v1747 = vrot.slane %v1741, 2
    %v1751 = vadd.f32 %v1666, %v1745
    %v1752 = vadd.f32 %v1667, %v1746
    %v1753 = vadd.f32 %v1668, %v1747
    %s1754 = sld [smem:[#allocation9 + $0x29]]
    %v1755 = vstv %s1754
    %v1756 = vmul.f32 %v753, %v1755
    %v1757 = vmul.f32 %v754, %v1755
    %v1758 = vmul.f32 %v755, %v1755
    %v1762 = vrot.slane %v1756, 2
    %v1763 = vrot.slane %v1757, 2
    %v1764 = vrot.slane %v1758, 2
    %v1768 = vadd.f32 %v1683, %v1762
    %v1769 = vadd.f32 %v1684, %v1763
    %v1770 = vadd.f32 %v1685, %v1764
    %s1771 = sld [smem:[#allocation9 + $0x44]]
    %v1772 = vstv %s1771
    %v1773 = vmul.f32 %v753, %v1772
    %v1774 = vmul.f32 %v754, %v1772
    %v1775 = vmul.f32 %v755, %v1772
    %v1779 = vrot.slane %v1773, 2
    %v1780 = vrot.slane %v1774, 2
    %v1781 = vrot.slane %v1775, 2
    %v1785 = vadd.f32 %v1700, %v1779
    %v1786 = vadd.f32 %v1701, %v1780
    %v1787 = vadd.f32 %v1702, %v1781
    %s1788 = sld [smem:[#allocation9 + $0x5f]]
    %v1789 = vstv %s1788
    %v1790 = vmul.f32 %v753, %v1789
    %v1791 = vmul.f32 %v754, %v1789
    %v1792 = vmul.f32 %v755, %v1789
    %v1796 = vrot.slane %v1790, 2
    %v1797 = vrot.slane %v1791, 2
    %v1798 = vrot.slane %v1792, 2
    %v1802 = vadd.f32 %v1717, %v1796
    %v1803 = vadd.f32 %v1718, %v1797
    %v1804 = vadd.f32 %v1719, %v1798
    %s1805 = sld [smem:[#allocation9 + $0x7a]]
    %v1806 = vstv %s1805
    %v1807 = vmul.f32 %v753, %v1806
    %v1808 = vmul.f32 %v754, %v1806
    %v1809 = vmul.f32 %v755, %v1806
    %v1813 = vrot.slane %v1807, 2
    %v1814 = vrot.slane %v1808, 2
    %v1815 = vrot.slane %v1809, 2
    %v1819 = vadd.f32 %v1734, %v1813
    %v1820 = vadd.f32 %v1735, %v1814
    %v1821 = vadd.f32 %v1736, %v1815
    %s1822 = sld [smem:[#allocation9 + $0xf]]
    %v1823 = vstv %s1822
    %v1824 = vmul.f32 %v754, %v1823
    %v1825 = vmul.f32 %v755, %v1823
    %v1826 = vmul.f32 %v756, %v1823
    %v1827 = vadd.f32 %v1751, %v1824
    %v1828 = vadd.f32 %v1752, %v1825
    %v1829 = vadd.f32 %v1753, %v1826
    %s1830 = sld [smem:[#allocation9 + $0x2a]]
    %v1831 = vstv %s1830
    %v1832 = vmul.f32 %v754, %v1831
    %v1833 = vmul.f32 %v755, %v1831
    %v1834 = vmul.f32 %v756, %v1831
    %v1835 = vadd.f32 %v1768, %v1832
    %v1836 = vadd.f32 %v1769, %v1833
    %v1837 = vadd.f32 %v1770, %v1834
    %s1838 = sld [smem:[#allocation9 + $0x45]]
    %v1839 = vstv %s1838
    %v1840 = vmul.f32 %v754, %v1839
    %v1841 = vmul.f32 %v755, %v1839
    %v1842 = vmul.f32 %v756, %v1839
    %v1843 = vadd.f32 %v1785, %v1840
    %v1844 = vadd.f32 %v1786, %v1841
    %v1845 = vadd.f32 %v1787, %v1842
    %s1846 = sld [smem:[#allocation9 + $0x60]]
    %v1847 = vstv %s1846
    %v1848 = vmul.f32 %v754, %v1847
    %v1849 = vmul.f32 %v755, %v1847
    %v1850 = vmul.f32 %v756, %v1847
    %v1851 = vadd.f32 %v1802, %v1848
    %v1852 = vadd.f32 %v1803, %v1849
    %v1853 = vadd.f32 %v1804, %v1850
    %s1854 = sld [smem:[#allocation9 + $0x7b]]
    %v1855 = vstv %s1854
    %v1856 = vmul.f32 %v754, %v1855
    %v1857 = vmul.f32 %v755, %v1855
    %v1858 = vmul.f32 %v756, %v1855
    %v1859 = vadd.f32 %v1819, %v1856
    %v1860 = vadd.f32 %v1820, %v1857
    %v1861 = vadd.f32 %v1821, %v1858
    %s1862 = sld [smem:[#allocation9 + $0x10]]
    %v1863 = vstv %s1862
    %v1864 = vmul.f32 %v754, %v1863
    %v1865 = vmul.f32 %v755, %v1863
    %v1866 = vmul.f32 %v756, %v1863
    %v1870 = vrot.slane %v1864, 1
    %v1871 = vrot.slane %v1865, 1
    %v1872 = vrot.slane %v1866, 1
    %v1876 = vadd.f32 %v1827, %v1870
    %v1877 = vadd.f32 %v1828, %v1871
    %v1878 = vadd.f32 %v1829, %v1872
    %s1879 = sld [smem:[#allocation9 + $0x2b]]
    %v1880 = vstv %s1879
    %v1881 = vmul.f32 %v754, %v1880
    %v1882 = vmul.f32 %v755, %v1880
    %v1883 = vmul.f32 %v756, %v1880
    %v1887 = vrot.slane %v1881, 1
    %v1888 = vrot.slane %v1882, 1
    %v1889 = vrot.slane %v1883, 1
    %v1893 = vadd.f32 %v1835, %v1887
    %v1894 = vadd.f32 %v1836, %v1888
    %v1895 = vadd.f32 %v1837, %v1889
    %s1896 = sld [smem:[#allocation9 + $0x46]]
    %v1897 = vstv %s1896
    %v1898 = vmul.f32 %v754, %v1897
    %v1899 = vmul.f32 %v755, %v1897
    %v1900 = vmul.f32 %v756, %v1897
    %v1904 = vrot.slane %v1898, 1
    %v1905 = vrot.slane %v1899, 1
    %v1906 = vrot.slane %v1900, 1
    %v1910 = vadd.f32 %v1843, %v1904
    %v1911 = vadd.f32 %v1844, %v1905
    %v1912 = vadd.f32 %v1845, %v1906
    %s1913 = sld [smem:[#allocation9 + $0x61]]
    %v1914 = vstv %s1913
    %v1915 = vmul.f32 %v754, %v1914
    %v1916 = vmul.f32 %v755, %v1914
    %v1917 = vmul.f32 %v756, %v1914
    %v1921 = vrot.slane %v1915, 1
    %v1922 = vrot.slane %v1916, 1
    %v1923 = vrot.slane %v1917, 1
    %v1927 = vadd.f32 %v1851, %v1921
    %v1928 = vadd.f32 %v1852, %v1922
    %v1929 = vadd.f32 %v1853, %v1923
    %s1930 = sld [smem:[#allocation9 + $0x7c]]
    %v1931 = vstv %s1930
    %v1932 = vmul.f32 %v754, %v1931
    %v1933 = vmul.f32 %v755, %v1931
    %v1934 = vmul.f32 %v756, %v1931
    %v1938 = vrot.slane %v1932, 1
    %v1939 = vrot.slane %v1933, 1
    %v1940 = vrot.slane %v1934, 1
    %v1944 = vadd.f32 %v1859, %v1938
    %v1945 = vadd.f32 %v1860, %v1939
    %v1946 = vadd.f32 %v1861, %v1940
    %s1947 = sld [smem:[#allocation9 + $0x11]]
    %v1948 = vstv %s1947
    %v1949 = vmul.f32 %v754, %v1948
    %v1950 = vmul.f32 %v755, %v1948
    %v1951 = vmul.f32 %v756, %v1948
    %v1955 = vrot.slane %v1949, 2
    %v1956 = vrot.slane %v1950, 2
    %v1957 = vrot.slane %v1951, 2
    %v1961 = vadd.f32 %v1876, %v1955
    %v1962 = vadd.f32 %v1877, %v1956
    %v1963 = vadd.f32 %v1878, %v1957
    %s1964 = sld [smem:[#allocation9 + $0x2c]]
    %v1965 = vstv %s1964
    %v1966 = vmul.f32 %v754, %v1965
    %v1967 = vmul.f32 %v755, %v1965
    %v1968 = vmul.f32 %v756, %v1965
    %v1972 = vrot.slane %v1966, 2
    %v1973 = vrot.slane %v1967, 2
    %v1974 = vrot.slane %v1968, 2
    %v1978 = vadd.f32 %v1893, %v1972
    %v1979 = vadd.f32 %v1894, %v1973
    %v1980 = vadd.f32 %v1895, %v1974
    %s1981 = sld [smem:[#allocation9 + $0x47]]
    %v1982 = vstv %s1981
    %v1983 = vmul.f32 %v754, %v1982
    %v1984 = vmul.f32 %v755, %v1982
    %v1985 = vmul.f32 %v756, %v1982
    %v1989 = vrot.slane %v1983, 2
    %v1990 = vrot.slane %v1984, 2
    %v1991 = vrot.slane %v1985, 2
    %v1995 = vadd.f32 %v1910, %v1989
    %v1996 = vadd.f32 %v1911, %v1990
    %v1997 = vadd.f32 %v1912, %v1991
    %s1998 = sld [smem:[#allocation9 + $0x62]]
    %v1999 = vstv %s1998
    %v2000 = vmul.f32 %v754, %v1999
    %v2001 = vmul.f32 %v755, %v1999
    %v2002 = vmul.f32 %v756, %v1999
    %v2006 = vrot.slane %v2000, 2
    %v2007 = vrot.slane %v2001, 2
    %v2008 = vrot.slane %v2002, 2
    %v2012 = vadd.f32 %v1927, %v2006
    %v2013 = vadd.f32 %v1928, %v2007
    %v2014 = vadd.f32 %v1929, %v2008
    %s2015 = sld [smem:[#allocation9 + $0x7d]]
    %v2016 = vstv %s2015
    %v2017 = vmul.f32 %v754, %v2016
    %v2018 = vmul.f32 %v755, %v2016
    %v2019 = vmul.f32 %v756, %v2016
    %v2023 = vrot.slane %v2017, 2
    %v2024 = vrot.slane %v2018, 2
    %v2025 = vrot.slane %v2019, 2
    %v2029 = vadd.f32 %v1944, %v2023
    %v2030 = vadd.f32 %v1945, %v2024
    %v2031 = vadd.f32 %v1946, %v2025
    %s2032 = sld [smem:[#allocation9 + $0x12]]
    %v2033 = vstv %s2032
    %v2034 = vmul.f32 %v757, %v2033
    %v2035 = vmul.f32 %v758, %v2033
    %v2036 = vmul.f32 %v759, %v2033
    %v2037 = vadd.f32 %v1961, %v2034
    %v2038 = vadd.f32 %v1962, %v2035
    %v2039 = vadd.f32 %v1963, %v2036
    %s2040 = sld [smem:[#allocation9 + $0x2d]]
    %v2041 = vstv %s2040
    %v2042 = vmul.f32 %v757, %v2041
    %v2043 = vmul.f32 %v758, %v2041
    %v2044 = vmul.f32 %v759, %v2041
    %v2045 = vadd.f32 %v1978, %v2042
    %v2046 = vadd.f32 %v1979, %v2043
    %v2047 = vadd.f32 %v1980, %v2044
    %s2048 = sld [smem:[#allocation9 + $0x48]]
    %v2049 = vstv %s2048
    %v2050 = vmul.f32 %v757, %v2049
    %v2051 = vmul.f32 %v758, %v2049
    %v2052 = vmul.f32 %v759, %v2049
    %v2053 = vadd.f32 %v1995, %v2050
    %v2054 = vadd.f32 %v1996, %v2051
    %v2055 = vadd.f32 %v1997, %v2052
    %s2056 = sld [smem:[#allocation9 + $0x63]]
    %v2057 = vstv %s2056
    %v2058 = vmul.f32 %v757, %v2057
    %v2059 = vmul.f32 %v758, %v2057
    %v2060 = vmul.f32 %v759, %v2057
    %v2061 = vadd.f32 %v2012, %v2058
    %v2062 = vadd.f32 %v2013, %v2059
    %v2063 = vadd.f32 %v2014, %v2060
    %s2064 = sld [smem:[#allocation9 + $0x7e]]
    %v2065 = vstv %s2064
    %v2066 = vmul.f32 %v757, %v2065
    %v2067 = vmul.f32 %v758, %v2065
    %v2068 = vmul.f32 %v759, %v2065
    %v2069 = vadd.f32 %v2029, %v2066
    %v2070 = vadd.f32 %v2030, %v2067
    %v2071 = vadd.f32 %v2031, %v2068
    %s2072 = sld [smem:[#allocation9 + $0x13]]
    %v2073 = vstv %s2072
    %v2074 = vmul.f32 %v757, %v2073
    %v2075 = vmul.f32 %v758, %v2073
    %v2076 = vmul.f32 %v759, %v2073
    %v2080 = vrot.slane %v2074, 1
    %v2081 = vrot.slane %v2075, 1
    %v2082 = vrot.slane %v2076, 1
    %v2086 = vadd.f32 %v2037, %v2080
    %v2087 = vadd.f32 %v2038, %v2081
    %v2088 = vadd.f32 %v2039, %v2082
    %s2089 = sld [smem:[#allocation9 + $0x2e]]
    %v2090 = vstv %s2089
    %v2091 = vmul.f32 %v757, %v2090
    %v2092 = vmul.f32 %v758, %v2090
    %v2093 = vmul.f32 %v759, %v2090
    %v2097 = vrot.slane %v2091, 1
    %v2098 = vrot.slane %v2092, 1
    %v2099 = vrot.slane %v2093, 1
    %v2103 = vadd.f32 %v2045, %v2097
    %v2104 = vadd.f32 %v2046, %v2098
    %v2105 = vadd.f32 %v2047, %v2099
    %s2106 = sld [smem:[#allocation9 + $0x49]]
    %v2107 = vstv %s2106
    %v2108 = vmul.f32 %v757, %v2107
    %v2109 = vmul.f32 %v758, %v2107
    %v2110 = vmul.f32 %v759, %v2107
    %v2114 = vrot.slane %v2108, 1
    %v2115 = vrot.slane %v2109, 1
    %v2116 = vrot.slane %v2110, 1
    %v2120 = vadd.f32 %v2053, %v2114
    %v2121 = vadd.f32 %v2054, %v2115
    %v2122 = vadd.f32 %v2055, %v2116
    %s2123 = sld [smem:[#allocation9 + $0x64]]
    %v2124 = vstv %s2123
    %v2125 = vmul.f32 %v757, %v2124
    %v2126 = vmul.f32 %v758, %v2124
    %v2127 = vmul.f32 %v759, %v2124
    %v2131 = vrot.slane %v2125, 1
    %v2132 = vrot.slane %v2126, 1
    %v2133 = vrot.slane %v2127, 1
    %v2137 = vadd.f32 %v2061, %v2131
    %v2138 = vadd.f32 %v2062, %v2132
    %v2139 = vadd.f32 %v2063, %v2133
    %s2140 = sld [smem:[#allocation9 + $0x7f]]
    %v2141 = vstv %s2140
    %v2142 = vmul.f32 %v757, %v2141
    %v2143 = vmul.f32 %v758, %v2141
    %v2144 = vmul.f32 %v759, %v2141
    %v2148 = vrot.slane %v2142, 1
    %v2149 = vrot.slane %v2143, 1
    %v2150 = vrot.slane %v2144, 1
    %v2154 = vadd.f32 %v2069, %v2148
    %v2155 = vadd.f32 %v2070, %v2149
    %v2156 = vadd.f32 %v2071, %v2150
    %s2157 = sld [smem:[#allocation9 + $0x14]]
    %v2158 = vstv %s2157
    %v2159 = vmul.f32 %v757, %v2158
    %v2160 = vmul.f32 %v758, %v2158
    %v2161 = vmul.f32 %v759, %v2158
    %v2165 = vrot.slane %v2159, 2
    %v2166 = vrot.slane %v2160, 2
    %v2167 = vrot.slane %v2161, 2
    %v2171 = vadd.f32 %v2086, %v2165
    %v2172 = vadd.f32 %v2087, %v2166
    %v2173 = vadd.f32 %v2088, %v2167
    %s2174 = sld [smem:[#allocation9 + $0x2f]]
    %v2175 = vstv %s2174
    %v2176 = vmul.f32 %v757, %v2175
    %v2177 = vmul.f32 %v758, %v2175
    %v2178 = vmul.f32 %v759, %v2175
    %v2182 = vrot.slane %v2176, 2
    %v2183 = vrot.slane %v2177, 2
    %v2184 = vrot.slane %v2178, 2
    %v2188 = vadd.f32 %v2103, %v2182
    %v2189 = vadd.f32 %v2104, %v2183
    %v2190 = vadd.f32 %v2105, %v2184
    %s2191 = sld [smem:[#allocation9 + $0x4a]]
    %v2192 = vstv %s2191
    %v2193 = vmul.f32 %v757, %v2192
    %v2194 = vmul.f32 %v758, %v2192
    %v2195 = vmul.f32 %v759, %v2192
    %v2199 = vrot.slane %v2193, 2
    %v2200 = vrot.slane %v2194, 2
    %v2201 = vrot.slane %v2195, 2
    %v2205 = vadd.f32 %v2120, %v2199
    %v2206 = vadd.f32 %v2121, %v2200
    %v2207 = vadd.f32 %v2122, %v2201
    %s2208 = sld [smem:[#allocation9 + $0x65]]
    %v2209 = vstv %s2208
    %v2210 = vmul.f32 %v757, %v2209
    %v2211 = vmul.f32 %v758, %v2209
    %v2212 = vmul.f32 %v759, %v2209
    %v2216 = vrot.slane %v2210, 2
    %v2217 = vrot.slane %v2211, 2
    %v2218 = vrot.slane %v2212, 2
    %v2222 = vadd.f32 %v2137, %v2216
    %v2223 = vadd.f32 %v2138, %v2217
    %v2224 = vadd.f32 %v2139, %v2218
    %s2225 = sld [smem:[#allocation9 + $0x80]]
    %v2226 = vstv %s2225
    %v2227 = vmul.f32 %v757, %v2226
    %v2228 = vmul.f32 %v758, %v2226
    %v2229 = vmul.f32 %v759, %v2226
    %v2233 = vrot.slane %v2227, 2
    %v2234 = vrot.slane %v2228, 2
    %v2235 = vrot.slane %v2229, 2
    %v2239 = vadd.f32 %v2154, %v2233
    %v2240 = vadd.f32 %v2155, %v2234
    %v2241 = vadd.f32 %v2156, %v2235
    %s2242 = sld [smem:[#allocation9 + $0x15]]
    %v2243 = vstv %s2242
    %v2244 = vmul.f32 %v758, %v2243
    %v2245 = vmul.f32 %v759, %v2243
    %v2246 = vmul.f32 %v760, %v2243
    %v2247 = vadd.f32 %v2171, %v2244
    %v2248 = vadd.f32 %v2172, %v2245
    %v2249 = vadd.f32 %v2173, %v2246
    %s2250 = sld [smem:[#allocation9 + $0x30]]
    %v2251 = vstv %s2250
    %v2252 = vmul.f32 %v758, %v2251
    %v2253 = vmul.f32 %v759, %v2251
    %v2254 = vmul.f32 %v760, %v2251
    %v2255 = vadd.f32 %v2188, %v2252
    %v2256 = vadd.f32 %v2189, %v2253
    %v2257 = vadd.f32 %v2190, %v2254
    %s2258 = sld [smem:[#allocation9 + $0x4b]]
    %v2259 = vstv %s2258
    %v2260 = vmul.f32 %v758, %v2259
    %v2261 = vmul.f32 %v759, %v2259
    %v2262 = vmul.f32 %v760, %v2259
    %v2263 = vadd.f32 %v2205, %v2260
    %v2264 = vadd.f32 %v2206, %v2261
    %v2265 = vadd.f32 %v2207, %v2262
    %s2266 = sld [smem:[#allocation9 + $0x66]]
    %v2267 = vstv %s2266
    %v2268 = vmul.f32 %v758, %v2267
    %v2269 = vmul.f32 %v759, %v2267
    %v2270 = vmul.f32 %v760, %v2267
    %v2271 = vadd.f32 %v2222, %v2268
    %v2272 = vadd.f32 %v2223, %v2269
    %v2273 = vadd.f32 %v2224, %v2270
    %s2274 = sld [smem:[#allocation9 + $0x81]]
    %v2275 = vstv %s2274
    %v2276 = vmul.f32 %v758, %v2275
    %v2277 = vmul.f32 %v759, %v2275
    %v2278 = vmul.f32 %v760, %v2275
    %v2279 = vadd.f32 %v2239, %v2276
    %v2280 = vadd.f32 %v2240, %v2277
    %v2281 = vadd.f32 %v2241, %v2278
    %s2282 = sld [smem:[#allocation9 + $0x16]]
    %v2283 = vstv %s2282
    %v2284 = vmul.f32 %v758, %v2283
    %v2285 = vmul.f32 %v759, %v2283
    %v2286 = vmul.f32 %v760, %v2283
    %v2290 = vrot.slane %v2284, 1
    %v2291 = vrot.slane %v2285, 1
    %v2292 = vrot.slane %v2286, 1
    %v2296 = vadd.f32 %v2247, %v2290
    %v2297 = vadd.f32 %v2248, %v2291
    %v2298 = vadd.f32 %v2249, %v2292
    %s2299 = sld [smem:[#allocation9 + $0x31]]
    %v2300 = vstv %s2299
    %v2301 = vmul.f32 %v758, %v2300
    %v2302 = vmul.f32 %v759, %v2300
    %v2303 = vmul.f32 %v760, %v2300
    %v2307 = vrot.slane %v2301, 1
    %v2308 = vrot.slane %v2302, 1
    %v2309 = vrot.slane %v2303, 1
    %v2313 = vadd.f32 %v2255, %v2307
    %v2314 = vadd.f32 %v2256, %v2308
    %v2315 = vadd.f32 %v2257, %v2309
    %s2316 = sld [smem:[#allocation9 + $0x4c]]
    %v2317 = vstv %s2316
    %v2318 = vmul.f32 %v758, %v2317
    %v2319 = vmul.f32 %v759, %v2317
    %v2320 = vmul.f32 %v760, %v2317
    %v2324 = vrot.slane %v2318, 1
    %v2325 = vrot.slane %v2319, 1
    %v2326 = vrot.slane %v2320, 1
    %v2330 = vadd.f32 %v2263, %v2324
    %v2331 = vadd.f32 %v2264, %v2325
    %v2332 = vadd.f32 %v2265, %v2326
    %s2333 = sld [smem:[#allocation9 + $0x67]]
    %v2334 = vstv %s2333
    %v2335 = vmul.f32 %v758, %v2334
    %v2336 = vmul.f32 %v759, %v2334
    %v2337 = vmul.f32 %v760, %v2334
    %v2341 = vrot.slane %v2335, 1
    %v2342 = vrot.slane %v2336, 1
    %v2343 = vrot.slane %v2337, 1
    %v2347 = vadd.f32 %v2271, %v2341
    %v2348 = vadd.f32 %v2272, %v2342
    %v2349 = vadd.f32 %v2273, %v2343
    %s2350 = sld [smem:[#allocation9 + $0x82]]
    %v2351 = vstv %s2350
    %v2352 = vmul.f32 %v758, %v2351
    %v2353 = vmul.f32 %v759, %v2351
    %v2354 = vmul.f32 %v760, %v2351
    %v2358 = vrot.slane %v2352, 1
    %v2359 = vrot.slane %v2353, 1
    %v2360 = vrot.slane %v2354, 1
    %v2364 = vadd.f32 %v2279, %v2358
    %v2365 = vadd.f32 %v2280, %v2359
    %v2366 = vadd.f32 %v2281, %v2360
    %s2367 = sld [smem:[#allocation9 + $0x17]]
    %v2368 = vstv %s2367
    %v2369 = vmul.f32 %v758, %v2368
    %v2370 = vmul.f32 %v759, %v2368
    %v2371 = vmul.f32 %v760, %v2368
    %v2375 = vrot.slane %v2369, 2
    %v2376 = vrot.slane %v2370, 2
    %v2377 = vrot.slane %v2371, 2
    %v2381 = vadd.f32 %v2296, %v2375
    %v2382 = vadd.f32 %v2297, %v2376
    %v2383 = vadd.f32 %v2298, %v2377
    %s2384 = sld [smem:[#allocation9 + $0x32]]
    %v2385 = vstv %s2384
    %v2386 = vmul.f32 %v758, %v2385
    %v2387 = vmul.f32 %v759, %v2385
    %v2388 = vmul.f32 %v760, %v2385
    %v2392 = vrot.slane %v2386, 2
    %v2393 = vrot.slane %v2387, 2
    %v2394 = vrot.slane %v2388, 2
    %v2398 = vadd.f32 %v2313, %v2392
    %v2399 = vadd.f32 %v2314, %v2393
    %v2400 = vadd.f32 %v2315, %v2394
    %s2401 = sld [smem:[#allocation9 + $0x4d]]
    %v2402 = vstv %s2401
    %v2403 = vmul.f32 %v758, %v2402
    %v2404 = vmul.f32 %v759, %v2402
    %v2405 = vmul.f32 %v760, %v2402
    %v2409 = vrot.slane %v2403, 2
    %v2410 = vrot.slane %v2404, 2
    %v2411 = vrot.slane %v2405, 2
    %v2415 = vadd.f32 %v2330, %v2409
    %v2416 = vadd.f32 %v2331, %v2410
    %v2417 = vadd.f32 %v2332, %v2411
    %s2418 = sld [smem:[#allocation9 + $0x68]]
    %v2419 = vstv %s2418
    %v2420 = vmul.f32 %v758, %v2419
    %v2421 = vmul.f32 %v759, %v2419
    %v2422 = vmul.f32 %v760, %v2419
    %v2426 = vrot.slane %v2420, 2
    %v2427 = vrot.slane %v2421, 2
    %v2428 = vrot.slane %v2422, 2
    %v2432 = vadd.f32 %v2347, %v2426
    %v2433 = vadd.f32 %v2348, %v2427
    %v2434 = vadd.f32 %v2349, %v2428
    %s2435 = sld [smem:[#allocation9 + $0x83]]
    %v2436 = vstv %s2435
    %v2437 = vmul.f32 %v758, %v2436
    %v2438 = vmul.f32 %v759, %v2436
    %v2439 = vmul.f32 %v760, %v2436
    %v2443 = vrot.slane %v2437, 2
    %v2444 = vrot.slane %v2438, 2
    %v2445 = vrot.slane %v2439, 2
    %v2449 = vadd.f32 %v2364, %v2443
    %v2450 = vadd.f32 %v2365, %v2444
    %v2451 = vadd.f32 %v2366, %v2445
    %s2452 = sld [smem:[#allocation9 + $0x18]]
    %v2453 = vstv %s2452
    %v2454 = vmul.f32 %v759, %v2453
    %v2455 = vmul.f32 %v760, %v2453
    %v2456 = vmul.f32 %v761, %v2453
    %v2457 = vadd.f32 %v2381, %v2454
    %v2458 = vadd.f32 %v2382, %v2455
    %v2459 = vadd.f32 %v2383, %v2456
    %s2460 = sld [smem:[#allocation9 + $0x33]]
    %v2461 = vstv %s2460
    %v2462 = vmul.f32 %v759, %v2461
    %v2463 = vmul.f32 %v760, %v2461
    %v2464 = vmul.f32 %v761, %v2461
    %v2465 = vadd.f32 %v2398, %v2462
    %v2466 = vadd.f32 %v2399, %v2463
    %v2467 = vadd.f32 %v2400, %v2464
    %s2468 = sld [smem:[#allocation9 + $0x4e]]
    %v2469 = vstv %s2468
    %v2470 = vmul.f32 %v759, %v2469
    %v2471 = vmul.f32 %v760, %v2469
    %v2472 = vmul.f32 %v761, %v2469
    %v2473 = vadd.f32 %v2415, %v2470
    %v2474 = vadd.f32 %v2416, %v2471
    %v2475 = vadd.f32 %v2417, %v2472
    %s2476 = sld [smem:[#allocation9 + $0x69]]
    %v2477 = vstv %s2476
    %v2478 = vmul.f32 %v759, %v2477
    %v2479 = vmul.f32 %v760, %v2477
    %v2480 = vmul.f32 %v761, %v2477
    %v2481 = vadd.f32 %v2432, %v2478
    %v2482 = vadd.f32 %v2433, %v2479
    %v2483 = vadd.f32 %v2434, %v2480
    %s2484 = sld [smem:[#allocation9 + $0x84]]
    %v2485 = vstv %s2484
    %v2486 = vmul.f32 %v759, %v2485
    %v2487 = vmul.f32 %v760, %v2485
    %v2488 = vmul.f32 %v761, %v2485
    %v2489 = vadd.f32 %v2449, %v2486
    %v2490 = vadd.f32 %v2450, %v2487
    %v2491 = vadd.f32 %v2451, %v2488
    %s2492 = sld [smem:[#allocation9 + $0x19]]
    %v2493 = vstv %s2492
    %v2494 = vmul.f32 %v759, %v2493
    %v2495 = vmul.f32 %v760, %v2493
    %v2496 = vmul.f32 %v761, %v2493
    %v2500 = vrot.slane %v2494, 1
    %v2501 = vrot.slane %v2495, 1
    %v2502 = vrot.slane %v2496, 1
    %v2506 = vadd.f32 %v2457, %v2500
    %v2507 = vadd.f32 %v2458, %v2501
    %v2508 = vadd.f32 %v2459, %v2502
    %s2509 = sld [smem:[#allocation9 + $0x34]]
    %v2510 = vstv %s2509
    %v2511 = vmul.f32 %v759, %v2510
    %v2512 = vmul.f32 %v760, %v2510
    %v2513 = vmul.f32 %v761, %v2510
    %v2517 = vrot.slane %v2511, 1
    %v2518 = vrot.slane %v2512, 1
    %v2519 = vrot.slane %v2513, 1
    %v2523 = vadd.f32 %v2465, %v2517
    %v2524 = vadd.f32 %v2466, %v2518
    %v2525 = vadd.f32 %v2467, %v2519
    %s2526 = sld [smem:[#allocation9 + $0x4f]]
    %v2527 = vstv %s2526
    %v2528 = vmul.f32 %v759, %v2527
    %v2529 = vmul.f32 %v760, %v2527
    %v2530 = vmul.f32 %v761, %v2527
    %v2534 = vrot.slane %v2528, 1
    %v2535 = vrot.slane %v2529, 1
    %v2536 = vrot.slane %v2530, 1
    %v2540 = vadd.f32 %v2473, %v2534
    %v2541 = vadd.f32 %v2474, %v2535
    %v2542 = vadd.f32 %v2475, %v2536
    %s2543 = sld [smem:[#allocation9 + $0x6a]]
    %v2544 = vstv %s2543
    %v2545 = vmul.f32 %v759, %v2544
    %v2546 = vmul.f32 %v760, %v2544
    %v2547 = vmul.f32 %v761, %v2544
    %v2551 = vrot.slane %v2545, 1
    %v2552 = vrot.slane %v2546, 1
    %v2553 = vrot.slane %v2547, 1
    %v2557 = vadd.f32 %v2481, %v2551
    %v2558 = vadd.f32 %v2482, %v2552
    %v2559 = vadd.f32 %v2483, %v2553
    %s2560 = sld [smem:[#allocation9 + $0x85]]
    %v2561 = vstv %s2560
    %v2562 = vmul.f32 %v759, %v2561
    %v2563 = vmul.f32 %v760, %v2561
    %v2564 = vmul.f32 %v761, %v2561
    %v2568 = vrot.slane %v2562, 1
    %v2569 = vrot.slane %v2563, 1
    %v2570 = vrot.slane %v2564, 1
    %v2574 = vadd.f32 %v2489, %v2568
    %v2575 = vadd.f32 %v2490, %v2569
    %v2576 = vadd.f32 %v2491, %v2570
    %s2577 = sld [smem:[#allocation9 + $0x1a]]
    %v2578 = vstv %s2577
    %v2579 = vmul.f32 %v759, %v2578
    %v2580 = vmul.f32 %v760, %v2578
    %v2581 = vmul.f32 %v761, %v2578
    %v2585 = vrot.slane %v2579, 2
    %v2586 = vrot.slane %v2580, 2
    %v2587 = vrot.slane %v2581, 2
    %v2591 = vadd.f32 %v2506, %v2585
    %v2592 = vadd.f32 %v2507, %v2586
    %v2593 = vadd.f32 %v2508, %v2587
    %s2594 = sld [smem:[#allocation9 + $0x35]]
    %v2595 = vstv %s2594
    %v2596 = vmul.f32 %v759, %v2595
    %v2597 = vmul.f32 %v760, %v2595
    %v2598 = vmul.f32 %v761, %v2595
    %v2602 = vrot.slane %v2596, 2
    %v2603 = vrot.slane %v2597, 2
    %v2604 = vrot.slane %v2598, 2
    %v2608 = vadd.f32 %v2523, %v2602
    %v2609 = vadd.f32 %v2524, %v2603
    %v2610 = vadd.f32 %v2525, %v2604
    %s2611 = sld [smem:[#allocation9 + $0x50]]
    %v2612 = vstv %s2611
    %v2613 = vmul.f32 %v759, %v2612
    %v2614 = vmul.f32 %v760, %v2612
    %v2615 = vmul.f32 %v761, %v2612
    %v2619 = vrot.slane %v2613, 2
    %v2620 = vrot.slane %v2614, 2
    %v2621 = vrot.slane %v2615, 2
    %v2625 = vadd.f32 %v2540, %v2619
    %v2626 = vadd.f32 %v2541, %v2620
    %v2627 = vadd.f32 %v2542, %v2621
    %s2628 = sld [smem:[#allocation9 + $0x6b]]
    %v2629 = vstv %s2628
    %v2630 = vmul.f32 %v759, %v2629
    %v2631 = vmul.f32 %v760, %v2629
    %v2632 = vmul.f32 %v761, %v2629
    %v2636 = vrot.slane %v2630, 2
    %v2637 = vrot.slane %v2631, 2
    %v2638 = vrot.slane %v2632, 2
    %v2642 = vadd.f32 %v2557, %v2636
    %v2643 = vadd.f32 %v2558, %v2637
    %v2644 = vadd.f32 %v2559, %v2638
    %s2645 = sld [smem:[#allocation9 + $0x86]]
    %v2646 = vstv %s2645
    %v2647 = vmul.f32 %v759, %v2646
    %v2648 = vmul.f32 %v760, %v2646
    %v2649 = vmul.f32 %v761, %v2646
    %v2653 = vrot.slane %v2647, 2
    %v2654 = vrot.slane %v2648, 2
    %v2655 = vrot.slane %v2649, 2
    %v2659 = vadd.f32 %v2574, %v2653
    %v2660 = vadd.f32 %v2575, %v2654
    %v2661 = vadd.f32 %v2576, %v2655
    %v2662 = vmax.f32 %v2591, 0.0
    %v2663 = vmax.f32 %v2592, 0.0
    %v2664 = vmax.f32 %v2593, 0.0
    %s2665 = sld [smem:[#allocation12]]
    %v2666 = vstv %s2665
    %v2667 = vmul.f32 %v2662, %v2666
    %s2668 = sld [smem:[#allocation14]]
    %v2669 = vstv %s2668
    %v2670 = vadd.f32 %v2667, %v2669
    %s2671 = sld [smem:[#allocation12 + $0x1]]
    %v2672 = vstv %s2671
    %v2673 = vmul.f32 %v2662, %v2672
    %s2674 = sld [smem:[#allocation14 + $0x1]]
    %v2675 = vstv %s2674
    %v2676 = vadd.f32 %v2673, %v2675
    %s2677 = sld [smem:[#allocation12 + $0x2]]
    %v2678 = vstv %s2677
    %v2679 = vmul.f32 %v2662, %v2678
    %s2680 = sld [smem:[#allocation14 + $0x2]]
    %v2681 = vstv %s2680
    %v2682 = vadd.f32 %v2679, %v2681
    %s2683 = sld [smem:[#allocation12 + $0x3]]
    %v2684 = vstv %s2683
    %v2685 = vmul.f32 %v2662, %v2684
    %s2686 = sld [smem:[#allocation14 + $0x3]]
    %v2687 = vstv %s2686
    %v2688 = vadd.f32 %v2685, %v2687
    %s2689 = sld [smem:[#allocation12 + $0x4]]
    %v2690 = vstv %s2689
    %v2691 = vmul.f32 %v2662, %v2690
    %s2692 = sld [smem:[#allocation14 + $0x4]]
    %v2693 = vstv %s2692
    %v2694 = vadd.f32 %v2691, %v2693
    %s2695 = sld [smem:[#allocation12 + $0x5]]
    %v2696 = vstv %s2695
    %v2697 = vmul.f32 %v2662, %v2696
    %v2699 = vrot.slane %v2697, 1
    %v2701 = vadd.f32 %v2670, %v2699
    %s2702 = sld [smem:[#allocation12 + $0x6]]
    %v2703 = vstv %s2702
    %v2704 = vmul.f32 %v2662, %v2703
    %v2706 = vrot.slane %v2704, 1
    %v2708 = vadd.f32 %v2676, %v2706
    %s2709 = sld [smem:[#allocation12 + $0x7]]
    %v2710 = vstv %s2709
    %v2711 = vmul.f32 %v2662, %v2710
    %v2713 = vrot.slane %v2711, 1
    %v2715 = vadd.f32 %v2682, %v2713
    %s2716 = sld [smem:[#allocation12 + $0x8]]
    %v2717 = vstv %s2716
    %v2718 = vmul.f32 %v2662, %v2717
    %v2720 = vrot.slane %v2718, 1
    %v2722 = vadd.f32 %v2688, %v2720
    %s2723 = sld [smem:[#allocation12 + $0x9]]
    %v2724 = vstv %s2723
    %v2725 = vmul.f32 %v2662, %v2724
    %v2727 = vrot.slane %v2725, 1
    %v2729 = vadd.f32 %v2694, %v2727
    %s2730 = sld [smem:[#allocation12 + $0xa]]
    %v2731 = vstv %s2730
    %v2732 = vmul.f32 %v2662, %v2731
    %v2734 = vrot.slane %v2732, 2
    %v2736 = vadd.f32 %v2701, %v2734
    %s2737 = sld [smem:[#allocation12 + $0xb]]
    %v2738 = vstv %s2737
    %v2739 = vmul.f32 %v2662, %v2738
    %v2741 = vrot.slane %v2739, 2
    %v2743 = vadd.f32 %v2708, %v2741
    %s2744 = sld [smem:[#allocation12 + $0xc]]
    %v2745 = vstv %s2744
    %v2746 = vmul.f32 %v2662, %v2745
    %v2748 = vrot.slane %v2746, 2
    %v2750 = vadd.f32 %v2715, %v2748
    %s2751 = sld [smem:[#allocation12 + $0xd]]
    %v2752 = vstv %s2751
    %v2753 = vmul.f32 %v2662, %v2752
    %v2755 = vrot.slane %v2753, 2
    %v2757 = vadd.f32 %v2722, %v2755
    %s2758 = sld [smem:[#allocation12 + $0xe]]
    %v2759 = vstv %s2758
    %v2760 = vmul.f32 %v2662, %v2759
    %v2762 = vrot.slane %v2760, 2
    %v2764 = vadd.f32 %v2729, %v2762
    %s2765 = sld [smem:[#allocation12 + $0xf]]
    %v2766 = vstv %s2765
    %v2767 = vmul.f32 %v2663, %v2766
    %v2768 = vadd.f32 %v2736, %v2767
    %s2769 = sld [smem:[#allocation12 + $0x10]]
    %v2770 = vstv %s2769
    %v2771 = vmul.f32 %v2663, %v2770
    %v2772 = vadd.f32 %v2743, %v2771
    %s2773 = sld [smem:[#allocation12 + $0x11]]
    %v2774 = vstv %s2773
    %v2775 = vmul.f32 %v2663, %v2774
    %v2776 = vadd.f32 %v2750, %v2775
    %s2777 = sld [smem:[#allocation12 + $0x12]]
    %v2778 = vstv %s2777
    %v2779 = vmul.f32 %v2663, %v2778
    %v2780 = vadd.f32 %v2757, %v2779
    %s2781 = sld [smem:[#allocation12 + $0x13]]
    %v2782 = vstv %s2781
    %v2783 = vmul.f32 %v2663, %v2782
    %v2784 = vadd.f32 %v2764, %v2783
    %s2785 = sld [smem:[#allocation12 + $0x14]]
    %v2786 = vstv %s2785
    %v2787 = vmul.f32 %v2663, %v2786
    %v2789 = vrot.slane %v2787, 1
    %v2791 = vadd.f32 %v2768, %v2789
    %s2792 = sld [smem:[#allocation12 + $0x15]]
    %v2793 = vstv %s2792
    %v2794 = vmul.f32 %v2663, %v2793
    %v2796 = vrot.slane %v2794, 1
    %v2798 = vadd.f32 %v2772, %v2796
    %s2799 = sld [smem:[#allocation12 + $0x16]]
    %v2800 = vstv %s2799
    %v2801 = vmul.f32 %v2663, %v2800
    %v2803 = vrot.slane %v2801, 1
    %v2805 = vadd.f32 %v2776, %v2803
    %s2806 = sld [smem:[#allocation12 + $0x17]]
    %v2807 = vstv %s2806
    %v2808 = vmul.f32 %v2663, %v2807
    %v2810 = vrot.slane %v2808, 1
    %v2812 = vadd.f32 %v2780, %v2810
    %s2813 = sld [smem:[#allocation12 + $0x18]]
    %v2814 = vstv %s2813
    %v2815 = vmul.f32 %v2663, %v2814
    %v2817 = vrot.slane %v2815, 1
    %v2819 = vadd.f32 %v2784, %v2817
    %s2820 = sld [smem:[#allocation12 + $0x19]]
    %v2821 = vstv %s2820
    %v2822 = vmul.f32 %v2663, %v2821
    %v2824 = vrot.slane %v2822, 2
    %v2826 = vadd.f32 %v2791, %v2824
    %s2827 = sld [smem:[#allocation12 + $0x1a]]
    %v2828 = vstv %s2827
    %v2829 = vmul.f32 %v2663, %v2828
    %v2831 = vrot.slane %v2829, 2
    %v2833 = vadd.f32 %v2798, %v2831
    %s2834 = sld [smem:[#allocation12 + $0x1b]]
    %v2835 = vstv %s2834
    %v2836 = vmul.f32 %v2663, %v2835
    %v2838 = vrot.slane %v2836, 2
    %v2840 = vadd.f32 %v2805, %v2838
    %s2841 = sld [smem:[#allocation12 + $0x1c]]
    %v2842 = vstv %s2841
    %v2843 = vmul.f32 %v2663, %v2842
    %v2845 = vrot.slane %v2843, 2
    %v2847 = vadd.f32 %v2812, %v2845
    %s2848 = sld [smem:[#allocation12 + $0x1d]]
    %v2849 = vstv %s2848
    %v2850 = vmul.f32 %v2663, %v2849
    %v2852 = vrot.slane %v2850, 2
    %v2854 = vadd.f32 %v2819, %v2852
    %s2855 = sld [smem:[#allocation12 + $0x1e]]
    %v2856 = vstv %s2855
    %v2857 = vmul.f32 %v2664, %v2856
    %v2858 = vadd.f32 %v2826, %v2857
    %s2859 = sld [smem:[#allocation12 + $0x1f]]
    %v2860 = vstv %s2859
    %v2861 = vmul.f32 %v2664, %v2860
    %v2862 = vadd.f32 %v2833, %v2861
    %s2863 = sld [smem:[#allocation12 + $0x20]]
    %v2864 = vstv %s2863
    %v2865 = vmul.f32 %v2664, %v2864
    %v2866 = vadd.f32 %v2840, %v2865
    %s2867 = sld [smem:[#allocation12 + $0x21]]
    %v2868 = vstv %s2867
    %v2869 = vmul.f32 %v2664, %v2868
    %v2870 = vadd.f32 %v2847, %v2869
    %s2871 = sld [smem:[#allocation12 + $0x22]]
    %v2872 = vstv %s2871
    %v2873 = vmul.f32 %v2664, %v2872
    %v2874 = vadd.f32 %v2854, %v2873
    %s2875 = sld [smem:[#allocation12 + $0x23]]
    %v2876 = vstv %s2875
    %v2877 = vmul.f32 %v2664, %v2876
    %v2879 = vrot.slane %v2877, 1
    %v2881 = vadd.f32 %v2858, %v2879
    %s2882 = sld [smem:[#allocation12 + $0x24]]
    %v2883 = vstv %s2882
    %v2884 = vmul.f32 %v2664, %v2883
    %v2886 = vrot.slane %v2884, 1
    %v2888 = vadd.f32 %v2862, %v2886
    %s2889 = sld [smem:[#allocation12 + $0x25]]
    %v2890 = vstv %s2889
    %v2891 = vmul.f32 %v2664, %v2890
    %v2893 = vrot.slane %v2891, 1
    %v2895 = vadd.f32 %v2866, %v2893
    %s2896 = sld [smem:[#allocation12 + $0x26]]
    %v2897 = vstv %s2896
    %v2898 = vmul.f32 %v2664, %v2897
    %v2900 = vrot.slane %v2898, 1
    %v2902 = vadd.f32 %v2870, %v2900
    %s2903 = sld [smem:[#allocation12 + $0x27]]
    %v2904 = vstv %s2903
    %v2905 = vmul.f32 %v2664, %v2904
    %v2907 = vrot.slane %v2905, 1
    %v2909 = vadd.f32 %v2874, %v2907
    %s2910 = sld [smem:[#allocation12 + $0x28]]
    %v2911 = vstv %s2910
    %v2912 = vmul.f32 %v2664, %v2911
    %v2914 = vrot.slane %v2912, 2
    %v2916 = vadd.f32 %v2881, %v2914
    %s2917 = sld [smem:[#allocation12 + $0x29]]
    %v2918 = vstv %s2917
    %v2919 = vmul.f32 %v2664, %v2918
    %v2921 = vrot.slane %v2919, 2
    %v2923 = vadd.f32 %v2888, %v2921
    %s2924 = sld [smem:[#allocation12 + $0x2a]]
    %v2925 = vstv %s2924
    %v2926 = vmul.f32 %v2664, %v2925
    %v2928 = vrot.slane %v2926, 2
    %v2930 = vadd.f32 %v2895, %v2928
    %s2931 = sld [smem:[#allocation12 + $0x2b]]
    %v2932 = vstv %s2931
    %v2933 = vmul.f32 %v2664, %v2932
    %v2935 = vrot.slane %v2933, 2
    %v2937 = vadd.f32 %v2902, %v2935
    %s2938 = sld [smem:[#allocation12 + $0x2c]]
    %v2939 = vstv %s2938
    %v2940 = vmul.f32 %v2664, %v2939
    %v2942 = vrot.slane %v2940, 2
    %v2944 = vadd.f32 %v2909, %v2942
    %v2945 = vmax.f32 %v2608, 0.0
    %v2946 = vmax.f32 %v2609, 0.0
    %v2947 = vmax.f32 %v2610, 0.0
    %s2948 = sld [smem:[#allocation12 + $0x2d]]
    %v2949 = vstv %s2948
    %v2950 = vmul.f32 %v2945, %v2949
    %v2951 = vadd.f32 %v2916, %v2950
    %s2952 = sld [smem:[#allocation12 + $0x2e]]
    %v2953 = vstv %s2952
    %v2954 = vmul.f32 %v2945, %v2953
    %v2955 = vadd.f32 %v2923, %v2954
    %s2956 = sld [smem:[#allocation12 + $0x2f]]
    %v2957 = vstv %s2956
    %v2958 = vmul.f32 %v2945, %v2957
    %v2959 = vadd.f32 %v2930, %v2958
    %s2960 = sld [smem:[#allocation12 + $0x30]]
    %v2961 = vstv %s2960
    %v2962 = vmul.f32 %v2945, %v2961
    %v2963 = vadd.f32 %v2937, %v2962
    %s2964 = sld [smem:[#allocation12 + $0x31]]
    %v2965 = vstv %s2964
    %v2966 = vmul.f32 %v2945, %v2965
    %v2967 = vadd.f32 %v2944, %v2966
    %s2968 = sld [smem:[#allocation12 + $0x32]]
    %v2969 = vstv %s2968
    %v2970 = vmul.f32 %v2945, %v2969
    %v2972 = vrot.slane %v2970, 1
    %v2974 = vadd.f32 %v2951, %v2972
    %s2975 = sld [smem:[#allocation12 + $0x33]]
    %v2976 = vstv %s2975
    %v2977 = vmul.f32 %v2945, %v2976
    %v2979 = vrot.slane %v2977, 1
    %v2981 = vadd.f32 %v2955, %v2979
    %s2982 = sld [smem:[#allocation12 + $0x34]]
    %v2983 = vstv %s2982
    %v2984 = vmul.f32 %v2945, %v2983
    %v2986 = vrot.slane %v2984, 1
    %v2988 = vadd.f32 %v2959, %v2986
    %s2989 = sld [smem:[#allocation12 + $0x35]]
    %v2990 = vstv %s2989
    %v2991 = vmul.f32 %v2945, %v2990
    %v2993 = vrot.slane %v2991, 1
    %v2995 = vadd.f32 %v2963, %v2993
    %s2996 = sld [smem:[#allocation12 + $0x36]]
    %v2997 = vstv %s2996
    %v2998 = vmul.f32 %v2945, %v2997
    %v3000 = vrot.slane %v2998, 1
    %v3002 = vadd.f32 %v2967, %v3000
    %s3003 = sld [smem:[#allocation12 + $0x37]]
    %v3004 = vstv %s3003
    %v3005 = vmul.f32 %v2945, %v3004
    %v3007 = vrot.slane %v3005, 2
    %v3009 = vadd.f32 %v2974, %v3007
    %s3010 = sld [smem:[#allocation12 + $0x38]]
    %v3011 = vstv %s3010
    %v3012 = vmul.f32 %v2945, %v3011
    %v3014 = vrot.slane %v3012, 2
    %v3016 = vadd.f32 %v2981, %v3014
    %s3017 = sld [smem:[#allocation12 + $0x39]]
    %v3018 = vstv %s3017
    %v3019 = vmul.f32 %v2945, %v3018
    %v3021 = vrot.slane %v3019, 2
    %v3023 = vadd.f32 %v2988, %v3021
    %s3024 = sld [smem:[#allocation12 + $0x3a]]
    %v3025 = vstv %s3024
    %v3026 = vmul.f32 %v2945, %v3025
    %v3028 = vrot.slane %v3026, 2
    %v3030 = vadd.f32 %v2995, %v3028
    %s3031 = sld [smem:[#allocation12 + $0x3b]]
    %v3032 = vstv %s3031
    %v3033 = vmul.f32 %v2945, %v3032
    %v3035 = vrot.slane %v3033, 2
    %v3037 = vadd.f32 %v3002, %v3035
    %s3038 = sld [smem:[#allocation12 + $0x3c]]
    %v3039 = vstv %s3038
    %v3040 = vmul.f32 %v2946, %v3039
    %v3041 = vadd.f32 %v3009, %v3040
    %s3042 = sld [smem:[#allocation12 + $0x3d]]
    %v3043 = vstv %s3042
    %v3044 = vmul.f32 %v2946, %v3043
    %v3045 = vadd.f32 %v3016, %v3044
    %s3046 = sld [smem:[#allocation12 + $0x3e]]
    %v3047 = vstv %s3046
    %v3048 = vmul.f32 %v2946, %v3047
    %v3049 = vadd.f32 %v3023, %v3048
    %s3050 = sld [smem:[#allocation12 + $0x3f]]
    %v3051 = vstv %s3050
    %v3052 = vmul.f32 %v2946, %v3051
    %v3053 = vadd.f32 %v3030, %v3052
    %s3054 = sld [smem:[#allocation12 + $0x40]]
    %v3055 = vstv %s3054
    %v3056 = vmul.f32 %v2946, %v3055
    %v3057 = vadd.f32 %v3037, %v3056
    %s3058 = sld [smem:[#allocation12 + $0x41]]
    %v3059 = vstv %s3058
    %v3060 = vmul.f32 %v2946, %v3059
    %v3062 = vrot.slane %v3060, 1
    %v3064 = vadd.f32 %v3041, %v3062
    %s3065 = sld [smem:[#allocation12 + $0x42]]
    %v3066 = vstv %s3065
    %v3067 = vmul.f32 %v2946, %v3066
    %v3069 = vrot.slane %v3067, 1
    %v3071 = vadd.f32 %v3045, %v3069
    %s3072 = sld [smem:[#allocation12 + $0x43]]
    %v3073 = vstv %s3072
    %v3074 = vmul.f32 %v2946, %v3073
    %v3076 = vrot.slane %v3074, 1
    %v3078 = vadd.f32 %v3049, %v3076
    %s3079 = sld [smem:[#allocation12 + $0x44]]
    %v3080 = vstv %s3079
    %v3081 = vmul.f32 %v2946, %v3080
    %v3083 = vrot.slane %v3081, 1
    %v3085 = vadd.f32 %v3053, %v3083
    %s3086 = sld [smem:[#allocation12 + $0x45]]
    %v3087 = vstv %s3086
    %v3088 = vmul.f32 %v2946, %v3087
    %v3090 = vrot.slane %v3088, 1
    %v3092 = vadd.f32 %v3057, %v3090
    %s3093 = sld [smem:[#allocation12 + $0x46]]
    %v3094 = vstv %s3093
    %v3095 = vmul.f32 %v2946, %v3094
    %v3097 = vrot.slane %v3095, 2
    %v3099 = vadd.f32 %v3064, %v3097
    %s3100 = sld [smem:[#allocation12 + $0x47]]
    %v3101 = vstv %s3100
    %v3102 = vmul.f32 %v2946, %v3101
    %v3104 = vrot.slane %v3102, 2
    %v3106 = vadd.f32 %v3071, %v3104
    %s3107 = sld [smem:[#allocation12 + $0x48]]
    %v3108 = vstv %s3107
    %v3109 = vmul.f32 %v2946, %v3108
    %v3111 = vrot.slane %v3109, 2
    %v3113 = vadd.f32 %v3078, %v3111
    %s3114 = sld [smem:[#allocation12 + $0x49]]
    %v3115 = vstv %s3114
    %v3116 = vmul.f32 %v2946, %v3115
    %v3118 = vrot.slane %v3116, 2
    %v3120 = vadd.f32 %v3085, %v3118
    %s3121 = sld [smem:[#allocation12 + $0x4a]]
    %v3122 = vstv %s3121
    %v3123 = vmul.f32 %v2946, %v3122
    %v3125 = vrot.slane %v3123, 2
    %v3127 = vadd.f32 %v3092, %v3125
    %s3128 = sld [smem:[#allocation12 + $0x4b]]
    %v3129 = vstv %s3128
    %v3130 = vmul.f32 %v2947, %v3129
    %v3131 = vadd.f32 %v3099, %v3130
    %s3132 = sld [smem:[#allocation12 + $0x4c]]
    %v3133 = vstv %s3132
    %v3134 = vmul.f32 %v2947, %v3133
    %v3135 = vadd.f32 %v3106, %v3134
    %s3136 = sld [smem:[#allocation12 + $0x4d]]
    %v3137 = vstv %s3136
    %v3138 = vmul.f32 %v2947, %v3137
    %v3139 = vadd.f32 %v3113, %v3138
    %s3140 = sld [smem:[#allocation12 + $0x4e]]
    %v3141 = vstv %s3140
    %v3142 = vmul.f32 %v2947, %v3141
    %v3143 = vadd.f32 %v3120, %v3142
    %s3144 = sld [smem:[#allocation12 + $0x4f]]
    %v3145 = vstv %s3144
    %v3146 = vmul.f32 %v2947, %v3145
    %v3147 = vadd.f32 %v3127, %v3146
    %s3148 = sld [smem:[#allocation12 + $0x50]]
    %v3149 = vstv %s3148
    %v3150 = vmul.f32 %v2947, %v3149
    %v3152 = vrot.slane %v3150, 1
    %v3154 = vadd.f32 %v3131, %v3152
    %s3155 = sld [smem:[#allocation12 + $0x51]]
    %v3156 = vstv %s3155
    %v3157 = vmul.f32 %v2947, %v3156
    %v3159 = vrot.slane %v3157, 1
    %v3161 = vadd.f32 %v3135, %v3159
    %s3162 = sld [smem:[#allocation12 + $0x52]]
    %v3163 = vstv %s3162
    %v3164 = vmul.f32 %v2947, %v3163
    %v3166 = vrot.slane %v3164, 1
    %v3168 = vadd.f32 %v3139, %v3166
    %s3169 = sld [smem:[#allocation12 + $0x53]]
    %v3170 = vstv %s3169
    %v3171 = vmul.f32 %v2947, %v3170
    %v3173 = vrot.slane %v3171, 1
    %v3175 = vadd.f32 %v3143, %v3173
    %s3176 = sld [smem:[#allocation12 + $0x54]]
    %v3177 = vstv %s3176
    %v3178 = vmul.f32 %v2947, %v3177
    %v3180 = vrot.slane %v3178, 1
    %v3182 = vadd.f32 %v3147, %v3180
    %s3183 = sld [smem:[#allocation12 + $0x55]]
    %v3184 = vstv %s3183
    %v3185 = vmul.f32 %v2947, %v3184
    %v3187 = vrot.slane %v3185, 2
    %v3189 = vadd.f32 %v3154, %v3187
    %s3190 = sld [smem:[#allocation12 + $0x56]]
    %v3191 = vstv %s3190
    %v3192 = vmul.f32 %v2947, %v3191
    %v3194 = vrot.slane %v3192, 2
    %v3196 = vadd.f32 %v3161, %v3194
    %s3197 = sld [smem:[#allocation12 + $0x57]]
    %v3198 = vstv %s3197
    %v3199 = vmul.f32 %v2947, %v3198
    %v3201 = vrot.slane %v3199, 2
    %v3203 = vadd.f32 %v3168, %v3201
    %s3204 = sld [smem:[#allocation12 + $0x58]]
    %v3205 = vstv %s3204
    %v3206 = vmul.f32 %v2947, %v3205
    %v3208 = vrot.slane %v3206, 2
    %v3210 = vadd.f32 %v3175, %v3208
    %s3211 = sld [smem:[#allocation12 + $0x59]]
    %v3212 = vstv %s3211
    %v3213 = vmul.f32 %v2947, %v3212
    %v3215 = vrot.slane %v3213, 2
    %v3217 = vadd.f32 %v3182, %v3215
    %v3218 = vmax.f32 %v2625, 0.0
    %v3219 = vmax.f32 %v2626, 0.0
    %v3220 = vmax.f32 %v2627, 0.0
    %s3221 = sld [smem:[#allocation12 + $0x5a]]
    %v3222 = vstv %s3221
    %v3223 = vmul.f32 %v3218, %v3222
    %v3224 = vadd.f32 %v3189, %v3223
    %s3225 = sld [smem:[#allocation12 + $0x5b]]
    %v3226 = vstv %s3225
    %v3227 = vmul.f32 %v3218, %v3226
    %v3228 = vadd.f32 %v3196, %v3227
    %s3229 = sld [smem:[#allocation12 + $0x5c]]
    %v3230 = vstv %s3229
    %v3231 = vmul.f32 %v3218, %v3230
    %v3232 = vadd.f32 %v3203, %v3231
    %s3233 = sld [smem:[#allocation12 + $0x5d]]
    %v3234 = vstv %s3233
    %v3235 = vmul.f32 %v3218, %v3234
    %v3236 = vadd.f32 %v3210, %v3235
    %s3237 = sld [smem:[#allocation12 + $0x5e]]
    %v3238 = vstv %s3237
    %v3239 = vmul.f32 %v3218, %v3238
    %v3240 = vadd.f32 %v3217, %v3239
    %s3241 = sld [smem:[#allocation12 + $0x5f]]
    %v3242 = vstv %s3241
    %v3243 = vmul.f32 %v3218, %v3242
    %v3245 = vrot.slane %v3243, 1
    %v3247 = vadd.f32 %v3224, %v3245
    %s3248 = sld [smem:[#allocation12 + $0x60]]
    %v3249 = vstv %s3248
    %v3250 = vmul.f32 %v3218, %v3249
    %v3252 = vrot.slane %v3250, 1
    %v3254 = vadd.f32 %v3228, %v3252
    %s3255 = sld [smem:[#allocation12 + $0x61]]
    %v3256 = vstv %s3255
    %v3257 = vmul.f32 %v3218, %v3256
    %v3259 = vrot.slane %v3257, 1
    %v3261 = vadd.f32 %v3232, %v3259
    %s3262 = sld [smem:[#allocation12 + $0x62]]
    %v3263 = vstv %s3262
    %v3264 = vmul.f32 %v3218, %v3263
    %v3266 = vrot.slane %v3264, 1
    %v3268 = vadd.f32 %v3236, %v3266
    %s3269 = sld [smem:[#allocation12 + $0x63]]
    %v3270 = vstv %s3269
    %v3271 = vmul.f32 %v3218, %v3270
    %v3273 = vrot.slane %v3271, 1
    %v3275 = vadd.f32 %v3240, %v3273
    %s3276 = sld [smem:[#allocation12 + $0x64]]
    %v3277 = vstv %s3276
    %v3278 = vmul.f32 %v3218, %v3277
    %v3280 = vrot.slane %v3278, 2
    %v3282 = vadd.f32 %v3247, %v3280
    %s3283 = sld [smem:[#allocation12 + $0x65]]
    %v3284 = vstv %s3283
    %v3285 = vmul.f32 %v3218, %v3284
    %v3287 = vrot.slane %v3285, 2
    %v3289 = vadd.f32 %v3254, %v3287
    %s3290 = sld [smem:[#allocation12 + $0x66]]
    %v3291 = vstv %s3290
    %v3292 = vmul.f32 %v3218, %v3291
    %v3294 = vrot.slane %v3292, 2
    %v3296 = vadd.f32 %v3261, %v3294
    %s3297 = sld [smem:[#allocation12 + $0x67]]
    %v3298 = vstv %s3297
    %v3299 = vmul.f32 %v3218, %v3298
    %v3301 = vrot.slane %v3299, 2
    %v3303 = vadd.f32 %v3268, %v3301
    %s3304 = sld [smem:[#allocation12 + $0x68]]
    %v3305 = vstv %s3304
    %v3306 = vmul.f32 %v3218, %v3305
    %v3308 = vrot.slane %v3306, 2
    %v3310 = vadd.f32 %v3275, %v3308
    %s3311 = sld [smem:[#allocation12 + $0x69]]
    %v3312 = vstv %s3311
    %v3313 = vmul.f32 %v3219, %v3312
    %v3314 = vadd.f32 %v3282, %v3313
    %s3315 = sld [smem:[#allocation12 + $0x6a]]
    %v3316 = vstv %s3315
    %v3317 = vmul.f32 %v3219, %v3316
    %v3318 = vadd.f32 %v3289, %v3317
    %s3319 = sld [smem:[#allocation12 + $0x6b]]
    %v3320 = vstv %s3319
    %v3321 = vmul.f32 %v3219, %v3320
    %v3322 = vadd.f32 %v3296, %v3321
    %s3323 = sld [smem:[#allocation12 + $0x6c]]
    %v3324 = vstv %s3323
    %v3325 = vmul.f32 %v3219, %v3324
    %v3326 = vadd.f32 %v3303, %v3325
    %s3327 = sld [smem:[#allocation12 + $0x6d]]
    %v3328 = vstv %s3327
    %v3329 = vmul.f32 %v3219, %v3328
    %v3330 = vadd.f32 %v3310, %v3329
    %s3331 = sld [smem:[#allocation12 + $0x6e]]
    %v3332 = vstv %s3331
    %v3333 = vmul.f32 %v3219, %v3332
    %v3335 = vrot.slane %v3333, 1
    %v3337 = vadd.f32 %v3314, %v3335
    %s3338 = sld [smem:[#allocation12 + $0x6f]]
    %v3339 = vstv %s3338
    %v3340 = vmul.f32 %v3219, %v3339
    %v3342 = vrot.slane %v3340, 1
    %v3344 = vadd.f32 %v3318, %v3342
    %s3345 = sld [smem:[#allocation12 + $0x70]]
    %v3346 = vstv %s3345
    %v3347 = vmul.f32 %v3219, %v3346
    %v3349 = vrot.slane %v3347, 1
    %v3351 = vadd.f32 %v3322, %v3349
    %s3352 = sld [smem:[#allocation12 + $0x71]]
    %v3353 = vstv %s3352
    %v3354 = vmul.f32 %v3219, %v3353
    %v3356 = vrot.slane %v3354, 1
    %v3358 = vadd.f32 %v3326, %v3356
    %s3359 = sld [smem:[#allocation12 + $0x72]]
    %v3360 = vstv %s3359
    %v3361 = vmul.f32 %v3219, %v3360
    %v3363 = vrot.slane %v3361, 1
    %v3365 = vadd.f32 %v3330, %v3363
    %s3366 = sld [smem:[#allocation12 + $0x73]]
    %v3367 = vstv %s3366
    %v3368 = vmul.f32 %v3219, %v3367
    %v3370 = vrot.slane %v3368, 2
    %v3372 = vadd.f32 %v3337, %v3370
    %s3373 = sld [smem:[#allocation12 + $0x74]]
    %v3374 = vstv %s3373
    %v3375 = vmul.f32 %v3219, %v3374
    %v3377 = vrot.slane %v3375, 2
    %v3379 = vadd.f32 %v3344, %v3377
    %s3380 = sld [smem:[#allocation12 + $0x75]]
    %v3381 = vstv %s3380
    %v3382 = vmul.f32 %v3219, %v3381
    %v3384 = vrot.slane %v3382, 2
    %v3386 = vadd.f32 %v3351, %v3384
    %s3387 = sld [smem:[#allocation12 + $0x76]]
    %v3388 = vstv %s3387
    %v3389 = vmul.f32 %v3219, %v3388
    %v3391 = vrot.slane %v3389, 2
    %v3393 = vadd.f32 %v3358, %v3391
    %s3394 = sld [smem:[#allocation12 + $0x77]]
    %v3395 = vstv %s3394
    %v3396 = vmul.f32 %v3219, %v3395
    %v3398 = vrot.slane %v3396, 2
    %v3400 = vadd.f32 %v3365, %v3398
    %s3401 = sld [smem:[#allocation12 + $0x78]]
    %v3402 = vstv %s3401
    %v3403 = vmul.f32 %v3220, %v3402
    %v3404 = vadd.f32 %v3372, %v3403
    %s3405 = sld [smem:[#allocation12 + $0x79]]
    %v3406 = vstv %s3405
    %v3407 = vmul.f32 %v3220, %v3406
    %v3408 = vadd.f32 %v3379, %v3407
    %s3409 = sld [smem:[#allocation12 + $0x7a]]
    %v3410 = vstv %s3409
    %v3411 = vmul.f32 %v3220, %v3410
    %v3412 = vadd.f32 %v3386, %v3411
    %s3413 = sld [smem:[#allocation12 + $0x7b]]
    %v3414 = vstv %s3413
    %v3415 = vmul.f32 %v3220, %v3414
    %v3416 = vadd.f32 %v3393, %v3415
    %s3417 = sld [smem:[#allocation12 + $0x7c]]
    %v3418 = vstv %s3417
    %v3419 = vmul.f32 %v3220, %v3418
    %v3420 = vadd.f32 %v3400, %v3419
    %s3421 = sld [smem:[#allocation12 + $0x7d]]
    %v3422 = vstv %s3421
    %v3423 = vmul.f32 %v3220, %v3422
    %v3425 = vrot.slane %v3423, 1
    %v3427 = vadd.f32 %v3404, %v3425
    %s3428 = sld [smem:[#allocation12 + $0x7e]]
    %v3429 = vstv %s3428
    %v3430 = vmul.f32 %v3220, %v3429
    %v3432 = vrot.slane %v3430, 1
    %v3434 = vadd.f32 %v3408, %v3432
    %s3435 = sld [smem:[#allocation12 + $0x7f]]
    %v3436 = vstv %s3435
    %v3437 = vmul.f32 %v3220, %v3436
    %v3439 = vrot.slane %v3437, 1
    %v3441 = vadd.f32 %v3412, %v3439
    %s3442 = sld [smem:[#allocation12 + $0x80]]
    %v3443 = vstv %s3442
    %v3444 = vmul.f32 %v3220, %v3443
    %v3446 = vrot.slane %v3444, 1
    %v3448 = vadd.f32 %v3416, %v3446
    %s3449 = sld [smem:[#allocation12 + $0x81]]
    %v3450 = vstv %s3449
    %v3451 = vmul.f32 %v3220, %v3450
    %v3453 = vrot.slane %v3451, 1
    %v3455 = vadd.f32 %v3420, %v3453
    %s3456 = sld [smem:[#allocation12 + $0x82]]
    %v3457 = vstv %s3456
    %v3458 = vmul.f32 %v3220, %v3457
    %v3460 = vrot.slane %v3458, 2
    %v3462 = vadd.f32 %v3427, %v3460
    %s3463 = sld [smem:[#allocation12 + $0x83]]
    %v3464 = vstv %s3463
    %v3465 = vmul.f32 %v3220, %v3464
    %v3467 = vrot.slane %v3465, 2
    %v3469 = vadd.f32 %v3434, %v3467
    %s3470 = sld [smem:[#allocation12 + $0x84]]
    %v3471 = vstv %s3470
    %v3472 = vmul.f32 %v3220, %v3471
    %v3474 = vrot.slane %v3472, 2
    %v3476 = vadd.f32 %v3441, %v3474
    %s3477 = sld [smem:[#allocation12 + $0x85]]
    %v3478 = vstv %s3477
    %v3479 = vmul.f32 %v3220, %v3478
    %v3481 = vrot.slane %v3479, 2
    %v3483 = vadd.f32 %v3448, %v3481
    %s3484 = sld [smem:[#allocation12 + $0x86]]
    %v3485 = vstv %s3484
    %v3486 = vmul.f32 %v3220, %v3485
    %v3488 = vrot.slane %v3486, 2
    %v3490 = vadd.f32 %v3455, %v3488
    %v3491 = vmax.f32 %v2642, 0.0
    %v3492 = vmax.f32 %v2643, 0.0
    %v3493 = vmax.f32 %v2644, 0.0
    %s3494 = sld [smem:[#allocation12 + $0x87]]
    %v3495 = vstv %s3494
    %v3496 = vmul.f32 %v3491, %v3495
    %v3497 = vadd.f32 %v3462, %v3496
    %s3498 = sld [smem:[#allocation12 + $0x88]]
    %v3499 = vstv %s3498
    %v3500 = vmul.f32 %v3491, %v3499
    %v3501 = vadd.f32 %v3469, %v3500
    %s3502 = sld [smem:[#allocation12 + $0x89]]
    %v3503 = vstv %s3502
    %v3504 = vmul.f32 %v3491, %v3503
    %v3505 = vadd.f32 %v3476, %v3504
    %s3506 = sld [smem:[#allocation12 + $0x8a]]
    %v3507 = vstv %s3506
    %v3508 = vmul.f32 %v3491, %v3507
    %v3509 = vadd.f32 %v3483, %v3508
    %s3510 = sld [smem:[#allocation12 + $0x8b]]
    %v3511 = vstv %s3510
    %v3512 = vmul.f32 %v3491, %v3511
    %v3513 = vadd.f32 %v3490, %v3512
    %s3514 = sld [smem:[#allocation12 + $0x8c]]
    %v3515 = vstv %s3514
    %v3516 = vmul.f32 %v3491, %v3515
    %v3518 = vrot.slane %v3516, 1
    %v3520 = vadd.f32 %v3497, %v3518
    %s3521 = sld [smem:[#allocation12 + $0x8d]]
    %v3522 = vstv %s3521
    %v3523 = vmul.f32 %v3491, %v3522
    %v3525 = vrot.slane %v3523, 1
    %v3527 = vadd.f32 %v3501, %v3525
    %s3528 = sld [smem:[#allocation12 + $0x8e]]
    %v3529 = vstv %s3528
    %v3530 = vmul.f32 %v3491, %v3529
    %v3532 = vrot.slane %v3530, 1
    %v3534 = vadd.f32 %v3505, %v3532
    %s3535 = sld [smem:[#allocation12 + $0x8f]]
    %v3536 = vstv %s3535
    %v3537 = vmul.f32 %v3491, %v3536
    %v3539 = vrot.slane %v3537, 1
    %v3541 = vadd.f32 %v3509, %v3539
    %s3542 = sld [smem:[#allocation12 + $0x90]]
    %v3543 = vstv %s3542
    %v3544 = vmul.f32 %v3491, %v3543
    %v3546 = vrot.slane %v3544, 1
    %v3548 = vadd.f32 %v3513, %v3546
    %s3549 = sld [smem:[#allocation12 + $0x91]]
    %v3550 = vstv %s3549
    %v3551 = vmul.f32 %v3491, %v3550
    %v3553 = vrot.slane %v3551, 2
    %v3555 = vadd.f32 %v3520, %v3553
    %s3556 = sld [smem:[#allocation12 + $0x92]]
    %v3557 = vstv %s3556
    %v3558 = vmul.f32 %v3491, %v3557
    %v3560 = vrot.slane %v3558, 2
    %v3562 = vadd.f32 %v3527, %v3560
    %s3563 = sld [smem:[#allocation12 + $0x93]]
    %v3564 = vstv %s3563
    %v3565 = vmul.f32 %v3491, %v3564
    %v3567 = vrot.slane %v3565, 2
    %v3569 = vadd.f32 %v3534, %v3567
    %s3570 = sld [smem:[#allocation12 + $0x94]]
    %v3571 = vstv %s3570
    %v3572 = vmul.f32 %v3491, %v3571
    %v3574 = vrot.slane %v3572, 2
    %v3576 = vadd.f32 %v3541, %v3574
    %s3577 = sld [smem:[#allocation12 + $0x95]]
    %v3578 = vstv %s3577
    %v3579 = vmul.f32 %v3491, %v3578
    %v3581 = vrot.slane %v3579, 2
    %v3583 = vadd.f32 %v3548, %v3581
    %s3584 = sld [smem:[#allocation12 + $0x96]]
    %v3585 = vstv %s3584
    %v3586 = vmul.f32 %v3492, %v3585
    %v3587 = vadd.f32 %v3555, %v3586
    %s3588 = sld [smem:[#allocation12 + $0x97]]
    %v3589 = vstv %s3588
    %v3590 = vmul.f32 %v3492, %v3589
    %v3591 = vadd.f32 %v3562, %v3590
    %s3592 = sld [smem:[#allocation12 + $0x98]]
    %v3593 = vstv %s3592
    %v3594 = vmul.f32 %v3492, %v3593
    %v3595 = vadd.f32 %v3569, %v3594
    %s3596 = sld [smem:[#allocation12 + $0x99]]
    %v3597 = vstv %s3596
    %v3598 = vmul.f32 %v3492, %v3597
    %v3599 = vadd.f32 %v3576, %v3598
    %s3600 = sld [smem:[#allocation12 + $0x9a]]
    %v3601 = vstv %s3600
    %v3602 = vmul.f32 %v3492, %v3601
    %v3603 = vadd.f32 %v3583, %v3602
    %s3604 = sld [smem:[#allocation12 + $0x9b]]
    %v3605 = vstv %s3604
    %v3606 = vmul.f32 %v3492, %v3605
    %v3608 = vrot.slane %v3606, 1
    %v3610 = vadd.f32 %v3587, %v3608
    %s3611 = sld [smem:[#allocation12 + $0x9c]]
    %v3612 = vstv %s3611
    %v3613 = vmul.f32 %v3492, %v3612
    %v3615 = vrot.slane %v3613, 1
    %v3617 = vadd.f32 %v3591, %v3615
    %s3618 = sld [smem:[#allocation12 + $0x9d]]
    %v3619 = vstv %s3618
    %v3620 = vmul.f32 %v3492, %v3619
    %v3622 = vrot.slane %v3620, 1
    %v3624 = vadd.f32 %v3595, %v3622
    %s3625 = sld [smem:[#allocation12 + $0x9e]]
    %v3626 = vstv %s3625
    %v3627 = vmul.f32 %v3492, %v3626
    %v3629 = vrot.slane %v3627, 1
    %v3631 = vadd.f32 %v3599, %v3629
    %s3632 = sld [smem:[#allocation12 + $0x9f]]
    %v3633 = vstv %s3632
    %v3634 = vmul.f32 %v3492, %v3633
    %v3636 = vrot.slane %v3634, 1
    %v3638 = vadd.f32 %v3603, %v3636
    %s3639 = sld [smem:[#allocation12 + $0xa0]]
    %v3640 = vstv %s3639
    %v3641 = vmul.f32 %v3492, %v3640
    %v3643 = vrot.slane %v3641, 2
    %v3645 = vadd.f32 %v3610, %v3643
    %s3646 = sld [smem:[#allocation12 + $0xa1]]
    %v3647 = vstv %s3646
    %v3648 = vmul.f32 %v3492, %v3647
    %v3650 = vrot.slane %v3648, 2
    %v3652 = vadd.f32 %v3617, %v3650
    %s3653 = sld [smem:[#allocation12 + $0xa2]]
    %v3654 = vstv %s3653
    %v3655 = vmul.f32 %v3492, %v3654
    %v3657 = vrot.slane %v3655, 2
    %v3659 = vadd.f32 %v3624, %v3657
    %s3660 = sld [smem:[#allocation12 + $0xa3]]
    %v3661 = vstv %s3660
    %v3662 = vmul.f32 %v3492, %v3661
    %v3664 = vrot.slane %v3662, 2
    %v3666 = vadd.f32 %v3631, %v3664
    %s3667 = sld [smem:[#allocation12 + $0xa4]]
    %v3668 = vstv %s3667
    %v3669 = vmul.f32 %v3492, %v3668
    %v3671 = vrot.slane %v3669, 2
    %v3673 = vadd.f32 %v3638, %v3671
    %s3674 = sld [smem:[#allocation12 + $0xa5]]
    %v3675 = vstv %s3674
    %v3676 = vmul.f32 %v3493, %v3675
    %v3677 = vadd.f32 %v3645, %v3676
    %s3678 = sld [smem:[#allocation12 + $0xa6]]
    %v3679 = vstv %s3678
    %v3680 = vmul.f32 %v3493, %v3679
    %v3681 = vadd.f32 %v3652, %v3680
    %s3682 = sld [smem:[#allocation12 + $0xa7]]
    %v3683 = vstv %s3682
    %v3684 = vmul.f32 %v3493, %v3683
    %v3685 = vadd.f32 %v3659, %v3684
    %s3686 = sld [smem:[#allocation12 + $0xa8]]
    %v3687 = vstv %s3686
    %v3688 = vmul.f32 %v3493, %v3687
    %v3689 = vadd.f32 %v3666, %v3688
    %s3690 = sld [smem:[#allocation12 + $0xa9]]
    %v3691 = vstv %s3690
    %v3692 = vmul.f32 %v3493, %v3691
    %v3693 = vadd.f32 %v3673, %v3692
    %s3694 = sld [smem:[#allocation12 + $0xaa]]
    %v3695 = vstv %s3694
    %v3696 = vmul.f32 %v3493, %v3695
    %v3698 = vrot.slane %v3696, 1
    %v3700 = vadd.f32 %v3677, %v3698
    %s3701 = sld [smem:[#allocation12 + $0xab]]
    %v3702 = vstv %s3701
    %v3703 = vmul.f32 %v3493, %v3702
    %v3705 = vrot.slane %v3703, 1
    %v3707 = vadd.f32 %v3681, %v3705
    %s3708 = sld [smem:[#allocation12 + $0xac]]
    %v3709 = vstv %s3708
    %v3710 = vmul.f32 %v3493, %v3709
    %v3712 = vrot.slane %v3710, 1
    %v3714 = vadd.f32 %v3685, %v3712
    %s3715 = sld [smem:[#allocation12 + $0xad]]
    %v3716 = vstv %s3715
    %v3717 = vmul.f32 %v3493, %v3716
    %v3719 = vrot.slane %v3717, 1
    %v3721 = vadd.f32 %v3689, %v3719
    %s3722 = sld [smem:[#allocation12 + $0xae]]
    %v3723 = vstv %s3722
    %v3724 = vmul.f32 %v3493, %v3723
    %v3726 = vrot.slane %v3724, 1
    %v3728 = vadd.f32 %v3693, %v3726
    %s3729 = sld [smem:[#allocation12 + $0xaf]]
    %v3730 = vstv %s3729
    %v3731 = vmul.f32 %v3493, %v3730
    %v3733 = vrot.slane %v3731, 2
    %v3735 = vadd.f32 %v3700, %v3733
    %s3736 = sld [smem:[#allocation12 + $0xb0]]
    %v3737 = vstv %s3736
    %v3738 = vmul.f32 %v3493, %v3737
    %v3740 = vrot.slane %v3738, 2
    %v3742 = vadd.f32 %v3707, %v3740
    %s3743 = sld [smem:[#allocation12 + $0xb1]]
    %v3744 = vstv %s3743
    %v3745 = vmul.f32 %v3493, %v3744
    %v3747 = vrot.slane %v3745, 2
    %v3749 = vadd.f32 %v3714, %v3747
    %s3750 = sld [smem:[#allocation12 + $0xb2]]
    %v3751 = vstv %s3750
    %v3752 = vmul.f32 %v3493, %v3751
    %v3754 = vrot.slane %v3752, 2
    %v3756 = vadd.f32 %v3721, %v3754
    %s3757 = sld [smem:[#allocation12 + $0xb3]]
    %v3758 = vstv %s3757
    %v3759 = vmul.f32 %v3493, %v3758
    %v3761 = vrot.slane %v3759, 2
    %v3763 = vadd.f32 %v3728, %v3761
    %v3764 = vmax.f32 %v2659, 0.0
    %v3765 = vmax.f32 %v2660, 0.0
    %v3766 = vmax.f32 %v2661, 0.0
    %s3767 = sld [smem:[#allocation12 + $0xb4]]
    %v3768 = vstv %s3767
    %v3769 = vmul.f32 %v3764, %v3768
    %v3770 = vadd.f32 %v3735, %v3769
    %s3771 = sld [smem:[#allocation12 + $0xb5]]
    %v3772 = vstv %s3771
    %v3773 = vmul.f32 %v3764, %v3772
    %v3774 = vadd.f32 %v3742, %v3773
    %s3775 = sld [smem:[#allocation12 + $0xb6]]
    %v3776 = vstv %s3775
    %v3777 = vmul.f32 %v3764, %v3776
    %v3778 = vadd.f32 %v3749, %v3777
    %s3779 = sld [smem:[#allocation12 + $0xb7]]
    %v3780 = vstv %s3779
    %v3781 = vmul.f32 %v3764, %v3780
    %v3782 = vadd.f32 %v3756, %v3781
    %s3783 = sld [smem:[#allocation12 + $0xb8]]
    %v3784 = vstv %s3783
    %v3785 = vmul.f32 %v3764, %v3784
    %v3786 = vadd.f32 %v3763, %v3785
    %s3787 = sld [smem:[#allocation12 + $0xb9]]
    %v3788 = vstv %s3787
    %v3789 = vmul.f32 %v3764, %v3788
    %v3791 = vrot.slane %v3789, 1
    %v3793 = vadd.f32 %v3770, %v3791
    %s3794 = sld [smem:[#allocation12 + $0xba]]
    %v3795 = vstv %s3794
    %v3796 = vmul.f32 %v3764, %v3795
    %v3798 = vrot.slane %v3796, 1
    %v3800 = vadd.f32 %v3774, %v3798
    %s3801 = sld [smem:[#allocation12 + $0xbb]]
    %v3802 = vstv %s3801
    %v3803 = vmul.f32 %v3764, %v3802
    %v3805 = vrot.slane %v3803, 1
    %v3807 = vadd.f32 %v3778, %v3805
    %s3808 = sld [smem:[#allocation12 + $0xbc]]
    %v3809 = vstv %s3808
    %v3810 = vmul.f32 %v3764, %v3809
    %v3812 = vrot.slane %v3810, 1
    %v3814 = vadd.f32 %v3782, %v3812
    %s3815 = sld [smem:[#allocation12 + $0xbd]]
    %v3816 = vstv %s3815
    %v3817 = vmul.f32 %v3764, %v3816
    %v3819 = vrot.slane %v3817, 1
    %v3821 = vadd.f32 %v3786, %v3819
    %s3822 = sld [smem:[#allocation12 + $0xbe]]
    %v3823 = vstv %s3822
    %v3824 = vmul.f32 %v3764, %v3823
    %v3826 = vrot.slane %v3824, 2
    %v3828 = vadd.f32 %v3793, %v3826
    %s3829 = sld [smem:[#allocation12 + $0xbf]]
    %v3830 = vstv %s3829
    %v3831 = vmul.f32 %v3764, %v3830
    %v3833 = vrot.slane %v3831, 2
    %v3835 = vadd.f32 %v3800, %v3833
    %s3836 = sld [smem:[#allocation12 + $0xc0]]
    %v3837 = vstv %s3836
    %v3838 = vmul.f32 %v3764, %v3837
    %v3840 = vrot.slane %v3838, 2
    %v3842 = vadd.f32 %v3807, %v3840
    %s3843 = sld [smem:[#allocation12 + $0xc1]]
    %v3844 = vstv %s3843
    %v3845 = vmul.f32 %v3764, %v3844
    %v3847 = vrot.slane %v3845, 2
    %v3849 = vadd.f32 %v3814, %v3847
    %s3850 = sld [smem:[#allocation12 + $0xc2]]
    %v3851 = vstv %s3850
    %v3852 = vmul.f32 %v3764, %v3851
    %v3854 = vrot.slane %v3852, 2
    %v3856 = vadd.f32 %v3821, %v3854
    %s3857 = sld [smem:[#allocation12 + $0xc3]]
    %v3858 = vstv %s3857
    %v3859 = vmul.f32 %v3765, %v3858
    %v3860 = vadd.f32 %v3828, %v3859
    %s3861 = sld [smem:[#allocation12 + $0xc4]]
    %v3862 = vstv %s3861
    %v3863 = vmul.f32 %v3765, %v3862
    %v3864 = vadd.f32 %v3835, %v3863
    %s3865 = sld [smem:[#allocation12 + $0xc5]]
    %v3866 = vstv %s3865
    %v3867 = vmul.f32 %v3765, %v3866
    %v3868 = vadd.f32 %v3842, %v3867
    %s3869 = sld [smem:[#allocation12 + $0xc6]]
    %v3870 = vstv %s3869
    %v3871 = vmul.f32 %v3765, %v3870
    %v3872 = vadd.f32 %v3849, %v3871
    %s3873 = sld [smem:[#allocation12 + $0xc7]]
    %v3874 = vstv %s3873
    %v3875 = vmul.f32 %v3765, %v3874
    %v3876 = vadd.f32 %v3856, %v3875
    %s3877 = sld [smem:[#allocation12 + $0xc8]]
    %v3878 = vstv %s3877
    %v3879 = vmul.f32 %v3765, %v3878
    %v3881 = vrot.slane %v3879, 1
    %v3883 = vadd.f32 %v3860, %v3881
    %s3884 = sld [smem:[#allocation12 + $0xc9]]
    %v3885 = vstv %s3884
    %v3886 = vmul.f32 %v3765, %v3885
    %v3888 = vrot.slane %v3886, 1
    %v3890 = vadd.f32 %v3864, %v3888
    %s3891 = sld [smem:[#allocation12 + $0xca]]
    %v3892 = vstv %s3891
    %v3893 = vmul.f32 %v3765, %v3892
    %v3895 = vrot.slane %v3893, 1
    %v3897 = vadd.f32 %v3868, %v3895
    %s3898 = sld [smem:[#allocation12 + $0xcb]]
    %v3899 = vstv %s3898
    %v3900 = vmul.f32 %v3765, %v3899
    %v3902 = vrot.slane %v3900, 1
    %v3904 = vadd.f32 %v3872, %v3902
    %s3905 = sld [smem:[#allocation12 + $0xcc]]
    %v3906 = vstv %s3905
    %v3907 = vmul.f32 %v3765, %v3906
    %v3909 = vrot.slane %v3907, 1
    %v3911 = vadd.f32 %v3876, %v3909
    %s3912 = sld [smem:[#allocation12 + $0xcd]]
    %v3913 = vstv %s3912
    %v3914 = vmul.f32 %v3765, %v3913
    %v3916 = vrot.slane %v3914, 2
    %v3918 = vadd.f32 %v3883, %v3916
    %s3919 = sld [smem:[#allocation12 + $0xce]]
    %v3920 = vstv %s3919
    %v3921 = vmul.f32 %v3765, %v3920
    %v3923 = vrot.slane %v3921, 2
    %v3925 = vadd.f32 %v3890, %v3923
    %s3926 = sld [smem:[#allocation12 + $0xcf]]
    %v3927 = vstv %s3926
    %v3928 = vmul.f32 %v3765, %v3927
    %v3930 = vrot.slane %v3928, 2
    %v3932 = vadd.f32 %v3897, %v3930
    %s3933 = sld [smem:[#allocation12 + $0xd0]]
    %v3934 = vstv %s3933
    %v3935 = vmul.f32 %v3765, %v3934
    %v3937 = vrot.slane %v3935, 2
    %v3939 = vadd.f32 %v3904, %v3937
    %s3940 = sld [smem:[#allocation12 + $0xd1]]
    %v3941 = vstv %s3940
    %v3942 = vmul.f32 %v3765, %v3941
    %v3944 = vrot.slane %v3942, 2
    %v3946 = vadd.f32 %v3911, %v3944
    %s3947 = sld [smem:[#allocation12 + $0xd2]]
    %v3948 = vstv %s3947
    %v3949 = vmul.f32 %v3766, %v3948
    %v3950 = vadd.f32 %v3918, %v3949
    %s3951 = sld [smem:[#allocation12 + $0xd3]]
    %v3952 = vstv %s3951
    %v3953 = vmul.f32 %v3766, %v3952
    %v3954 = vadd.f32 %v3925, %v3953
    %s3955 = sld [smem:[#allocation12 + $0xd4]]
    %v3956 = vstv %s3955
    %v3957 = vmul.f32 %v3766, %v3956
    %v3958 = vadd.f32 %v3932, %v3957
    %s3959 = sld [smem:[#allocation12 + $0xd5]]
    %v3960 = vstv %s3959
    %v3961 = vmul.f32 %v3766, %v3960
    %v3962 = vadd.f32 %v3939, %v3961
    %s3963 = sld [smem:[#allocation12 + $0xd6]]
    %v3964 = vstv %s3963
    %v3965 = vmul.f32 %v3766, %v3964
    %v3966 = vadd.f32 %v3946, %v3965
    %s3967 = sld [smem:[#allocation12 + $0xd7]]
    %v3968 = vstv %s3967
    %v3969 = vmul.f32 %v3766, %v3968
    %v3971 = vrot.slane %v3969, 1
    %v3973 = vadd.f32 %v3950, %v3971
    %s3974 = sld [smem:[#allocation12 + $0xd8]]
    %v3975 = vstv %s3974
    %v3976 = vmul.f32 %v3766, %v3975
    %v3978 = vrot.slane %v3976, 1
    %v3980 = vadd.f32 %v3954, %v3978
    %s3981 = sld [smem:[#allocation12 + $0xd9]]
    %v3982 = vstv %s3981
    %v3983 = vmul.f32 %v3766, %v3982
    %v3985 = vrot.slane %v3983, 1
    %v3987 = vadd.f32 %v3958, %v3985
    %s3988 = sld [smem:[#allocation12 + $0xda]]
    %v3989 = vstv %s3988
    %v3990 = vmul.f32 %v3766, %v3989
    %v3992 = vrot.slane %v3990, 1
    %v3994 = vadd.f32 %v3962, %v3992
    %s3995 = sld [smem:[#allocation12 + $0xdb]]
    %v3996 = vstv %s3995
    %v3997 = vmul.f32 %v3766, %v3996
    %v3999 = vrot.slane %v3997, 1
    %v4001 = vadd.f32 %v3966, %v3999
    %s4002 = sld [smem:[#allocation12 + $0xdc]]
    %v4003 = vstv %s4002
    %v4004 = vmul.f32 %v3766, %v4003
    %v4006 = vrot.slane %v4004, 2
    %v4008 = vadd.f32 %v3973, %v4006
    %s4009 = sld [smem:[#allocation12 + $0xdd]]
    %v4010 = vstv %s4009
    %v4011 = vmul.f32 %v3766, %v4010
    %v4013 = vrot.slane %v4011, 2
    %v4015 = vadd.f32 %v3980, %v4013
    %s4016 = sld [smem:[#allocation12 + $0xde]]
    %v4017 = vstv %s4016
    %v4018 = vmul.f32 %v3766, %v4017
    %v4020 = vrot.slane %v4018, 2
    %v4022 = vadd.f32 %v3987, %v4020
    %s4023 = sld [smem:[#allocation12 + $0xdf]]
    %v4024 = vstv %s4023
    %v4025 = vmul.f32 %v3766, %v4024
    %v4027 = vrot.slane %v4025, 2
    %v4029 = vadd.f32 %v3994, %v4027
    %s4030 = sld [smem:[#allocation12 + $0xe0]]
    %v4031 = vstv %s4030
    %v4032 = vmul.f32 %v3766, %v4031
    %v4034 = vrot.slane %v4032, 2
    %v4036 = vadd.f32 %v4001, %v4034
    %v4037 = vmax.f32 %v4008, %v4015
    %v4038 = vmax.f32 %v4037, %v4022
    %v4039 = vmax.f32 %v4038, %v4029
    %v4040 = vmax.f32 %v4039, %v4036
    %v4041 = vsub.f32 %v4008, %v4040
    %v4042 = vmul.f32 %v4041, 1.442695
    %v4043 = vpow.pop %v4042
    %v4044 = vsub.f32 %v4015, %v4040
    %v4045 = vmul.f32 %v4044, 1.442695
    %v4046 = vpow.pop %v4045
    %v4047 = vsub.f32 %v4022, %v4040
    %v4048 = vmul.f32 %v4047, 1.442695
    %v4049 = vpow.pop %v4048
    %v4050 = vsub.f32 %v4029, %v4040
    %v4051 = vmul.f32 %v4050, 1.442695
    %v4052 = vpow.pop %v4051
    %v4053 = vsub.f32 %v4036, %v4040
    %v4054 = vmul.f32 %v4053, 1.442695
    %v4055 = vpow.pop %v4054
    %v4056 = vadd.f32 %v4043, %v4046
    %v4057 = vadd.f32 %v4056, %v4049
    %v4058 = vadd.f32 %v4057, %v4052
    %v4059 = vadd.f32 %v4058, %v4055
    %v4060 = vrcp.pop %v4059
    %v4061 = vmul.f32 %v4043, %v4060
    %v4062 = vmul.f32 %v4046, %v4060
    %v4063 = vmul.f32 %v4049, %v4060
    %v4064 = vmul.f32 %v4052, %v4060
    %v4065 = vmul.f32 %v4055, %v4060
    %v4067 = vrot.slane %v4062, 7
    %v4070 = vrot.slane %v4063, 6
    %v4073 = vrot.slane %v4064, 5
    %v4076 = vrot.slane %v4065, 4
    %v4078 = vsel %vm133, %v4061, %v4067
    %vm4079 = vcmask 1041408
    %v4080 = vsel %vm4079, %v4078, %v4070
    %vm4081 = vcmask 1042432
    %v4082 = vsel %vm4081, %v4080, %v4073
    %vm4083 = vcmask 1043456
    %v4084 = vsel %vm4083, %v4082, %v4076
    %4085 = vst [vmem:[#allocation15] sm:$0x1f] %v4084
    // Predicated region
    $region58: #{tpu_custom_call.1} parent=1 // pred_check
      _
    $region59: #{tpu_custom_call.1} parent=1 // pred_check_branch
      %4087 = sbr.rel (0) target = $region61
    $region60: #{tpu_custom_call.1} parent=1 // pred_region
      %s4089 = ssub.s32 128, 128
      %4090 = vsyncadd [#allocation4], %s4089
      %s4092 = sshll.u32 [#allocation15], 4
      %s4093 = int_to_ptr.vmem [resolvable:$true] %s4092
      %4095 = dma.vmem_to_hbm [thread:$0]  %s4093, 128, %s7, [#allocation4]
    $region61: #{tpu_custom_call.1} parent=1 // pred_fallthru
      _
    // Predicated region
    $region62: #{tpu_custom_call.1} parent=1 // pred_check
      _
    $region63: #{tpu_custom_call.1} parent=1 // pred_check_branch
      %4097 = sbr.rel (0) target = $region65
    $region64: #{tpu_custom_call.1} parent=1 // pred_region
      %4098 = dma.done [#allocation4], 128
    $region65: #{tpu_custom_call.1} parent=1 // pred_fallthru
      _
    %4099 = vsyncpa [#allocation3], 1
    %4100 = vsyncpa [#allocation4], 1
    %4101 = vsyncpa [#allocation5], 1
    %4102 = vsyncpa [#allocation6], 1
    %4103 = vsyncpa [#allocation10], 1
    %4104 = vsyncpa [#allocation13], 1

</llo_original>
